<compile_context>
chip_gen: v5e
topology: v5e:2x2
jax: 0.10.0
libtpu: 0.0.40
codegen_flags: <defaults>
</compile_context>

<pallas_src>
import jax
import jax.numpy as jnp
from jax.experimental import pallas as pl
from jax.experimental.pallas import tpu as pltpu

EPS = 1e-5


def bn_add_relu_kernel(xbn_ref, xadd_ref, gamma_ref, beta_ref, o_ref):
    # xbn_ref/xadd_ref: (block_c, L) f32; gamma/beta: (block_c, 1) f32
    x = xbn_ref[...]
    L = x.shape[1]
    inv_l = 1.0 / L

    # Single-pass per-channel batch statistics (biased variance over N*H*W).
    s = jnp.sum(x, axis=1, keepdims=True)
    ss = jnp.sum(x * x, axis=1, keepdims=True)
    mean = s * inv_l
    # Clamp: E[x^2] - mean^2 can cancel slightly negative -> NaN in rsqrt.
    var = jnp.maximum(ss * inv_l - mean * mean, 0.0)
    inv_std = jax.lax.rsqrt(var + EPS)

    # Fold affine + normalization into one per-channel scale/shift.
    scale = gamma_ref[...] * inv_std
    shift = beta_ref[...] - mean * scale

    # BN + residual add + ReLU in one fused elementwise pass.
    o_ref[...] = jnp.maximum(xadd_ref[...] + x * scale + shift, 0.0)


def _choose_block_c(C, L, vmem_budget_bytes=24 << 20):
    """Largest multiple-of-8 divisor of C giving >= 2 tiles (2-TC balance on
    v7x) while the double-buffered working set fits in scoped VMEM.
    Falls back to a single full-extent block."""
    best = None
    for bc in range(8, C, 8):
        if C % bc != 0:
            continue
        # 2 inputs + 1 output, double-buffered, f32.
        vmem_bytes = 3 * 2 * bc * L * 4
        if vmem_bytes > vmem_budget_bytes:
            continue
        best = bc  # keep the largest qualifying divisor
    return best if best is not None else C


def _bn_add_relu_impl(x134, x121, gamma, beta):
    """x134, x121: (N, C, H, W) float32; gamma, beta: (C,) float32."""
    N, C, H, W = x134.shape
    L = N * H * W

    # NCHW -> (C, N*H*W). For N == 1 this is a pure reshape (no transpose copy).
    if N == 1:
        xbn = x134.reshape(C, L)
        xadd = x121.reshape(C, L)
    else:
        xbn = jnp.transpose(x134, (1, 0, 2, 3)).reshape(C, L)
        xadd = jnp.transpose(x121, (1, 0, 2, 3)).reshape(C, L)
    g = gamma.reshape(C, 1)
    b = beta.reshape(C, 1)

    block_c = _choose_block_c(C, L)  # -> 616 for C=1232 => grid=(2,)
    n_blocks = C // block_c

    # HBM-bound elementwise op: 2 reads + 1 write of the (C, L) f32 slab.
    cost = pl.CostEstimate(
        flops=7 * C * L,              # mul/add/relu + reduction adds
        transcendentals=C,            # one rsqrt per channel
        bytes_accessed=3 * C * L * 4,
    )

    out = pl.pallas_call(
        bn_add_relu_kernel,
        out_shape=jax.ShapeDtypeStruct((C, L), jnp.float32),
        grid=(n_blocks,),
        in_specs=[
            pl.BlockSpec((block_c, L), lambda i: (i, 0)),
            pl.BlockSpec((block_c, L), lambda i: (i, 0)),
            pl.BlockSpec((block_c, 1), lambda i: (i, 0)),
            pl.BlockSpec((block_c, 1), lambda i: (i, 0)),
        ],
        out_specs=pl.BlockSpec((block_c, L), lambda i: (i, 0)),
        compiler_params=pltpu.CompilerParams(
            dimension_semantics=("parallel",)
        ),
        cost_estimate=cost,
    )(xbn, xadd, g, b)

    # (C, N*H*W) -> NCHW
    if N == 1:
        return out.reshape(N, C, H, W)
    return jnp.transpose(out.reshape(C, N, H, W), (1, 0, 2, 3))


bn_add_relu = jax.jit(_bn_add_relu_impl)


if __name__ == "__main__":
    key = jax.random.PRNGKey(0)
    k1, k2, k3, k4 = jax.random.split(key, 4)

    N, C, H, W = 1, 1232, 14, 14  # C fixed by BatchNorm2d(1232)
    x134 = jax.random.normal(k1, (N, C, H, W), dtype=jnp.float32)
    x121 = jax.random.normal(k2, (N, C, H, W), dtype=jnp.float32)

    # Deterministic affine parameters (PyTorch default would be ones/zeros;
    # use small random values to exercise the affine path).
    gamma = 1.0 + 0.1 * jax.random.normal(k3, (C,), dtype=jnp.float32)
    beta = 0.1 * jax.random.normal(k4, (C,), dtype=jnp.float32)

    out = bn_add_relu(x134, x121, gamma, beta)
    out = jax.block_until_ready(out)

    # Reference check in plain JAX (training-mode batchnorm semantics).
    mean = jnp.mean(x134, axis=(0, 2, 3), keepdims=True)
    var = jnp.mean((x134 - mean) ** 2, axis=(0, 2, 3), keepdims=True)
    y_ref = (x134 - mean) * jax.lax.rsqrt(var + EPS)
    y_ref = y_ref * gamma.reshape(1, C, 1, 1) + beta.reshape(1, C, 1, 1)
    ref = jnp.maximum(x121 + y_ref, 0.0)
    assert out.shape == (N, C, H, W)
    assert jnp.allclose(out, ref, atol=1e-4, rtol=1e-4)

    # TODO(synk): running_mean/running_var momentum update (unbiased variance)
    # is a training side effect that does not change the forward output and is
    # not modeled here.
    print("KERNEL_OK")
</pallas_src>

<mosaic_0001>
module attributes {stable_mosaic.version = 11 : i64} {
  func.func @bn_add_relu_kernel(%arg0: i32, %arg1: memref<616x196xf32, #tpu.memory_space<vmem>>, %arg2: memref<616x196xf32, #tpu.memory_space<vmem>>, %arg3: memref<616x1xf32, #tpu.memory_space<vmem>>, %arg4: memref<616x1xf32, #tpu.memory_space<vmem>>, %arg5: memref<616x196xf32, #tpu.memory_space<vmem>>) attributes {dimension_semantics = [#tpu.dimension_semantics<parallel>], iteration_bounds = array<i64: 2>, scalar_prefetch = 0 : i64, scratch_operands = 0 : i64, tpu.core_type = #tpu.core_type<tc>, window_params = [{transform_indices = @transform_0, window_bounds = array<i64: 616, 196>}, {transform_indices = @transform_1, window_bounds = array<i64: 616, 196>}, {transform_indices = @transform_2, window_bounds = array<i64: 616, 1>}, {transform_indices = @transform_3, window_bounds = array<i64: 616, 1>}, {transform_indices = @transform_4, window_bounds = array<i64: 616, 196>}]} {
    %c0 = arith.constant 0 : index
    %c0_0 = arith.constant 0 : index
    %0 = vector.load %arg1[%c0, %c0_0] : memref<616x196xf32, #tpu.memory_space<vmem>>, vector<616x196xf32>
    %cst = arith.constant dense<0.000000e+00> : vector<616xf32>
    %1 = vector.multi_reduction <add>, %0, %cst [1] : vector<616x196xf32> to vector<616xf32>
    %2 = vector.shape_cast %1 : vector<616xf32> to vector<616x1xf32>
    %3 = arith.mulf %0, %0 : vector<616x196xf32>
    %cst_1 = arith.constant dense<0.000000e+00> : vector<616xf32>
    %4 = vector.multi_reduction <add>, %3, %cst_1 [1] : vector<616x196xf32> to vector<616xf32>
    %5 = vector.shape_cast %4 : vector<616xf32> to vector<616x1xf32>
    %cst_2 = arith.constant 0.00510204071 : f32
    %6 = vector.broadcast %cst_2 : f32 to vector<616x1xf32>
    %7 = arith.mulf %2, %6 : vector<616x1xf32>
    %cst_3 = arith.constant 0.00510204071 : f32
    %8 = vector.broadcast %cst_3 : f32 to vector<616x1xf32>
    %9 = arith.mulf %5, %8 : vector<616x1xf32>
    %10 = arith.mulf %7, %7 : vector<616x1xf32>
    %11 = arith.subf %9, %10 : vector<616x1xf32>
    %cst_4 = arith.constant 0.000000e+00 : f32
    %12 = vector.broadcast %cst_4 : f32 to vector<616x1xf32>
    %13 = arith.maximumf %11, %12 : vector<616x1xf32>
    %cst_5 = arith.constant 9.99999974E-6 : f32
    %14 = vector.broadcast %cst_5 : f32 to vector<616x1xf32>
    %15 = arith.addf %13, %14 : vector<616x1xf32>
    %16 = math.rsqrt %15 : vector<616x1xf32>
    %c0_6 = arith.constant 0 : index
    %c0_7 = arith.constant 0 : index
    %17 = vector.load %arg3[%c0_6, %c0_7] : memref<616x1xf32, #tpu.memory_space<vmem>>, vector<616x1xf32>
    %18 = arith.mulf %17, %16 : vector<616x1xf32>
    %c0_8 = arith.constant 0 : index
    %c0_9 = arith.constant 0 : index
    %19 = vector.load %arg4[%c0_8, %c0_9] : memref<616x1xf32, #tpu.memory_space<vmem>>, vector<616x1xf32>
    %20 = arith.mulf %7, %18 : vector<616x1xf32>
    %21 = arith.subf %19, %20 : vector<616x1xf32>
    %c0_10 = arith.constant 0 : index
    %c0_11 = arith.constant 0 : index
    %22 = vector.load %arg2[%c0_10, %c0_11] : memref<616x196xf32, #tpu.memory_space<vmem>>, vector<616x196xf32>
    %23 = vector.broadcast %18 : vector<616x1xf32> to vector<616x196xf32>
    %24 = arith.mulf %0, %23 : vector<616x196xf32>
    %25 = arith.addf %22, %24 : vector<616x196xf32>
    %26 = vector.broadcast %21 : vector<616x1xf32> to vector<616x196xf32>
    %27 = arith.addf %25, %26 : vector<616x196xf32>
    %cst_12 = arith.constant 0.000000e+00 : f32
    %28 = vector.broadcast %cst_12 : f32 to vector<616x196xf32>
    %29 = arith.maximumf %27, %28 : vector<616x196xf32>
    %c0_13 = arith.constant 0 : index
    %c0_14 = arith.constant 0 : index
    %30 = vector.load %arg5[%c0_13, %c0_14] : memref<616x196xf32, #tpu.memory_space<vmem>>, vector<616x196xf32>
    tpu.vector_store %arg5[%c0_13, %c0_14], %29 {strides = array<i32>} : memref<616x196xf32, #tpu.memory_space<vmem>>, vector<616x196xf32>,
    return
  }
  func.func @transform_0(%arg0: i32) -> (i32, i32) {
    %c0_i32 = arith.constant 0 : i32
    %c0_i32_0 = arith.constant 0 : i32
    return %arg0, %c0_i32 : i32, i32
  }
  func.func @transform_1(%arg0: i32) -> (i32, i32) {
    %c0_i32 = arith.constant 0 : i32
    %c0_i32_0 = arith.constant 0 : i32
    return %arg0, %c0_i32 : i32, i32
  }
  func.func @transform_2(%arg0: i32) -> (i32, i32) {
    %c0_i32 = arith.constant 0 : i32
    %c0_i32_0 = arith.constant 0 : i32
    return %arg0, %c0_i32 : i32, i32
  }
  func.func @transform_3(%arg0: i32) -> (i32, i32) {
    %c0_i32 = arith.constant 0 : i32
    %c0_i32_0 = arith.constant 0 : i32
    return %arg0, %c0_i32 : i32, i32
  }
  func.func @transform_4(%arg0: i32) -> (i32, i32) {
    %c0_i32 = arith.constant 0 : i32
    %c0_i32_0 = arith.constant 0 : i32
    return %arg0, %c0_i32 : i32, i32
  }
}

</mosaic_0001>

<llo_original>
// kernel: _bn_add_relu_impl.1
$region0: #{_bn_add_relu_impl.1}
  #allocation0 [shape = 'u32[]', space=smem, size = 0x4, offset = 0x4, fixed_abs, tag = 'smem constant byte address 0x4 - core index']
  #allocation1 [shape = 'u32[72,128]{1,0:T(1,128)}', space=vmem, size = 0x9000, scoped, tag = 'internal scratch']
  %s0 = inlined_call_operand.vmem [shape: f32[1232,196], index: 0, kind: input, shape index: {}]
  %s1 = inlined_call_operand.vmem [shape: f32[1232,196], index: 1, kind: input, shape index: {}]
  %s2 = inlined_call_operand.vmem [shape: f32[1232,1], index: 2, kind: input, shape index: {}]
  %s3 = inlined_call_operand.vmem [shape: f32[1232,1], index: 3, kind: input, shape index: {}]
  %s4 = inlined_call_operand.vmem [shape: f32[1232,196], index: 4, kind: output, shape index: {}]
  %s5 = sld [smem:[#allocation0]]
  $region49: #{_bn_add_relu_impl.1} parent=0
    _
  %s7 = ssub.s32 1, %s5
  %s8 = scalar_select 0, %s7, %s5
  loop: start=0, step=1, limit=4
  $region2: #{_bn_add_relu_impl.1} parent=0 // loop_pre_header
    _
  $region3: #{_bn_add_relu_impl.1} parent=0 // loop_header
    %s10 = sphi 0, %s14
    %p11 = scmp.ge.s32.totalorder %s10, 4
    %s20 = sphi 0, %s22
    %s23 = sphi 0, %s20
    %s24 = sphi 0, %s23
    %s40 = sphi 0, %s24
    %s46 = sphi 0, %s48
    %s49 = sphi 0, %s46
    %s50 = sphi 0, %s49
    %s66 = sphi 0, %s50
    %s72 = sphi 0, %s74
    %s75 = sphi 0, %s72
    %s76 = sphi 0, %s75
    %s92 = sphi 0, %s76
    %s98 = sphi 0, %s100
    %s101 = sphi 0, %s98
    %s102 = sphi 0, %s101
    %s118 = sphi 0, %s102
    %s124 = sphi 0, %s126
    %s127 = sphi 0, %s124
    %s128 = sphi 0, %s127
    %s144 = sphi 0, %s128
  $region4: #{_bn_add_relu_impl.1} parent=0 // loop_header_branch
    %13 = sbr.rel (%p11) target = $region8
  $region5: #{_bn_add_relu_impl.1} parent=0 // loop_body
    %s15 = ssub.s32 %s10, 1
    %s16 = ssub.s32 %s10, 2
    %s17 = sadd.s32 %s10, 1
    %s18 = ssub.s32 %s10, %s17
    %p19 = scmp.eq.s32.totalorder %s18, 0
    %s21 = sadd.s32 %s20, 1
    %s22 = scalar_select %p19, %s20, %s21
    %p25 = pneg %p19
    %p26 = scmp.eq.s32.totalorder %s10, 1
    %p27 = por %p25, %p26
    %p28 = scmp.ne.s32.totalorder %s20, %s23
    %p29 = scmp.eq.s32.totalorder %s10, 0
    %p30 = por %p28, %p29
    %p31 = scmp.ne.s32.totalorder %s20, %s23
    %p32 = scmp.eq.s32.totalorder %s15, 1
    %p33 = por %p31, %p32
    %p34 = scmp.ne.s32.totalorder %s23, %s24
    %p35 = scmp.eq.s32.totalorder %s15, 0
    %p36 = por %p34, %p35
    %p37 = scmp.ne.s32.totalorder %s23, %s24
    %p38 = scmp.eq.s32.totalorder %s16, 1
    %p39 = por %p37, %p38
    %p41 = scmp.ne.s32.totalorder %s24, %s40
    %p42 = scmp.eq.s32.totalorder %s16, 0
    %p43 = por %p41, %p42
    %s44 = ssub.s32 %s10, %s17
    %p45 = scmp.eq.s32.totalorder %s44, 0
    %s47 = sadd.s32 %s46, 1
    %s48 = scalar_select %p45, %s46, %s47
    %p51 = pneg %p45
    %p52 = scmp.eq.s32.totalorder %s10, 1
    %p53 = por %p51, %p52
    %p54 = scmp.ne.s32.totalorder %s46, %s49
    %p55 = scmp.eq.s32.totalorder %s10, 0
    %p56 = por %p54, %p55
    %p57 = scmp.ne.s32.totalorder %s46, %s49
    %p58 = scmp.eq.s32.totalorder %s15, 1
    %p59 = por %p57, %p58
    %p60 = scmp.ne.s32.totalorder %s49, %s50
    %p61 = scmp.eq.s32.totalorder %s15, 0
    %p62 = por %p60, %p61
    %p63 = scmp.ne.s32.totalorder %s49, %s50
    %p64 = scmp.eq.s32.totalorder %s16, 1
    %p65 = por %p63, %p64
    %p67 = scmp.ne.s32.totalorder %s50, %s66
    %p68 = scmp.eq.s32.totalorder %s16, 0
    %p69 = por %p67, %p68
    %s70 = ssub.s32 %s10, %s17
    %p71 = scmp.eq.s32.totalorder %s70, 0
    %s73 = sadd.s32 %s72, 1
    %s74 = scalar_select %p71, %s72, %s73
    %p77 = pneg %p71
    %p78 = scmp.eq.s32.totalorder %s10, 1
    %p79 = por %p77, %p78
    %p80 = scmp.ne.s32.totalorder %s72, %s75
    %p81 = scmp.eq.s32.totalorder %s10, 0
    %p82 = por %p80, %p81
    %p83 = scmp.ne.s32.totalorder %s72, %s75
    %p84 = scmp.eq.s32.totalorder %s15, 1
    %p85 = por %p83, %p84
    %p86 = scmp.ne.s32.totalorder %s75, %s76
    %p87 = scmp.eq.s32.totalorder %s15, 0
    %p88 = por %p86, %p87
    %p89 = scmp.ne.s32.totalorder %s75, %s76
    %p90 = scmp.eq.s32.totalorder %s16, 1
    %p91 = por %p89, %p90
    %p93 = scmp.ne.s32.totalorder %s76, %s92
    %p94 = scmp.eq.s32.totalorder %s16, 0
    %p95 = por %p93, %p94
    %s96 = ssub.s32 %s10, %s17
    %p97 = scmp.eq.s32.totalorder %s96, 0
    %s99 = sadd.s32 %s98, 1
    %s100 = scalar_select %p97, %s98, %s99
    %p103 = pneg %p97
    %p104 = scmp.eq.s32.totalorder %s10, 1
    %p105 = por %p103, %p104
    %p106 = scmp.ne.s32.totalorder %s98, %s101
    %p107 = scmp.eq.s32.totalorder %s10, 0
    %p108 = por %p106, %p107
    %p109 = scmp.ne.s32.totalorder %s98, %s101
    %p110 = scmp.eq.s32.totalorder %s15, 1
    %p111 = por %p109, %p110
    %p112 = scmp.ne.s32.totalorder %s101, %s102
    %p113 = scmp.eq.s32.totalorder %s15, 0
    %p114 = por %p112, %p113
    %p115 = scmp.ne.s32.totalorder %s101, %s102
    %p116 = scmp.eq.s32.totalorder %s16, 1
    %p117 = por %p115, %p116
    %p119 = scmp.ne.s32.totalorder %s102, %s118
    %p120 = scmp.eq.s32.totalorder %s16, 0
    %p121 = por %p119, %p120
    %s122 = ssub.s32 %s10, %s17
    %p123 = scmp.eq.s32.totalorder %s122, 0
    %s125 = sadd.s32 %s124, 1
    %s126 = scalar_select %p123, %s124, %s125
    %p129 = pneg %p123
    %p130 = scmp.eq.s32.totalorder %s10, 1
    %p131 = por %p129, %p130
    %p132 = scmp.ne.s32.totalorder %s124, %s127
    %p133 = scmp.eq.s32.totalorder %s10, 0
    %p134 = por %p132, %p133
    %p135 = scmp.ne.s32.totalorder %s124, %s127
    %p136 = scmp.eq.s32.totalorder %s15, 1
    %p137 = por %p135, %p136
    %p138 = scmp.ne.s32.totalorder %s127, %s128
    %p139 = scmp.eq.s32.totalorder %s15, 0
    %p140 = por %p138, %p139
    %p141 = scmp.ne.s32.totalorder %s127, %s128
    %p142 = scmp.eq.s32.totalorder %s16, 1
    %p143 = por %p141, %p142
    %p145 = scmp.ne.s32.totalorder %s128, %s144
    %p146 = scmp.eq.s32.totalorder %s16, 0
    %p147 = por %p145, %p146
    %p148 = scmp.le.s32.totalorder 1, %s10
    %p149 = scmp.lt.s32.totalorder %s10, 3
    %p150 = pnand %p148, %p149
    %p151 = pneg %p150
    // Predicated region
    $region9: #{_bn_add_relu_impl.1} parent=5 // pred_check
      _
    $region10: #{_bn_add_relu_impl.1} parent=5 // pred_check_branch
      %153 = sbr.rel (%p150) target = $region12
    $region11: #{_bn_add_relu_impl.1} parent=5 // pred_region
      %s154 = ssub.s32 %s10, 1
    $region12: #{_bn_add_relu_impl.1} parent=5 // pred_fallthru
      _
    %p155 = scmp.lt.s32.totalorder %s10, 2
    // Predicated region
    $region13: #{_bn_add_relu_impl.1} parent=5 // pred_check
      %p156 = pneg %p155
    $region14: #{_bn_add_relu_impl.1} parent=5 // pred_check_branch
      %158 = sbr.rel (%p156) target = $region16
    $region15: #{_bn_add_relu_impl.1} parent=5 // pred_region
      // Predicated region
      $region17: #{_bn_add_relu_impl.1} parent=15 // pred_check
        %p159 = pneg %p30
      $region18: #{_bn_add_relu_impl.1} parent=15 // pred_check_branch
        %161 = sbr.rel (%p159) target = $region20
      $region19: #{_bn_add_relu_impl.1} parent=15 // pred_region
        %s162 = smul.u32 77, %s10
        %p163 = scmp.lt.s32.totalorder %s162, 153
        %s164 = scalar_select %p163, %s162, 153
        %s165 = smul.addr %s164, 2
        %s166 = smul.addr %s165, 8
        %s167 = scalar_lea.vmem %s0, %s166
        %s168 = smul.u32 77, %s10
      $region20: #{_bn_add_relu_impl.1} parent=15 // pred_fallthru
        _
      // Predicated region
      $region21: #{_bn_add_relu_impl.1} parent=15 // pred_check
        %p169 = pneg %p56
      $region22: #{_bn_add_relu_impl.1} parent=15 // pred_check_branch
        %171 = sbr.rel (%p169) target = $region24
      $region23: #{_bn_add_relu_impl.1} parent=15 // pred_region
        %s172 = smul.u32 77, %s10
        %p173 = scmp.lt.s32.totalorder %s172, 153
        %s174 = scalar_select %p173, %s172, 153
        %s175 = smul.addr %s174, 2
        %s176 = smul.addr %s175, 8
        %s177 = scalar_lea.vmem %s1, %s176
        %s178 = smul.u32 77, %s10
      $region24: #{_bn_add_relu_impl.1} parent=15 // pred_fallthru
        _
      // Predicated region
      $region25: #{_bn_add_relu_impl.1} parent=15 // pred_check
        %p179 = pneg %p82
      $region26: #{_bn_add_relu_impl.1} parent=15 // pred_check_branch
        %181 = sbr.rel (%p179) target = $region28
      $region27: #{_bn_add_relu_impl.1} parent=15 // pred_region
        %s182 = smul.u32 77, %s10
        %p183 = scmp.lt.s32.totalorder %s182, 153
        %s184 = scalar_select %p183, %s182, 153
        %s185 = smul.addr %s184, 8
        %s186 = scalar_lea.vmem %s2, %s185
        %s187 = smul.u32 77, %s10
      $region28: #{_bn_add_relu_impl.1} parent=15 // pred_fallthru
        _
      // Predicated region
      $region29: #{_bn_add_relu_impl.1} parent=15 // pred_check
        %p188 = pneg %p108
      $region30: #{_bn_add_relu_impl.1} parent=15 // pred_check_branch
        %190 = sbr.rel (%p188) target = $region32
      $region31: #{_bn_add_relu_impl.1} parent=15 // pred_region
        %s191 = smul.u32 77, %s10
        %p192 = scmp.lt.s32.totalorder %s191, 153
        %s193 = scalar_select %p192, %s191, 153
        %s194 = smul.addr %s193, 8
        %s195 = scalar_lea.vmem %s3, %s194
        %s196 = smul.u32 77, %s10
      $region32: #{_bn_add_relu_impl.1} parent=15 // pred_fallthru
        _
    $region16: #{_bn_add_relu_impl.1} parent=5 // pred_fallthru
      _
    %p197 = scmp.le.s32.totalorder 1, %s10
    %p198 = scmp.lt.s32.totalorder %s10, 3
    %p199 = pnand %p197, %p198
    %p200 = pneg %p199
    // Predicated region
    $region33: #{_bn_add_relu_impl.1} parent=5 // pred_check
      _
    $region34: #{_bn_add_relu_impl.1} parent=5 // pred_check_branch
      %202 = sbr.rel (%p199) target = $region36
    $region35: #{_bn_add_relu_impl.1} parent=5 // pred_region
      %s203 = ssub.s32 %s10, 1
      %s204 = smul.u32 77, %s15
      %p205 = scmp.lt.s32.totalorder %s204, 153
      %s206 = scalar_select %p205, %s204, 153
      %s207 = smul.addr %s206, 2
      %s208 = smul.addr %s207, 8
      %s209 = scalar_lea.vmem %s0, %s208
      %p210 = pneg %p36
      %p211 = pneg %p33
      %s212 = smul.u32 77, %s15
      %p213 = scmp.lt.s32.totalorder %s212, 153
      %s214 = scalar_select %p213, %s212, 153
      %s215 = smul.addr %s214, 2
      %s216 = smul.addr %s215, 8
      %s217 = scalar_lea.vmem %s1, %s216
      %p218 = pneg %p62
      %p219 = pneg %p59
      %s220 = smul.u32 77, %s15
      %p221 = scmp.lt.s32.totalorder %s220, 153
      %s222 = scalar_select %p221, %s220, 153
      %s223 = smul.addr %s222, 8
      %s224 = scalar_lea.vmem %s2, %s223
      %p225 = pneg %p88
      %p226 = pneg %p85
      %s227 = smul.u32 77, %s15
      %p228 = scmp.lt.s32.totalorder %s227, 153
      %s229 = scalar_select %p228, %s227, 153
      %s230 = smul.addr %s229, 8
      %s231 = scalar_lea.vmem %s3, %s230
      %p232 = pneg %p114
      %p233 = pneg %p111
      %p234 = pneg %p140
      %p235 = pneg %p137
      %s236 = smul.u32 77, %s15
      %p237 = scmp.lt.s32.totalorder %s236, 153
      %s238 = scalar_select %p237, %s236, 153
      %s239 = smul.addr %s238, 2
      %s240 = smul.addr %s239, 8
      %s241 = scalar_lea.vmem %s4, %s240
      %s242 = smul.u32 77, %s15
      %p243 = scmp.lt.s32.totalorder %s242, 153
      %s244 = scalar_select %p243, %s242, 153
      %s245 = smul.addr %s244, 2
      %s246 = smul.addr %s245, 8
      %s247 = scalar_lea.vmem %s0, %s246
      %s248 = smul.u32 77, %s15
      %s249 = smul.u32 77, %s15
      %p250 = scmp.lt.s32.totalorder %s249, 153
      %s251 = scalar_select %p250, %s249, 153
      %s252 = smul.addr %s251, 2
      %s253 = smul.addr %s252, 8
      %s254 = scalar_lea.vmem %s1, %s253
      %s255 = smul.u32 77, %s15
      %s256 = smul.u32 77, %s15
      %p257 = scmp.lt.s32.totalorder %s256, 153
      %s258 = scalar_select %p257, %s256, 153
      %s259 = smul.addr %s258, 8
      %s260 = scalar_lea.vmem %s2, %s259
      %s261 = smul.u32 77, %s15
      %s262 = smul.u32 77, %s15
      %p263 = scmp.lt.s32.totalorder %s262, 153
      %s264 = scalar_select %p263, %s262, 153
      %s265 = smul.addr %s264, 8
      %s266 = scalar_lea.vmem %s3, %s265
      %s267 = smul.u32 77, %s15
      %s268 = smul.u32 77, %s15
      %p269 = scmp.lt.s32.totalorder %s268, 153
      %s270 = scalar_select %p269, %s268, 153
      %s271 = smul.addr %s270, 2
      %s272 = smul.addr %s271, 8
      %s273 = scalar_lea.vmem %s4, %s272
      %s274 = smul.u32 77, %s15
      %v275 = vld [vmem:[%s247] sm:$0xff]
      %v276 = vld [vmem:[%s247 + $0x8] sm:$0xff]
      %v277 = vld [vmem:[%s247 + $0x10] sm:$0xff]
      %v278 = vld [vmem:[%s247 + $0x18] sm:$0xff]
      %v279 = vld [vmem:[%s247 + $0x20] sm:$0xff]
      %v280 = vld [vmem:[%s247 + $0x28] sm:$0xff]
      %v281 = vld [vmem:[%s247 + $0x30] sm:$0xff]
      %v282 = vld [vmem:[%s247 + $0x38] sm:$0xff]
      %v283 = vld [vmem:[%s247 + $0x40] sm:$0xff]
      %v284 = vld [vmem:[%s247 + $0x48] sm:$0xff]
      %v285 = vld [vmem:[%s247 + $0x50] sm:$0xff]
      %v286 = vld [vmem:[%s247 + $0x58] sm:$0xff]
      %v287 = vld [vmem:[%s247 + $0x60] sm:$0xff]
      %v288 = vld [vmem:[%s247 + $0x68] sm:$0xff]
      %v289 = vld [vmem:[%s247 + $0x70] sm:$0xff]
      %v290 = vld [vmem:[%s247 + $0x78] sm:$0xff]
      %v291 = vld [vmem:[%s247 + $0x80] sm:$0xff]
      %v292 = vld [vmem:[%s247 + $0x88] sm:$0xff]
      %v293 = vld [vmem:[%s247 + $0x90] sm:$0xff]
      %v294 = vld [vmem:[%s247 + $0x98] sm:$0xff]
      %v295 = vld [vmem:[%s247 + $0xa0] sm:$0xff]
      %v296 = vld [vmem:[%s247 + $0xa8] sm:$0xff]
      %v297 = vld [vmem:[%s247 + $0xb0] sm:$0xff]
      %v298 = vld [vmem:[%s247 + $0xb8] sm:$0xff]
      %v299 = vld [vmem:[%s247 + $0xc0] sm:$0xff]
      %v300 = vld [vmem:[%s247 + $0xc8] sm:$0xff]
      %v301 = vld [vmem:[%s247 + $0xd0] sm:$0xff]
      %v302 = vld [vmem:[%s247 + $0xd8] sm:$0xff]
      %v303 = vld [vmem:[%s247 + $0xe0] sm:$0xff]
      %v304 = vld [vmem:[%s247 + $0xe8] sm:$0xff]
      %v305 = vld [vmem:[%s247 + $0xf0] sm:$0xff]
      %v306 = vld [vmem:[%s247 + $0xf8] sm:$0xff]
      %v307 = vld [vmem:[%s247 + $0x100] sm:$0xff]
      %v308 = vld [vmem:[%s247 + $0x108] sm:$0xff]
      %v309 = vld [vmem:[%s247 + $0x110] sm:$0xff]
      %v310 = vld [vmem:[%s247 + $0x118] sm:$0xff]
      %v311 = vld [vmem:[%s247 + $0x120] sm:$0xff]
      %v312 = vld [vmem:[%s247 + $0x128] sm:$0xff]
      %v313 = vld [vmem:[%s247 + $0x130] sm:$0xff]
      %v314 = vld [vmem:[%s247 + $0x138] sm:$0xff]
      %v315 = vld [vmem:[%s247 + $0x140] sm:$0xff]
      %v316 = vld [vmem:[%s247 + $0x148] sm:$0xff]
      %v317 = vld [vmem:[%s247 + $0x150] sm:$0xff]
      %v318 = vld [vmem:[%s247 + $0x158] sm:$0xff]
      %v319 = vld [vmem:[%s247 + $0x160] sm:$0xff]
      %v320 = vld [vmem:[%s247 + $0x168] sm:$0xff]
      %v321 = vld [vmem:[%s247 + $0x170] sm:$0xff]
      %v322 = vld [vmem:[%s247 + $0x178] sm:$0xff]
      %v323 = vld [vmem:[%s247 + $0x180] sm:$0xff]
      %v324 = vld [vmem:[%s247 + $0x188] sm:$0xff]
      %v325 = vld [vmem:[%s247 + $0x190] sm:$0xff]
      %v326 = vld [vmem:[%s247 + $0x198] sm:$0xff]
      %v327 = vld [vmem:[%s247 + $0x1a0] sm:$0xff]
      %v328 = vld [vmem:[%s247 + $0x1a8] sm:$0xff]
      %v329 = vld [vmem:[%s247 + $0x1b0] sm:$0xff]
      %v330 = vld [vmem:[%s247 + $0x1b8] sm:$0xff]
      %v331 = vld [vmem:[%s247 + $0x1c0] sm:$0xff]
      %v332 = vld [vmem:[%s247 + $0x1c8] sm:$0xff]
      %v333 = vld [vmem:[%s247 + $0x1d0] sm:$0xff]
      %v334 = vld [vmem:[%s247 + $0x1d8] sm:$0xff]
      %v335 = vld [vmem:[%s247 + $0x1e0] sm:$0xff]
      %v336 = vld [vmem:[%s247 + $0x1e8] sm:$0xff]
      %v337 = vld [vmem:[%s247 + $0x1f0] sm:$0xff]
      %v338 = vld [vmem:[%s247 + $0x1f8] sm:$0xff]
      %v339 = vld [vmem:[%s247 + $0x200] sm:$0xff]
      %v340 = vld [vmem:[%s247 + $0x208] sm:$0xff]
      %v341 = vld [vmem:[%s247 + $0x210] sm:$0xff]
      %v342 = vld [vmem:[%s247 + $0x218] sm:$0xff]
      %v343 = vld [vmem:[%s247 + $0x220] sm:$0xff]
      %v344 = vld [vmem:[%s247 + $0x228] sm:$0xff]
      %v345 = vld [vmem:[%s247 + $0x230] sm:$0xff]
      %v346 = vld [vmem:[%s247 + $0x238] sm:$0xff]
      %v347 = vld [vmem:[%s247 + $0x240] sm:$0xff]
      %v348 = vld [vmem:[%s247 + $0x248] sm:$0xff]
      %v349 = vld [vmem:[%s247 + $0x250] sm:$0xff]
      %v350 = vld [vmem:[%s247 + $0x258] sm:$0xff]
      %v351 = vld [vmem:[%s247 + $0x260] sm:$0xff]
      %v352 = vld [vmem:[%s247 + $0x268] sm:$0xff]
      %v353 = vld [vmem:[%s247 + $0x270] sm:$0xff]
      %v354 = vld [vmem:[%s247 + $0x278] sm:$0xff]
      %v355 = vld [vmem:[%s247 + $0x280] sm:$0xff]
      %v356 = vld [vmem:[%s247 + $0x288] sm:$0xff]
      %v357 = vld [vmem:[%s247 + $0x290] sm:$0xff]
      %v358 = vld [vmem:[%s247 + $0x298] sm:$0xff]
      %v359 = vld [vmem:[%s247 + $0x2a0] sm:$0xff]
      %v360 = vld [vmem:[%s247 + $0x2a8] sm:$0xff]
      %v361 = vld [vmem:[%s247 + $0x2b0] sm:$0xff]
      %v362 = vld [vmem:[%s247 + $0x2b8] sm:$0xff]
      %v363 = vld [vmem:[%s247 + $0x2c0] sm:$0xff]
      %v364 = vld [vmem:[%s247 + $0x2c8] sm:$0xff]
      %v365 = vld [vmem:[%s247 + $0x2d0] sm:$0xff]
      %v366 = vld [vmem:[%s247 + $0x2d8] sm:$0xff]
      %v367 = vld [vmem:[%s247 + $0x2e0] sm:$0xff]
      %v368 = vld [vmem:[%s247 + $0x2e8] sm:$0xff]
      %v369 = vld [vmem:[%s247 + $0x2f0] sm:$0xff]
      %v370 = vld [vmem:[%s247 + $0x2f8] sm:$0xff]
      %v371 = vld [vmem:[%s247 + $0x300] sm:$0xff]
      %v372 = vld [vmem:[%s247 + $0x308] sm:$0xff]
      %v373 = vld [vmem:[%s247 + $0x310] sm:$0xff]
      %v374 = vld [vmem:[%s247 + $0x318] sm:$0xff]
      %v375 = vld [vmem:[%s247 + $0x320] sm:$0xff]
      %v376 = vld [vmem:[%s247 + $0x328] sm:$0xff]
      %v377 = vld [vmem:[%s247 + $0x330] sm:$0xff]
      %v378 = vld [vmem:[%s247 + $0x338] sm:$0xff]
      %v379 = vld [vmem:[%s247 + $0x340] sm:$0xff]
      %v380 = vld [vmem:[%s247 + $0x348] sm:$0xff]
      %v381 = vld [vmem:[%s247 + $0x350] sm:$0xff]
      %v382 = vld [vmem:[%s247 + $0x358] sm:$0xff]
      %v383 = vld [vmem:[%s247 + $0x360] sm:$0xff]
      %v384 = vld [vmem:[%s247 + $0x368] sm:$0xff]
      %v385 = vld [vmem:[%s247 + $0x370] sm:$0xff]
      %v386 = vld [vmem:[%s247 + $0x378] sm:$0xff]
      %v387 = vld [vmem:[%s247 + $0x380] sm:$0xff]
      %v388 = vld [vmem:[%s247 + $0x388] sm:$0xff]
      %v389 = vld [vmem:[%s247 + $0x390] sm:$0xff]
      %v390 = vld [vmem:[%s247 + $0x398] sm:$0xff]
      %v391 = vld [vmem:[%s247 + $0x3a0] sm:$0xff]
      %v392 = vld [vmem:[%s247 + $0x3a8] sm:$0xff]
      %v393 = vld [vmem:[%s247 + $0x3b0] sm:$0xff]
      %v394 = vld [vmem:[%s247 + $0x3b8] sm:$0xff]
      %v395 = vld [vmem:[%s247 + $0x3c0] sm:$0xff]
      %v396 = vld [vmem:[%s247 + $0x3c8] sm:$0xff]
      %v397 = vld [vmem:[%s247 + $0x3d0] sm:$0xff]
      %v398 = vld [vmem:[%s247 + $0x3d8] sm:$0xff]
      %v399 = vld [vmem:[%s247 + $0x3e0] sm:$0xff]
      %v400 = vld [vmem:[%s247 + $0x3e8] sm:$0xff]
      %v401 = vld [vmem:[%s247 + $0x3f0] sm:$0xff]
      %v402 = vld [vmem:[%s247 + $0x3f8] sm:$0xff]
      %v403 = vld [vmem:[%s247 + $0x400] sm:$0xff]
      %v404 = vld [vmem:[%s247 + $0x408] sm:$0xff]
      %v405 = vld [vmem:[%s247 + $0x410] sm:$0xff]
      %v406 = vld [vmem:[%s247 + $0x418] sm:$0xff]
      %v407 = vld [vmem:[%s247 + $0x420] sm:$0xff]
      %v408 = vld [vmem:[%s247 + $0x428] sm:$0xff]
      %v409 = vld [vmem:[%s247 + $0x430] sm:$0xff]
      %v410 = vld [vmem:[%s247 + $0x438] sm:$0xff]
      %v411 = vld [vmem:[%s247 + $0x440] sm:$0xff]
      %v412 = vld [vmem:[%s247 + $0x448] sm:$0xff]
      %v413 = vld [vmem:[%s247 + $0x450] sm:$0xff]
      %v414 = vld [vmem:[%s247 + $0x458] sm:$0xff]
      %v415 = vld [vmem:[%s247 + $0x460] sm:$0xff]
      %v416 = vld [vmem:[%s247 + $0x468] sm:$0xff]
      %v417 = vld [vmem:[%s247 + $0x470] sm:$0xff]
      %v418 = vld [vmem:[%s247 + $0x478] sm:$0xff]
      %v419 = vld [vmem:[%s247 + $0x480] sm:$0xff]
      %v420 = vld [vmem:[%s247 + $0x488] sm:$0xff]
      %v421 = vld [vmem:[%s247 + $0x490] sm:$0xff]
      %v422 = vld [vmem:[%s247 + $0x498] sm:$0xff]
      %v423 = vld [vmem:[%s247 + $0x4a0] sm:$0xff]
      %v424 = vld [vmem:[%s247 + $0x4a8] sm:$0xff]
      %v425 = vld [vmem:[%s247 + $0x4b0] sm:$0xff]
      %v426 = vld [vmem:[%s247 + $0x4b8] sm:$0xff]
      %v427 = vld [vmem:[%s247 + $0x4c0] sm:$0xff]
      %v428 = vld [vmem:[%s247 + $0x4c8] sm:$0xff]
      %vm429 = vcmask 556032
      %v430 = vsel %vm429, %v276, 0.0
      %v431 = vadd.f32 %v275, %v430
      %432 = vadd.xlane.f32.xlu0 %v431
      %v433 = vpop.xlane.xlu0 %432
      %v434 = vsel %vm429, %v278, 0.0
      %v435 = vadd.f32 %v277, %v434
      %436 = vadd.xlane.f32.xlu0 %v435
      %v437 = vpop.xlane.xlu0 %436
      %v438 = vsel %vm429, %v280, 0.0
      %v439 = vadd.f32 %v279, %v438
      %440 = vadd.xlane.f32.xlu0 %v439
      %v441 = vpop.xlane.xlu0 %440
      %v442 = vsel %vm429, %v282, 0.0
      %v443 = vadd.f32 %v281, %v442
      %444 = vadd.xlane.f32.xlu0 %v443
      %v445 = vpop.xlane.xlu0 %444
      %v446 = vsel %vm429, %v284, 0.0
      %v447 = vadd.f32 %v283, %v446
      %448 = vadd.xlane.f32.xlu0 %v447
      %v449 = vpop.xlane.xlu0 %448
      %v450 = vsel %vm429, %v286, 0.0
      %v451 = vadd.f32 %v285, %v450
      %452 = vadd.xlane.f32.xlu0 %v451
      %v453 = vpop.xlane.xlu0 %452
      %v454 = vsel %vm429, %v288, 0.0
      %v455 = vadd.f32 %v287, %v454
      %456 = vadd.xlane.f32.xlu0 %v455
      %v457 = vpop.xlane.xlu0 %456
      %v458 = vsel %vm429, %v290, 0.0
      %v459 = vadd.f32 %v289, %v458
      %460 = vadd.xlane.f32.xlu0 %v459
      %v461 = vpop.xlane.xlu0 %460
      %v462 = vsel %vm429, %v292, 0.0
      %v463 = vadd.f32 %v291, %v462
      %464 = vadd.xlane.f32.xlu0 %v463
      %v465 = vpop.xlane.xlu0 %464
      %v466 = vsel %vm429, %v294, 0.0
      %v467 = vadd.f32 %v293, %v466
      %468 = vadd.xlane.f32.xlu0 %v467
      %v469 = vpop.xlane.xlu0 %468
      %v470 = vsel %vm429, %v296, 0.0
      %v471 = vadd.f32 %v295, %v470
      %472 = vadd.xlane.f32.xlu0 %v471
      %v473 = vpop.xlane.xlu0 %472
      %v474 = vsel %vm429, %v298, 0.0
      %v475 = vadd.f32 %v297, %v474
      %476 = vadd.xlane.f32.xlu0 %v475
      %v477 = vpop.xlane.xlu0 %476
      %v478 = vsel %vm429, %v300, 0.0
      %v479 = vadd.f32 %v299, %v478
      %480 = vadd.xlane.f32.xlu0 %v479
      %v481 = vpop.xlane.xlu0 %480
      %v482 = vsel %vm429, %v302, 0.0
      %v483 = vadd.f32 %v301, %v482
      %484 = vadd.xlane.f32.xlu0 %v483
      %v485 = vpop.xlane.xlu0 %484
      %v486 = vsel %vm429, %v304, 0.0
      %v487 = vadd.f32 %v303, %v486
      %488 = vadd.xlane.f32.xlu0 %v487
      %v489 = vpop.xlane.xlu0 %488
      %v490 = vsel %vm429, %v306, 0.0
      %v491 = vadd.f32 %v305, %v490
      %492 = vadd.xlane.f32.xlu0 %v491
      %v493 = vpop.xlane.xlu0 %492
      %v494 = vsel %vm429, %v308, 0.0
      %v495 = vadd.f32 %v307, %v494
      %496 = vadd.xlane.f32.xlu0 %v495
      %v497 = vpop.xlane.xlu0 %496
      %v498 = vsel %vm429, %v310, 0.0
      %v499 = vadd.f32 %v309, %v498
      %500 = vadd.xlane.f32.xlu0 %v499
      %v501 = vpop.xlane.xlu0 %500
      %v502 = vsel %vm429, %v312, 0.0
      %v503 = vadd.f32 %v311, %v502
      %504 = vadd.xlane.f32.xlu0 %v503
      %v505 = vpop.xlane.xlu0 %504
      %v506 = vsel %vm429, %v314, 0.0
      %v507 = vadd.f32 %v313, %v506
      %508 = vadd.xlane.f32.xlu0 %v507
      %v509 = vpop.xlane.xlu0 %508
      %v510 = vsel %vm429, %v316, 0.0
      %v511 = vadd.f32 %v315, %v510
      %512 = vadd.xlane.f32.xlu0 %v511
      %v513 = vpop.xlane.xlu0 %512
      %v514 = vsel %vm429, %v318, 0.0
      %v515 = vadd.f32 %v317, %v514
      %516 = vadd.xlane.f32.xlu0 %v515
      %v517 = vpop.xlane.xlu0 %516
      %v518 = vsel %vm429, %v320, 0.0
      %v519 = vadd.f32 %v319, %v518
      %520 = vadd.xlane.f32.xlu0 %v519
      %v521 = vpop.xlane.xlu0 %520
      %v522 = vsel %vm429, %v322, 0.0
      %v523 = vadd.f32 %v321, %v522
      %524 = vadd.xlane.f32.xlu0 %v523
      %v525 = vpop.xlane.xlu0 %524
      %v526 = vsel %vm429, %v324, 0.0
      %v527 = vadd.f32 %v323, %v526
      %528 = vadd.xlane.f32.xlu0 %v527
      %v529 = vpop.xlane.xlu0 %528
      %v530 = vsel %vm429, %v326, 0.0
      %v531 = vadd.f32 %v325, %v530
      %532 = vadd.xlane.f32.xlu0 %v531
      %v533 = vpop.xlane.xlu0 %532
      %v534 = vsel %vm429, %v328, 0.0
      %v535 = vadd.f32 %v327, %v534
      %536 = vadd.xlane.f32.xlu0 %v535
      %v537 = vpop.xlane.xlu0 %536
      %v538 = vsel %vm429, %v330, 0.0
      %v539 = vadd.f32 %v329, %v538
      %540 = vadd.xlane.f32.xlu0 %v539
      %v541 = vpop.xlane.xlu0 %540
      %v542 = vsel %vm429, %v332, 0.0
      %v543 = vadd.f32 %v331, %v542
      %544 = vadd.xlane.f32.xlu0 %v543
      %v545 = vpop.xlane.xlu0 %544
      %v546 = vsel %vm429, %v334, 0.0
      %v547 = vadd.f32 %v333, %v546
      %548 = vadd.xlane.f32.xlu0 %v547
      %v549 = vpop.xlane.xlu0 %548
      %v550 = vsel %vm429, %v336, 0.0
      %v551 = vadd.f32 %v335, %v550
      %552 = vadd.xlane.f32.xlu0 %v551
      %v553 = vpop.xlane.xlu0 %552
      %v554 = vsel %vm429, %v338, 0.0
      %v555 = vadd.f32 %v337, %v554
      %556 = vadd.xlane.f32.xlu0 %v555
      %v557 = vpop.xlane.xlu0 %556
      %v558 = vsel %vm429, %v340, 0.0
      %v559 = vadd.f32 %v339, %v558
      %560 = vadd.xlane.f32.xlu0 %v559
      %v561 = vpop.xlane.xlu0 %560
      %v562 = vsel %vm429, %v342, 0.0
      %v563 = vadd.f32 %v341, %v562
      %564 = vadd.xlane.f32.xlu0 %v563
      %v565 = vpop.xlane.xlu0 %564
      %v566 = vsel %vm429, %v344, 0.0
      %v567 = vadd.f32 %v343, %v566
      %568 = vadd.xlane.f32.xlu0 %v567
      %v569 = vpop.xlane.xlu0 %568
      %v570 = vsel %vm429, %v346, 0.0
      %v571 = vadd.f32 %v345, %v570
      %572 = vadd.xlane.f32.xlu0 %v571
      %v573 = vpop.xlane.xlu0 %572
      %v574 = vsel %vm429, %v348, 0.0
      %v575 = vadd.f32 %v347, %v574
      %576 = vadd.xlane.f32.xlu0 %v575
      %v577 = vpop.xlane.xlu0 %576
      %v578 = vsel %vm429, %v350, 0.0
      %v579 = vadd.f32 %v349, %v578
      %580 = vadd.xlane.f32.xlu0 %v579
      %v581 = vpop.xlane.xlu0 %580
      %v582 = vsel %vm429, %v352, 0.0
      %v583 = vadd.f32 %v351, %v582
      %584 = vadd.xlane.f32.xlu0 %v583
      %v585 = vpop.xlane.xlu0 %584
      %v586 = vsel %vm429, %v354, 0.0
      %v587 = vadd.f32 %v353, %v586
      %588 = vadd.xlane.f32.xlu0 %v587
      %v589 = vpop.xlane.xlu0 %588
      %v590 = vsel %vm429, %v356, 0.0
      %v591 = vadd.f32 %v355, %v590
      %592 = vadd.xlane.f32.xlu0 %v591
      %v593 = vpop.xlane.xlu0 %592
      %v594 = vsel %vm429, %v358, 0.0
      %v595 = vadd.f32 %v357, %v594
      %596 = vadd.xlane.f32.xlu0 %v595
      %v597 = vpop.xlane.xlu0 %596
      %v598 = vsel %vm429, %v360, 0.0
      %v599 = vadd.f32 %v359, %v598
      %600 = vadd.xlane.f32.xlu0 %v599
      %v601 = vpop.xlane.xlu0 %600
      %v602 = vsel %vm429, %v362, 0.0
      %v603 = vadd.f32 %v361, %v602
      %604 = vadd.xlane.f32.xlu0 %v603
      %v605 = vpop.xlane.xlu0 %604
      %v606 = vsel %vm429, %v364, 0.0
      %v607 = vadd.f32 %v363, %v606
      %608 = vadd.xlane.f32.xlu0 %v607
      %v609 = vpop.xlane.xlu0 %608
      %v610 = vsel %vm429, %v366, 0.0
      %v611 = vadd.f32 %v365, %v610
      %612 = vadd.xlane.f32.xlu0 %v611
      %v613 = vpop.xlane.xlu0 %612
      %v614 = vsel %vm429, %v368, 0.0
      %v615 = vadd.f32 %v367, %v614
      %616 = vadd.xlane.f32.xlu0 %v615
      %v617 = vpop.xlane.xlu0 %616
      %v618 = vsel %vm429, %v370, 0.0
      %v619 = vadd.f32 %v369, %v618
      %620 = vadd.xlane.f32.xlu0 %v619
      %v621 = vpop.xlane.xlu0 %620
      %v622 = vsel %vm429, %v372, 0.0
      %v623 = vadd.f32 %v371, %v622
      %624 = vadd.xlane.f32.xlu0 %v623
      %v625 = vpop.xlane.xlu0 %624
      %v626 = vsel %vm429, %v374, 0.0
      %v627 = vadd.f32 %v373, %v626
      %628 = vadd.xlane.f32.xlu0 %v627
      %v629 = vpop.xlane.xlu0 %628
      %v630 = vsel %vm429, %v376, 0.0
      %v631 = vadd.f32 %v375, %v630
      %632 = vadd.xlane.f32.xlu0 %v631
      %v633 = vpop.xlane.xlu0 %632
      %v634 = vsel %vm429, %v378, 0.0
      %v635 = vadd.f32 %v377, %v634
      %636 = vadd.xlane.f32.xlu0 %v635
      %v637 = vpop.xlane.xlu0 %636
      %v638 = vsel %vm429, %v380, 0.0
      %v639 = vadd.f32 %v379, %v638
      %640 = vadd.xlane.f32.xlu0 %v639
      %v641 = vpop.xlane.xlu0 %640
      %v642 = vsel %vm429, %v382, 0.0
      %v643 = vadd.f32 %v381, %v642
      %644 = vadd.xlane.f32.xlu0 %v643
      %v645 = vpop.xlane.xlu0 %644
      %v646 = vsel %vm429, %v384, 0.0
      %v647 = vadd.f32 %v383, %v646
      %648 = vadd.xlane.f32.xlu0 %v647
      %v649 = vpop.xlane.xlu0 %648
      %v650 = vsel %vm429, %v386, 0.0
      %v651 = vadd.f32 %v385, %v650
      %652 = vadd.xlane.f32.xlu0 %v651
      %v653 = vpop.xlane.xlu0 %652
      %v654 = vsel %vm429, %v388, 0.0
      %v655 = vadd.f32 %v387, %v654
      %656 = vadd.xlane.f32.xlu0 %v655
      %v657 = vpop.xlane.xlu0 %656
      %v658 = vsel %vm429, %v390, 0.0
      %v659 = vadd.f32 %v389, %v658
      %660 = vadd.xlane.f32.xlu0 %v659
      %v661 = vpop.xlane.xlu0 %660
      %v662 = vsel %vm429, %v392, 0.0
      %v663 = vadd.f32 %v391, %v662
      %664 = vadd.xlane.f32.xlu0 %v663
      %v665 = vpop.xlane.xlu0 %664
      %v666 = vsel %vm429, %v394, 0.0
      %v667 = vadd.f32 %v393, %v666
      %668 = vadd.xlane.f32.xlu0 %v667
      %v669 = vpop.xlane.xlu0 %668
      %v670 = vsel %vm429, %v396, 0.0
      %v671 = vadd.f32 %v395, %v670
      %672 = vadd.xlane.f32.xlu0 %v671
      %v673 = vpop.xlane.xlu0 %672
      %v674 = vsel %vm429, %v398, 0.0
      %v675 = vadd.f32 %v397, %v674
      %676 = vadd.xlane.f32.xlu0 %v675
      %v677 = vpop.xlane.xlu0 %676
      %v678 = vsel %vm429, %v400, 0.0
      %v679 = vadd.f32 %v399, %v678
      %680 = vadd.xlane.f32.xlu0 %v679
      %v681 = vpop.xlane.xlu0 %680
      %v682 = vsel %vm429, %v402, 0.0
      %v683 = vadd.f32 %v401, %v682
      %684 = vadd.xlane.f32.xlu0 %v683
      %v685 = vpop.xlane.xlu0 %684
      %v686 = vsel %vm429, %v404, 0.0
      %v687 = vadd.f32 %v403, %v686
      %688 = vadd.xlane.f32.xlu0 %v687
      %v689 = vpop.xlane.xlu0 %688
      %v690 = vsel %vm429, %v406, 0.0
      %v691 = vadd.f32 %v405, %v690
      %692 = vadd.xlane.f32.xlu0 %v691
      %v693 = vpop.xlane.xlu0 %692
      %v694 = vsel %vm429, %v408, 0.0
      %v695 = vadd.f32 %v407, %v694
      %696 = vadd.xlane.f32.xlu0 %v695
      %v697 = vpop.xlane.xlu0 %696
      %v698 = vsel %vm429, %v410, 0.0
      %v699 = vadd.f32 %v409, %v698
      %700 = vadd.xlane.f32.xlu0 %v699
      %v701 = vpop.xlane.xlu0 %700
      %v702 = vsel %vm429, %v412, 0.0
      %v703 = vadd.f32 %v411, %v702
      %704 = vadd.xlane.f32.xlu0 %v703
      %v705 = vpop.xlane.xlu0 %704
      %v706 = vsel %vm429, %v414, 0.0
      %v707 = vadd.f32 %v413, %v706
      %708 = vadd.xlane.f32.xlu0 %v707
      %v709 = vpop.xlane.xlu0 %708
      %v710 = vsel %vm429, %v416, 0.0
      %v711 = vadd.f32 %v415, %v710
      %712 = vadd.xlane.f32.xlu0 %v711
      %v713 = vpop.xlane.xlu0 %712
      %v714 = vsel %vm429, %v418, 0.0
      %v715 = vadd.f32 %v417, %v714
      %716 = vadd.xlane.f32.xlu0 %v715
      %v717 = vpop.xlane.xlu0 %716
      %v718 = vsel %vm429, %v420, 0.0
      %v719 = vadd.f32 %v419, %v718
      %720 = vadd.xlane.f32.xlu0 %v719
      %v721 = vpop.xlane.xlu0 %720
      %v722 = vsel %vm429, %v422, 0.0
      %v723 = vadd.f32 %v421, %v722
      %724 = vadd.xlane.f32.xlu0 %v723
      %v725 = vpop.xlane.xlu0 %724
      %v726 = vsel %vm429, %v424, 0.0
      %v727 = vadd.f32 %v423, %v726
      %728 = vadd.xlane.f32.xlu0 %v727
      %v729 = vpop.xlane.xlu0 %728
      %v730 = vsel %vm429, %v426, 0.0
      %v731 = vadd.f32 %v425, %v730
      %732 = vadd.xlane.f32.xlu0 %v731
      %v733 = vpop.xlane.xlu0 %732
      %v734 = vsel %vm429, %v428, 0.0
      %v735 = vadd.f32 %v427, %v734
      %736 = vadd.xlane.f32.xlu0 %v735
      %v737 = vpop.xlane.xlu0 %736
      %v738 = vmul.f32 %v275, %v275
      %v739 = vmul.f32 %v276, %v276
      %v740 = vmul.f32 %v277, %v277
      %v741 = vmul.f32 %v278, %v278
      %v742 = vmul.f32 %v279, %v279
      %v743 = vmul.f32 %v280, %v280
      %v744 = vmul.f32 %v281, %v281
      %v745 = vmul.f32 %v282, %v282
      %v746 = vmul.f32 %v283, %v283
      %v747 = vmul.f32 %v284, %v284
      %v748 = vmul.f32 %v285, %v285
      %v749 = vmul.f32 %v286, %v286
      %v750 = vmul.f32 %v287, %v287
      %v751 = vmul.f32 %v288, %v288
      %v752 = vmul.f32 %v289, %v289
      %v753 = vmul.f32 %v290, %v290
      %v754 = vmul.f32 %v291, %v291
      %v755 = vmul.f32 %v292, %v292
      %v756 = vmul.f32 %v293, %v293
      %v757 = vmul.f32 %v294, %v294
      %v758 = vmul.f32 %v295, %v295
      %v759 = vmul.f32 %v296, %v296
      %v760 = vmul.f32 %v297, %v297
      %v761 = vmul.f32 %v298, %v298
      %v762 = vmul.f32 %v299, %v299
      %v763 = vmul.f32 %v300, %v300
      %v764 = vmul.f32 %v301, %v301
      %v765 = vmul.f32 %v302, %v302
      %v766 = vmul.f32 %v303, %v303
      %v767 = vmul.f32 %v304, %v304
      %v768 = vmul.f32 %v305, %v305
      %v769 = vmul.f32 %v306, %v306
      %v770 = vmul.f32 %v307, %v307
      %v771 = vmul.f32 %v308, %v308
      %v772 = vmul.f32 %v309, %v309
      %v773 = vmul.f32 %v310, %v310
      %v774 = vmul.f32 %v311, %v311
      %v775 = vmul.f32 %v312, %v312
      %v776 = vmul.f32 %v313, %v313
      %v777 = vmul.f32 %v314, %v314
      %v778 = vmul.f32 %v315, %v315
      %v779 = vmul.f32 %v316, %v316
      %v780 = vmul.f32 %v317, %v317
      %v781 = vmul.f32 %v318, %v318
      %v782 = vmul.f32 %v319, %v319
      %v783 = vmul.f32 %v320, %v320
      %v784 = vmul.f32 %v321, %v321
      %v785 = vmul.f32 %v322, %v322
      %v786 = vmul.f32 %v323, %v323
      %v787 = vmul.f32 %v324, %v324
      %v788 = vmul.f32 %v325, %v325
      %v789 = vmul.f32 %v326, %v326
      %v790 = vmul.f32 %v327, %v327
      %v791 = vmul.f32 %v328, %v328
      %v792 = vmul.f32 %v329, %v329
      %v793 = vmul.f32 %v330, %v330
      %v794 = vmul.f32 %v331, %v331
      %v795 = vmul.f32 %v332, %v332
      %v796 = vmul.f32 %v333, %v333
      %v797 = vmul.f32 %v334, %v334
      %v798 = vmul.f32 %v335, %v335
      %v799 = vmul.f32 %v336, %v336
      %v800 = vmul.f32 %v337, %v337
      %v801 = vmul.f32 %v338, %v338
      %v802 = vmul.f32 %v339, %v339
      %v803 = vmul.f32 %v340, %v340
      %v804 = vmul.f32 %v341, %v341
      %v805 = vmul.f32 %v342, %v342
      %v806 = vmul.f32 %v343, %v343
      %v807 = vmul.f32 %v344, %v344
      %v808 = vmul.f32 %v345, %v345
      %v809 = vmul.f32 %v346, %v346
      %v810 = vmul.f32 %v347, %v347
      %v811 = vmul.f32 %v348, %v348
      %v812 = vmul.f32 %v349, %v349
      %v813 = vmul.f32 %v350, %v350
      %v814 = vmul.f32 %v351, %v351
      %v815 = vmul.f32 %v352, %v352
      %v816 = vmul.f32 %v353, %v353
      %v817 = vmul.f32 %v354, %v354
      %v818 = vmul.f32 %v355, %v355
      %v819 = vmul.f32 %v356, %v356
      %v820 = vmul.f32 %v357, %v357
      %v821 = vmul.f32 %v358, %v358
      %v822 = vmul.f32 %v359, %v359
      %v823 = vmul.f32 %v360, %v360
      %v824 = vmul.f32 %v361, %v361
      %v825 = vmul.f32 %v362, %v362
      %v826 = vmul.f32 %v363, %v363
      %v827 = vmul.f32 %v364, %v364
      %v828 = vmul.f32 %v365, %v365
      %v829 = vmul.f32 %v366, %v366
      %v830 = vmul.f32 %v367, %v367
      %v831 = vmul.f32 %v368, %v368
      %v832 = vmul.f32 %v369, %v369
      %v833 = vmul.f32 %v370, %v370
      %v834 = vmul.f32 %v371, %v371
      %v835 = vmul.f32 %v372, %v372
      %v836 = vmul.f32 %v373, %v373
      %v837 = vmul.f32 %v374, %v374
      %v838 = vmul.f32 %v375, %v375
      %v839 = vmul.f32 %v376, %v376
      %v840 = vmul.f32 %v377, %v377
      %v841 = vmul.f32 %v378, %v378
      %v842 = vmul.f32 %v379, %v379
      %v843 = vmul.f32 %v380, %v380
      %v844 = vmul.f32 %v381, %v381
      %v845 = vmul.f32 %v382, %v382
      %v846 = vmul.f32 %v383, %v383
      %v847 = vmul.f32 %v384, %v384
      %v848 = vmul.f32 %v385, %v385
      %v849 = vmul.f32 %v386, %v386
      %v850 = vmul.f32 %v387, %v387
      %v851 = vmul.f32 %v388, %v388
      %v852 = vmul.f32 %v389, %v389
      %v853 = vmul.f32 %v390, %v390
      %v854 = vmul.f32 %v391, %v391
      %v855 = vmul.f32 %v392, %v392
      %v856 = vmul.f32 %v393, %v393
      %v857 = vmul.f32 %v394, %v394
      %v858 = vmul.f32 %v395, %v395
      %v859 = vmul.f32 %v396, %v396
      %v860 = vmul.f32 %v397, %v397
      %v861 = vmul.f32 %v398, %v398
      %v862 = vmul.f32 %v399, %v399
      %v863 = vmul.f32 %v400, %v400
      %v864 = vmul.f32 %v401, %v401
      %v865 = vmul.f32 %v402, %v402
      %v866 = vmul.f32 %v403, %v403
      %v867 = vmul.f32 %v404, %v404
      %v868 = vmul.f32 %v405, %v405
      %v869 = vmul.f32 %v406, %v406
      %v870 = vmul.f32 %v407, %v407
      %v871 = vmul.f32 %v408, %v408
      %v872 = vmul.f32 %v409, %v409
      %v873 = vmul.f32 %v410, %v410
      %v874 = vmul.f32 %v411, %v411
      %v875 = vmul.f32 %v412, %v412
      %v876 = vmul.f32 %v413, %v413
      %v877 = vmul.f32 %v414, %v414
      %v878 = vmul.f32 %v415, %v415
      %v879 = vmul.f32 %v416, %v416
      %v880 = vmul.f32 %v417, %v417
      %v881 = vmul.f32 %v418, %v418
      %v882 = vmul.f32 %v419, %v419
      %v883 = vmul.f32 %v420, %v420
      %v884 = vmul.f32 %v421, %v421
      %v885 = vmul.f32 %v422, %v422
      %v886 = vmul.f32 %v423, %v423
      %v887 = vmul.f32 %v424, %v424
      %v888 = vmul.f32 %v425, %v425
      %v889 = vmul.f32 %v426, %v426
      %v890 = vmul.f32 %v427, %v427
      %v891 = vmul.f32 %v428, %v428
      %v892 = vsel %vm429, %v739, 0.0
      %v893 = vadd.f32 %v738, %v892
      %894 = vadd.xlane.f32.xlu0 %v893
      %v895 = vpop.xlane.xlu0 %894
      %v896 = vsel %vm429, %v741, 0.0
      %v897 = vadd.f32 %v740, %v896
      %898 = vadd.xlane.f32.xlu0 %v897
      %v899 = vpop.xlane.xlu0 %898
      %v900 = vsel %vm429, %v743, 0.0
      %v901 = vadd.f32 %v742, %v900
      %902 = vadd.xlane.f32.xlu0 %v901
      %v903 = vpop.xlane.xlu0 %902
      %v904 = vsel %vm429, %v745, 0.0
      %v905 = vadd.f32 %v744, %v904
      %906 = vadd.xlane.f32.xlu0 %v905
      %v907 = vpop.xlane.xlu0 %906
      %v908 = vsel %vm429, %v747, 0.0
      %v909 = vadd.f32 %v746, %v908
      %910 = vadd.xlane.f32.xlu0 %v909
      %v911 = vpop.xlane.xlu0 %910
      %v912 = vsel %vm429, %v749, 0.0
      %v913 = vadd.f32 %v748, %v912
      %914 = vadd.xlane.f32.xlu0 %v913
      %v915 = vpop.xlane.xlu0 %914
      %v916 = vsel %vm429, %v751, 0.0
      %v917 = vadd.f32 %v750, %v916
      %918 = vadd.xlane.f32.xlu0 %v917
      %v919 = vpop.xlane.xlu0 %918
      %v920 = vsel %vm429, %v753, 0.0
      %v921 = vadd.f32 %v752, %v920
      %922 = vadd.xlane.f32.xlu0 %v921
      %v923 = vpop.xlane.xlu0 %922
      %v924 = vsel %vm429, %v755, 0.0
      %v925 = vadd.f32 %v754, %v924
      %926 = vadd.xlane.f32.xlu0 %v925
      %v927 = vpop.xlane.xlu0 %926
      %v928 = vsel %vm429, %v757, 0.0
      %v929 = vadd.f32 %v756, %v928
      %930 = vadd.xlane.f32.xlu0 %v929
      %v931 = vpop.xlane.xlu0 %930
      %v932 = vsel %vm429, %v759, 0.0
      %v933 = vadd.f32 %v758, %v932
      %934 = vadd.xlane.f32.xlu0 %v933
      %v935 = vpop.xlane.xlu0 %934
      %v936 = vsel %vm429, %v761, 0.0
      %v937 = vadd.f32 %v760, %v936
      %938 = vadd.xlane.f32.xlu0 %v937
      %v939 = vpop.xlane.xlu0 %938
      %v940 = vsel %vm429, %v763, 0.0
      %v941 = vadd.f32 %v762, %v940
      %942 = vadd.xlane.f32.xlu0 %v941
      %v943 = vpop.xlane.xlu0 %942
      %v944 = vsel %vm429, %v765, 0.0
      %v945 = vadd.f32 %v764, %v944
      %946 = vadd.xlane.f32.xlu0 %v945
      %v947 = vpop.xlane.xlu0 %946
      %v948 = vsel %vm429, %v767, 0.0
      %v949 = vadd.f32 %v766, %v948
      %950 = vadd.xlane.f32.xlu0 %v949
      %v951 = vpop.xlane.xlu0 %950
      %v952 = vsel %vm429, %v769, 0.0
      %v953 = vadd.f32 %v768, %v952
      %954 = vadd.xlane.f32.xlu0 %v953
      %v955 = vpop.xlane.xlu0 %954
      %v956 = vsel %vm429, %v771, 0.0
      %v957 = vadd.f32 %v770, %v956
      %958 = vadd.xlane.f32.xlu0 %v957
      %v959 = vpop.xlane.xlu0 %958
      %v960 = vsel %vm429, %v773, 0.0
      %v961 = vadd.f32 %v772, %v960
      %962 = vadd.xlane.f32.xlu0 %v961
      %v963 = vpop.xlane.xlu0 %962
      %v964 = vsel %vm429, %v775, 0.0
      %v965 = vadd.f32 %v774, %v964
      %966 = vadd.xlane.f32.xlu0 %v965
      %v967 = vpop.xlane.xlu0 %966
      %v968 = vsel %vm429, %v777, 0.0
      %v969 = vadd.f32 %v776, %v968
      %970 = vadd.xlane.f32.xlu0 %v969
      %v971 = vpop.xlane.xlu0 %970
      %v972 = vsel %vm429, %v779, 0.0
      %v973 = vadd.f32 %v778, %v972
      %974 = vadd.xlane.f32.xlu0 %v973
      %v975 = vpop.xlane.xlu0 %974
      %v976 = vsel %vm429, %v781, 0.0
      %v977 = vadd.f32 %v780, %v976
      %978 = vadd.xlane.f32.xlu0 %v977
      %v979 = vpop.xlane.xlu0 %978
      %v980 = vsel %vm429, %v783, 0.0
      %v981 = vadd.f32 %v782, %v980
      %982 = vadd.xlane.f32.xlu0 %v981
      %v983 = vpop.xlane.xlu0 %982
      %v984 = vsel %vm429, %v785, 0.0
      %v985 = vadd.f32 %v784, %v984
      %986 = vadd.xlane.f32.xlu0 %v985
      %v987 = vpop.xlane.xlu0 %986
      %v988 = vsel %vm429, %v787, 0.0
      %v989 = vadd.f32 %v786, %v988
      %990 = vadd.xlane.f32.xlu0 %v989
      %v991 = vpop.xlane.xlu0 %990
      %v992 = vsel %vm429, %v789, 0.0
      %v993 = vadd.f32 %v788, %v992
      %994 = vadd.xlane.f32.xlu0 %v993
      %v995 = vpop.xlane.xlu0 %994
      %v996 = vsel %vm429, %v791, 0.0
      %v997 = vadd.f32 %v790, %v996
      %998 = vadd.xlane.f32.xlu0 %v997
      %v999 = vpop.xlane.xlu0 %998
      %v1000 = vsel %vm429, %v793, 0.0
      %v1001 = vadd.f32 %v792, %v1000
      %1002 = vadd.xlane.f32.xlu0 %v1001
      %v1003 = vpop.xlane.xlu0 %1002
      %v1004 = vsel %vm429, %v795, 0.0
      %v1005 = vadd.f32 %v794, %v1004
      %1006 = vadd.xlane.f32.xlu0 %v1005
      %v1007 = vpop.xlane.xlu0 %1006
      %v1008 = vsel %vm429, %v797, 0.0
      %v1009 = vadd.f32 %v796, %v1008
      %1010 = vadd.xlane.f32.xlu0 %v1009
      %v1011 = vpop.xlane.xlu0 %1010
      %v1012 = vsel %vm429, %v799, 0.0
      %v1013 = vadd.f32 %v798, %v1012
      %1014 = vadd.xlane.f32.xlu0 %v1013
      %v1015 = vpop.xlane.xlu0 %1014
      %v1016 = vsel %vm429, %v801, 0.0
      %v1017 = vadd.f32 %v800, %v1016
      %1018 = vadd.xlane.f32.xlu0 %v1017
      %v1019 = vpop.xlane.xlu0 %1018
      %v1020 = vsel %vm429, %v803, 0.0
      %v1021 = vadd.f32 %v802, %v1020
      %1022 = vadd.xlane.f32.xlu0 %v1021
      %v1023 = vpop.xlane.xlu0 %1022
      %v1024 = vsel %vm429, %v805, 0.0
      %v1025 = vadd.f32 %v804, %v1024
      %1026 = vadd.xlane.f32.xlu0 %v1025
      %v1027 = vpop.xlane.xlu0 %1026
      %v1028 = vsel %vm429, %v807, 0.0
      %v1029 = vadd.f32 %v806, %v1028
      %1030 = vadd.xlane.f32.xlu0 %v1029
      %v1031 = vpop.xlane.xlu0 %1030
      %v1032 = vsel %vm429, %v809, 0.0
      %v1033 = vadd.f32 %v808, %v1032
      %1034 = vadd.xlane.f32.xlu0 %v1033
      %v1035 = vpop.xlane.xlu0 %1034
      %v1036 = vsel %vm429, %v811, 0.0
      %v1037 = vadd.f32 %v810, %v1036
      %1038 = vadd.xlane.f32.xlu0 %v1037
      %v1039 = vpop.xlane.xlu0 %1038
      %v1040 = vsel %vm429, %v813, 0.0
      %v1041 = vadd.f32 %v812, %v1040
      %1042 = vadd.xlane.f32.xlu0 %v1041
      %v1043 = vpop.xlane.xlu0 %1042
      %v1044 = vsel %vm429, %v815, 0.0
      %v1045 = vadd.f32 %v814, %v1044
      %1046 = vadd.xlane.f32.xlu0 %v1045
      %v1047 = vpop.xlane.xlu0 %1046
      %v1048 = vsel %vm429, %v817, 0.0
      %v1049 = vadd.f32 %v816, %v1048
      %1050 = vadd.xlane.f32.xlu0 %v1049
      %v1051 = vpop.xlane.xlu0 %1050
      %v1052 = vsel %vm429, %v819, 0.0
      %v1053 = vadd.f32 %v818, %v1052
      %1054 = vadd.xlane.f32.xlu0 %v1053
      %v1055 = vpop.xlane.xlu0 %1054
      %v1056 = vsel %vm429, %v821, 0.0
      %v1057 = vadd.f32 %v820, %v1056
      %1058 = vadd.xlane.f32.xlu0 %v1057
      %v1059 = vpop.xlane.xlu0 %1058
      %v1060 = vsel %vm429, %v823, 0.0
      %v1061 = vadd.f32 %v822, %v1060
      %1062 = vadd.xlane.f32.xlu0 %v1061
      %v1063 = vpop.xlane.xlu0 %1062
      %v1064 = vsel %vm429, %v825, 0.0
      %v1065 = vadd.f32 %v824, %v1064
      %1066 = vadd.xlane.f32.xlu0 %v1065
      %v1067 = vpop.xlane.xlu0 %1066
      %v1068 = vsel %vm429, %v827, 0.0
      %v1069 = vadd.f32 %v826, %v1068
      %1070 = vadd.xlane.f32.xlu0 %v1069
      %v1071 = vpop.xlane.xlu0 %1070
      %v1072 = vsel %vm429, %v829, 0.0
      %v1073 = vadd.f32 %v828, %v1072
      %1074 = vadd.xlane.f32.xlu0 %v1073
      %v1075 = vpop.xlane.xlu0 %1074
      %v1076 = vsel %vm429, %v831, 0.0
      %v1077 = vadd.f32 %v830, %v1076
      %1078 = vadd.xlane.f32.xlu0 %v1077
      %v1079 = vpop.xlane.xlu0 %1078
      %v1080 = vsel %vm429, %v833, 0.0
      %v1081 = vadd.f32 %v832, %v1080
      %1082 = vadd.xlane.f32.xlu0 %v1081
      %v1083 = vpop.xlane.xlu0 %1082
      %v1084 = vsel %vm429, %v835, 0.0
      %v1085 = vadd.f32 %v834, %v1084
      %1086 = vadd.xlane.f32.xlu0 %v1085
      %v1087 = vpop.xlane.xlu0 %1086
      %v1088 = vsel %vm429, %v837, 0.0
      %v1089 = vadd.f32 %v836, %v1088
      %1090 = vadd.xlane.f32.xlu0 %v1089
      %v1091 = vpop.xlane.xlu0 %1090
      %v1092 = vsel %vm429, %v839, 0.0
      %v1093 = vadd.f32 %v838, %v1092
      %1094 = vadd.xlane.f32.xlu0 %v1093
      %v1095 = vpop.xlane.xlu0 %1094
      %v1096 = vsel %vm429, %v841, 0.0
      %v1097 = vadd.f32 %v840, %v1096
      %1098 = vadd.xlane.f32.xlu0 %v1097
      %v1099 = vpop.xlane.xlu0 %1098
      %v1100 = vsel %vm429, %v843, 0.0
      %v1101 = vadd.f32 %v842, %v1100
      %1102 = vadd.xlane.f32.xlu0 %v1101
      %v1103 = vpop.xlane.xlu0 %1102
      %v1104 = vsel %vm429, %v845, 0.0
      %v1105 = vadd.f32 %v844, %v1104
      %1106 = vadd.xlane.f32.xlu0 %v1105
      %v1107 = vpop.xlane.xlu0 %1106
      %v1108 = vsel %vm429, %v847, 0.0
      %v1109 = vadd.f32 %v846, %v1108
      %1110 = vadd.xlane.f32.xlu0 %v1109
      %v1111 = vpop.xlane.xlu0 %1110
      %v1112 = vsel %vm429, %v849, 0.0
      %v1113 = vadd.f32 %v848, %v1112
      %1114 = vadd.xlane.f32.xlu0 %v1113
      %v1115 = vpop.xlane.xlu0 %1114
      %v1116 = vsel %vm429, %v851, 0.0
      %v1117 = vadd.f32 %v850, %v1116
      %1118 = vadd.xlane.f32.xlu0 %v1117
      %v1119 = vpop.xlane.xlu0 %1118
      %v1120 = vsel %vm429, %v853, 0.0
      %v1121 = vadd.f32 %v852, %v1120
      %1122 = vadd.xlane.f32.xlu0 %v1121
      %v1123 = vpop.xlane.xlu0 %1122
      %v1124 = vsel %vm429, %v855, 0.0
      %v1125 = vadd.f32 %v854, %v1124
      %1126 = vadd.xlane.f32.xlu0 %v1125
      %v1127 = vpop.xlane.xlu0 %1126
      %v1128 = vsel %vm429, %v857, 0.0
      %v1129 = vadd.f32 %v856, %v1128
      %1130 = vadd.xlane.f32.xlu0 %v1129
      %v1131 = vpop.xlane.xlu0 %1130
      %v1132 = vsel %vm429, %v859, 0.0
      %v1133 = vadd.f32 %v858, %v1132
      %1134 = vadd.xlane.f32.xlu0 %v1133
      %v1135 = vpop.xlane.xlu0 %1134
      %v1136 = vsel %vm429, %v861, 0.0
      %v1137 = vadd.f32 %v860, %v1136
      %1138 = vadd.xlane.f32.xlu0 %v1137
      %v1139 = vpop.xlane.xlu0 %1138
      %v1140 = vsel %vm429, %v863, 0.0
      %v1141 = vadd.f32 %v862, %v1140
      %1142 = vadd.xlane.f32.xlu0 %v1141
      %v1143 = vpop.xlane.xlu0 %1142
      %v1144 = vsel %vm429, %v865, 0.0
      %v1145 = vadd.f32 %v864, %v1144
      %1146 = vadd.xlane.f32.xlu0 %v1145
      %v1147 = vpop.xlane.xlu0 %1146
      %v1148 = vsel %vm429, %v867, 0.0
      %v1149 = vadd.f32 %v866, %v1148
      %1150 = vadd.xlane.f32.xlu0 %v1149
      %v1151 = vpop.xlane.xlu0 %1150
      %v1152 = vsel %vm429, %v869, 0.0
      %v1153 = vadd.f32 %v868, %v1152
      %1154 = vadd.xlane.f32.xlu0 %v1153
      %v1155 = vpop.xlane.xlu0 %1154
      %v1156 = vsel %vm429, %v871, 0.0
      %v1157 = vadd.f32 %v870, %v1156
      %1158 = vadd.xlane.f32.xlu0 %v1157
      %v1159 = vpop.xlane.xlu0 %1158
      %v1160 = vsel %vm429, %v873, 0.0
      %v1161 = vadd.f32 %v872, %v1160
      %1162 = vadd.xlane.f32.xlu0 %v1161
      %v1163 = vpop.xlane.xlu0 %1162
      %v1164 = vsel %vm429, %v875, 0.0
      %v1165 = vadd.f32 %v874, %v1164
      %1166 = vadd.xlane.f32.xlu0 %v1165
      %v1167 = vpop.xlane.xlu0 %1166
      %v1168 = vsel %vm429, %v877, 0.0
      %v1169 = vadd.f32 %v876, %v1168
      %1170 = vadd.xlane.f32.xlu0 %v1169
      %v1171 = vpop.xlane.xlu0 %1170
      %v1172 = vsel %vm429, %v879, 0.0
      %v1173 = vadd.f32 %v878, %v1172
      %1174 = vadd.xlane.f32.xlu0 %v1173
      %v1175 = vpop.xlane.xlu0 %1174
      %v1176 = vsel %vm429, %v881, 0.0
      %v1177 = vadd.f32 %v880, %v1176
      %1178 = vadd.xlane.f32.xlu0 %v1177
      %v1179 = vpop.xlane.xlu0 %1178
      %v1180 = vsel %vm429, %v883, 0.0
      %v1181 = vadd.f32 %v882, %v1180
      %1182 = vadd.xlane.f32.xlu0 %v1181
      %v1183 = vpop.xlane.xlu0 %1182
      %v1184 = vsel %vm429, %v885, 0.0
      %v1185 = vadd.f32 %v884, %v1184
      %1186 = vadd.xlane.f32.xlu0 %v1185
      %v1187 = vpop.xlane.xlu0 %1186
      %v1188 = vsel %vm429, %v887, 0.0
      %v1189 = vadd.f32 %v886, %v1188
      %1190 = vadd.xlane.f32.xlu0 %v1189
      %v1191 = vpop.xlane.xlu0 %1190
      %v1192 = vsel %vm429, %v889, 0.0
      %v1193 = vadd.f32 %v888, %v1192
      %1194 = vadd.xlane.f32.xlu0 %v1193
      %v1195 = vpop.xlane.xlu0 %1194
      %v1196 = vsel %vm429, %v891, 0.0
      %v1197 = vadd.f32 %v890, %v1196
      %1198 = vadd.xlane.f32.xlu0 %v1197
      %v1199 = vpop.xlane.xlu0 %1198
      %v1200 = vmul.f32 %v433, 0.0051020407
      %v1201 = vmul.f32 %v437, 0.0051020407
      %v1202 = vmul.f32 %v441, 0.0051020407
      %v1203 = vmul.f32 %v445, 0.0051020407
      %v1204 = vmul.f32 %v449, 0.0051020407
      %v1205 = vmul.f32 %v453, 0.0051020407
      %v1206 = vmul.f32 %v457, 0.0051020407
      %v1207 = vmul.f32 %v461, 0.0051020407
      %v1208 = vmul.f32 %v465, 0.0051020407
      %v1209 = vmul.f32 %v469, 0.0051020407
      %v1210 = vmul.f32 %v473, 0.0051020407
      %v1211 = vmul.f32 %v477, 0.0051020407
      %v1212 = vmul.f32 %v481, 0.0051020407
      %v1213 = vmul.f32 %v485, 0.0051020407
      %v1214 = vmul.f32 %v489, 0.0051020407
      %v1215 = vmul.f32 %v493, 0.0051020407
      %v1216 = vmul.f32 %v497, 0.0051020407
      %v1217 = vmul.f32 %v501, 0.0051020407
      %v1218 = vmul.f32 %v505, 0.0051020407
      %v1219 = vmul.f32 %v509, 0.0051020407
      %v1220 = vmul.f32 %v513, 0.0051020407
      %v1221 = vmul.f32 %v517, 0.0051020407
      %v1222 = vmul.f32 %v521, 0.0051020407
      %v1223 = vmul.f32 %v525, 0.0051020407
      %v1224 = vmul.f32 %v529, 0.0051020407
      %v1225 = vmul.f32 %v533, 0.0051020407
      %v1226 = vmul.f32 %v537, 0.0051020407
      %v1227 = vmul.f32 %v541, 0.0051020407
      %v1228 = vmul.f32 %v545, 0.0051020407
      %v1229 = vmul.f32 %v549, 0.0051020407
      %v1230 = vmul.f32 %v553, 0.0051020407
      %v1231 = vmul.f32 %v557, 0.0051020407
      %v1232 = vmul.f32 %v561, 0.0051020407
      %v1233 = vmul.f32 %v565, 0.0051020407
      %v1234 = vmul.f32 %v569, 0.0051020407
      %v1235 = vmul.f32 %v573, 0.0051020407
      %v1236 = vmul.f32 %v577, 0.0051020407
      %v1237 = vmul.f32 %v581, 0.0051020407
      %v1238 = vmul.f32 %v585, 0.0051020407
      %v1239 = vmul.f32 %v589, 0.0051020407
      %v1240 = vmul.f32 %v593, 0.0051020407
      %v1241 = vmul.f32 %v597, 0.0051020407
      %v1242 = vmul.f32 %v601, 0.0051020407
      %v1243 = vmul.f32 %v605, 0.0051020407
      %v1244 = vmul.f32 %v609, 0.0051020407
      %v1245 = vmul.f32 %v613, 0.0051020407
      %v1246 = vmul.f32 %v617, 0.0051020407
      %v1247 = vmul.f32 %v621, 0.0051020407
      %v1248 = vmul.f32 %v625, 0.0051020407
      %v1249 = vmul.f32 %v629, 0.0051020407
      %v1250 = vmul.f32 %v633, 0.0051020407
      %v1251 = vmul.f32 %v637, 0.0051020407
      %v1252 = vmul.f32 %v641, 0.0051020407
      %v1253 = vmul.f32 %v645, 0.0051020407
      %v1254 = vmul.f32 %v649, 0.0051020407
      %v1255 = vmul.f32 %v653, 0.0051020407
      %v1256 = vmul.f32 %v657, 0.0051020407
      %v1257 = vmul.f32 %v661, 0.0051020407
      %v1258 = vmul.f32 %v665, 0.0051020407
      %v1259 = vmul.f32 %v669, 0.0051020407
      %v1260 = vmul.f32 %v673, 0.0051020407
      %v1261 = vmul.f32 %v677, 0.0051020407
      %v1262 = vmul.f32 %v681, 0.0051020407
      %v1263 = vmul.f32 %v685, 0.0051020407
      %v1264 = vmul.f32 %v689, 0.0051020407
      %v1265 = vmul.f32 %v693, 0.0051020407
      %v1266 = vmul.f32 %v697, 0.0051020407
      %v1267 = vmul.f32 %v701, 0.0051020407
      %v1268 = vmul.f32 %v705, 0.0051020407
      %v1269 = vmul.f32 %v709, 0.0051020407
      %v1270 = vmul.f32 %v713, 0.0051020407
      %v1271 = vmul.f32 %v717, 0.0051020407
      %v1272 = vmul.f32 %v721, 0.0051020407
      %v1273 = vmul.f32 %v725, 0.0051020407
      %v1274 = vmul.f32 %v729, 0.0051020407
      %v1275 = vmul.f32 %v733, 0.0051020407
      %v1276 = vmul.f32 %v737, 0.0051020407
      %v1277 = vmul.f32 %v895, 0.0051020407
      %v1278 = vmul.f32 %v899, 0.0051020407
      %v1279 = vmul.f32 %v903, 0.0051020407
      %v1280 = vmul.f32 %v907, 0.0051020407
      %v1281 = vmul.f32 %v911, 0.0051020407
      %v1282 = vmul.f32 %v915, 0.0051020407
      %v1283 = vmul.f32 %v919, 0.0051020407
      %v1284 = vmul.f32 %v923, 0.0051020407
      %v1285 = vmul.f32 %v927, 0.0051020407
      %v1286 = vmul.f32 %v931, 0.0051020407
      %v1287 = vmul.f32 %v935, 0.0051020407
      %v1288 = vmul.f32 %v939, 0.0051020407
      %v1289 = vmul.f32 %v943, 0.0051020407
      %v1290 = vmul.f32 %v947, 0.0051020407
      %v1291 = vmul.f32 %v951, 0.0051020407
      %v1292 = vmul.f32 %v955, 0.0051020407
      %v1293 = vmul.f32 %v959, 0.0051020407
      %v1294 = vmul.f32 %v963, 0.0051020407
      %v1295 = vmul.f32 %v967, 0.0051020407
      %v1296 = vmul.f32 %v971, 0.0051020407
      %v1297 = vmul.f32 %v975, 0.0051020407
      %v1298 = vmul.f32 %v979, 0.0051020407
      %v1299 = vmul.f32 %v983, 0.0051020407
      %v1300 = vmul.f32 %v987, 0.0051020407
      %v1301 = vmul.f32 %v991, 0.0051020407
      %v1302 = vmul.f32 %v995, 0.0051020407
      %v1303 = vmul.f32 %v999, 0.0051020407
      %v1304 = vmul.f32 %v1003, 0.0051020407
      %v1305 = vmul.f32 %v1007, 0.0051020407
      %v1306 = vmul.f32 %v1011, 0.0051020407
      %v1307 = vmul.f32 %v1015, 0.0051020407
      %v1308 = vmul.f32 %v1019, 0.0051020407
      %v1309 = vmul.f32 %v1023, 0.0051020407
      %v1310 = vmul.f32 %v1027, 0.0051020407
      %v1311 = vmul.f32 %v1031, 0.0051020407
      %v1312 = vmul.f32 %v1035, 0.0051020407
      %v1313 = vmul.f32 %v1039, 0.0051020407
      %v1314 = vmul.f32 %v1043, 0.0051020407
      %v1315 = vmul.f32 %v1047, 0.0051020407
      %v1316 = vmul.f32 %v1051, 0.0051020407
      %v1317 = vmul.f32 %v1055, 0.0051020407
      %v1318 = vmul.f32 %v1059, 0.0051020407
      %v1319 = vmul.f32 %v1063, 0.0051020407
      %v1320 = vmul.f32 %v1067, 0.0051020407
      %v1321 = vmul.f32 %v1071, 0.0051020407
      %v1322 = vmul.f32 %v1075, 0.0051020407
      %v1323 = vmul.f32 %v1079, 0.0051020407
      %v1324 = vmul.f32 %v1083, 0.0051020407
      %v1325 = vmul.f32 %v1087, 0.0051020407
      %v1326 = vmul.f32 %v1091, 0.0051020407
      %v1327 = vmul.f32 %v1095, 0.0051020407
      %v1328 = vmul.f32 %v1099, 0.0051020407
      %v1329 = vmul.f32 %v1103, 0.0051020407
      %v1330 = vmul.f32 %v1107, 0.0051020407
      %v1331 = vmul.f32 %v1111, 0.0051020407
      %v1332 = vmul.f32 %v1115, 0.0051020407
      %v1333 = vmul.f32 %v1119, 0.0051020407
      %v1334 = vmul.f32 %v1123, 0.0051020407
      %v1335 = vmul.f32 %v1127, 0.0051020407
      %v1336 = vmul.f32 %v1131, 0.0051020407
      %v1337 = vmul.f32 %v1135, 0.0051020407
      %v1338 = vmul.f32 %v1139, 0.0051020407
      %v1339 = vmul.f32 %v1143, 0.0051020407
      %v1340 = vmul.f32 %v1147, 0.0051020407
      %v1341 = vmul.f32 %v1151, 0.0051020407
      %v1342 = vmul.f32 %v1155, 0.0051020407
      %v1343 = vmul.f32 %v1159, 0.0051020407
      %v1344 = vmul.f32 %v1163, 0.0051020407
      %v1345 = vmul.f32 %v1167, 0.0051020407
      %v1346 = vmul.f32 %v1171, 0.0051020407
      %v1347 = vmul.f32 %v1175, 0.0051020407
      %v1348 = vmul.f32 %v1179, 0.0051020407
      %v1349 = vmul.f32 %v1183, 0.0051020407
      %v1350 = vmul.f32 %v1187, 0.0051020407
      %v1351 = vmul.f32 %v1191, 0.0051020407
      %v1352 = vmul.f32 %v1195, 0.0051020407
      %v1353 = vmul.f32 %v1199, 0.0051020407
      %v1354 = vmul.f32 %v1200, %v1200
      %v1355 = vmul.f32 %v1201, %v1201
      %v1356 = vmul.f32 %v1202, %v1202
      %v1357 = vmul.f32 %v1203, %v1203
      %v1358 = vmul.f32 %v1204, %v1204
      %v1359 = vmul.f32 %v1205, %v1205
      %v1360 = vmul.f32 %v1206, %v1206
      %v1361 = vmul.f32 %v1207, %v1207
      %v1362 = vmul.f32 %v1208, %v1208
      %v1363 = vmul.f32 %v1209, %v1209
      %v1364 = vmul.f32 %v1210, %v1210
      %v1365 = vmul.f32 %v1211, %v1211
      %v1366 = vmul.f32 %v1212, %v1212
      %v1367 = vmul.f32 %v1213, %v1213
      %v1368 = vmul.f32 %v1214, %v1214
      %v1369 = vmul.f32 %v1215, %v1215
      %v1370 = vmul.f32 %v1216, %v1216
      %v1371 = vmul.f32 %v1217, %v1217
      %v1372 = vmul.f32 %v1218, %v1218
      %v1373 = vmul.f32 %v1219, %v1219
      %v1374 = vmul.f32 %v1220, %v1220
      %v1375 = vmul.f32 %v1221, %v1221
      %v1376 = vmul.f32 %v1222, %v1222
      %v1377 = vmul.f32 %v1223, %v1223
      %v1378 = vmul.f32 %v1224, %v1224
      %v1379 = vmul.f32 %v1225, %v1225
      %v1380 = vmul.f32 %v1226, %v1226
      %v1381 = vmul.f32 %v1227, %v1227
      %v1382 = vmul.f32 %v1228, %v1228
      %v1383 = vmul.f32 %v1229, %v1229
      %v1384 = vmul.f32 %v1230, %v1230
      %v1385 = vmul.f32 %v1231, %v1231
      %v1386 = vmul.f32 %v1232, %v1232
      %v1387 = vmul.f32 %v1233, %v1233
      %v1388 = vmul.f32 %v1234, %v1234
      %v1389 = vmul.f32 %v1235, %v1235
      %v1390 = vmul.f32 %v1236, %v1236
      %v1391 = vmul.f32 %v1237, %v1237
      %v1392 = vmul.f32 %v1238, %v1238
      %v1393 = vmul.f32 %v1239, %v1239
      %v1394 = vmul.f32 %v1240, %v1240
      %v1395 = vmul.f32 %v1241, %v1241
      %v1396 = vmul.f32 %v1242, %v1242
      %v1397 = vmul.f32 %v1243, %v1243
      %v1398 = vmul.f32 %v1244, %v1244
      %v1399 = vmul.f32 %v1245, %v1245
      %v1400 = vmul.f32 %v1246, %v1246
      %v1401 = vmul.f32 %v1247, %v1247
      %v1402 = vmul.f32 %v1248, %v1248
      %v1403 = vmul.f32 %v1249, %v1249
      %v1404 = vmul.f32 %v1250, %v1250
      %v1405 = vmul.f32 %v1251, %v1251
      %v1406 = vmul.f32 %v1252, %v1252
      %v1407 = vmul.f32 %v1253, %v1253
      %v1408 = vmul.f32 %v1254, %v1254
      %v1409 = vmul.f32 %v1255, %v1255
      %v1410 = vmul.f32 %v1256, %v1256
      %v1411 = vmul.f32 %v1257, %v1257
      %v1412 = vmul.f32 %v1258, %v1258
      %v1413 = vmul.f32 %v1259, %v1259
      %v1414 = vmul.f32 %v1260, %v1260
      %v1415 = vmul.f32 %v1261, %v1261
      %v1416 = vmul.f32 %v1262, %v1262
      %v1417 = vmul.f32 %v1263, %v1263
      %v1418 = vmul.f32 %v1264, %v1264
      %v1419 = vmul.f32 %v1265, %v1265
      %v1420 = vmul.f32 %v1266, %v1266
      %v1421 = vmul.f32 %v1267, %v1267
      %v1422 = vmul.f32 %v1268, %v1268
      %v1423 = vmul.f32 %v1269, %v1269
      %v1424 = vmul.f32 %v1270, %v1270
      %v1425 = vmul.f32 %v1271, %v1271
      %v1426 = vmul.f32 %v1272, %v1272
      %v1427 = vmul.f32 %v1273, %v1273
      %v1428 = vmul.f32 %v1274, %v1274
      %v1429 = vmul.f32 %v1275, %v1275
      %v1430 = vmul.f32 %v1276, %v1276
      %v1431 = vsub.f32 %v1277, %v1354
      %v1432 = vsub.f32 %v1278, %v1355
      %v1433 = vsub.f32 %v1279, %v1356
      %v1434 = vsub.f32 %v1280, %v1357
      %v1435 = vsub.f32 %v1281, %v1358
      %v1436 = vsub.f32 %v1282, %v1359
      %v1437 = vsub.f32 %v1283, %v1360
      %v1438 = vsub.f32 %v1284, %v1361
      %v1439 = vsub.f32 %v1285, %v1362
      %v1440 = vsub.f32 %v1286, %v1363
      %v1441 = vsub.f32 %v1287, %v1364
      %v1442 = vsub.f32 %v1288, %v1365
      %v1443 = vsub.f32 %v1289, %v1366
      %v1444 = vsub.f32 %v1290, %v1367
      %v1445 = vsub.f32 %v1291, %v1368
      %v1446 = vsub.f32 %v1292, %v1369
      %v1447 = vsub.f32 %v1293, %v1370
      %v1448 = vsub.f32 %v1294, %v1371
      %v1449 = vsub.f32 %v1295, %v1372
      %v1450 = vsub.f32 %v1296, %v1373
      %v1451 = vsub.f32 %v1297, %v1374
      %v1452 = vsub.f32 %v1298, %v1375
      %v1453 = vsub.f32 %v1299, %v1376
      %v1454 = vsub.f32 %v1300, %v1377
      %v1455 = vsub.f32 %v1301, %v1378
      %v1456 = vsub.f32 %v1302, %v1379
      %v1457 = vsub.f32 %v1303, %v1380
      %v1458 = vsub.f32 %v1304, %v1381
      %v1459 = vsub.f32 %v1305, %v1382
      %v1460 = vsub.f32 %v1306, %v1383
      %v1461 = vsub.f32 %v1307, %v1384
      %v1462 = vsub.f32 %v1308, %v1385
      %v1463 = vsub.f32 %v1309, %v1386
      %v1464 = vsub.f32 %v1310, %v1387
      %v1465 = vsub.f32 %v1311, %v1388
      %v1466 = vsub.f32 %v1312, %v1389
      %v1467 = vsub.f32 %v1313, %v1390
      %v1468 = vsub.f32 %v1314, %v1391
      %v1469 = vsub.f32 %v1315, %v1392
      %v1470 = vsub.f32 %v1316, %v1393
      %v1471 = vsub.f32 %v1317, %v1394
      %v1472 = vsub.f32 %v1318, %v1395
      %v1473 = vsub.f32 %v1319, %v1396
      %v1474 = vsub.f32 %v1320, %v1397
      %v1475 = vsub.f32 %v1321, %v1398
      %v1476 = vsub.f32 %v1322, %v1399
      %v1477 = vsub.f32 %v1323, %v1400
      %v1478 = vsub.f32 %v1324, %v1401
      %v1479 = vsub.f32 %v1325, %v1402
      %v1480 = vsub.f32 %v1326, %v1403
      %v1481 = vsub.f32 %v1327, %v1404
      %v1482 = vsub.f32 %v1328, %v1405
      %v1483 = vsub.f32 %v1329, %v1406
      %v1484 = vsub.f32 %v1330, %v1407
      %v1485 = vsub.f32 %v1331, %v1408
      %v1486 = vsub.f32 %v1332, %v1409
      %v1487 = vsub.f32 %v1333, %v1410
      %v1488 = vsub.f32 %v1334, %v1411
      %v1489 = vsub.f32 %v1335, %v1412
      %v1490 = vsub.f32 %v1336, %v1413
      %v1491 = vsub.f32 %v1337, %v1414
      %v1492 = vsub.f32 %v1338, %v1415
      %v1493 = vsub.f32 %v1339, %v1416
      %v1494 = vsub.f32 %v1340, %v1417
      %v1495 = vsub.f32 %v1341, %v1418
      %v1496 = vsub.f32 %v1342, %v1419
      %v1497 = vsub.f32 %v1343, %v1420
      %v1498 = vsub.f32 %v1344, %v1421
      %v1499 = vsub.f32 %v1345, %v1422
      %v1500 = vsub.f32 %v1346, %v1423
      %v1501 = vsub.f32 %v1347, %v1424
      %v1502 = vsub.f32 %v1348, %v1425
      %v1503 = vsub.f32 %v1349, %v1426
      %v1504 = vsub.f32 %v1350, %v1427
      %v1505 = vsub.f32 %v1351, %v1428
      %v1506 = vsub.f32 %v1352, %v1429
      %v1507 = vsub.f32 %v1353, %v1430
      %v1508 = vmax.f32 %v1431, 0.0
      %v1509 = vmax.f32 %v1432, 0.0
      %v1510 = vmax.f32 %v1433, 0.0
      %v1511 = vmax.f32 %v1434, 0.0
      %v1512 = vmax.f32 %v1435, 0.0
      %v1513 = vmax.f32 %v1436, 0.0
      %v1514 = vmax.f32 %v1437, 0.0
      %v1515 = vmax.f32 %v1438, 0.0
      %v1516 = vmax.f32 %v1439, 0.0
      %v1517 = vmax.f32 %v1440, 0.0
      %v1518 = vmax.f32 %v1441, 0.0
      %v1519 = vmax.f32 %v1442, 0.0
      %v1520 = vmax.f32 %v1443, 0.0
      %v1521 = vmax.f32 %v1444, 0.0
      %v1522 = vmax.f32 %v1445, 0.0
      %v1523 = vmax.f32 %v1446, 0.0
      %v1524 = vmax.f32 %v1447, 0.0
      %v1525 = vmax.f32 %v1448, 0.0
      %v1526 = vmax.f32 %v1449, 0.0
      %v1527 = vmax.f32 %v1450, 0.0
      %v1528 = vmax.f32 %v1451, 0.0
      %v1529 = vmax.f32 %v1452, 0.0
      %v1530 = vmax.f32 %v1453, 0.0
      %v1531 = vmax.f32 %v1454, 0.0
      %v1532 = vmax.f32 %v1455, 0.0
      %v1533 = vmax.f32 %v1456, 0.0
      %v1534 = vmax.f32 %v1457, 0.0
      %v1535 = vmax.f32 %v1458, 0.0
      %v1536 = vmax.f32 %v1459, 0.0
      %v1537 = vmax.f32 %v1460, 0.0
      %v1538 = vmax.f32 %v1461, 0.0
      %v1539 = vmax.f32 %v1462, 0.0
      %v1540 = vmax.f32 %v1463, 0.0
      %v1541 = vmax.f32 %v1464, 0.0
      %v1542 = vmax.f32 %v1465, 0.0
      %v1543 = vmax.f32 %v1466, 0.0
      %v1544 = vmax.f32 %v1467, 0.0
      %v1545 = vmax.f32 %v1468, 0.0
      %v1546 = vmax.f32 %v1469, 0.0
      %v1547 = vmax.f32 %v1470, 0.0
      %v1548 = vmax.f32 %v1471, 0.0
      %v1549 = vmax.f32 %v1472, 0.0
      %v1550 = vmax.f32 %v1473, 0.0
      %v1551 = vmax.f32 %v1474, 0.0
      %v1552 = vmax.f32 %v1475, 0.0
      %v1553 = vmax.f32 %v1476, 0.0
      %v1554 = vmax.f32 %v1477, 0.0
      %v1555 = vmax.f32 %v1478, 0.0
      %v1556 = vmax.f32 %v1479, 0.0
      %v1557 = vmax.f32 %v1480, 0.0
      %v1558 = vmax.f32 %v1481, 0.0
      %v1559 = vmax.f32 %v1482, 0.0
      %v1560 = vmax.f32 %v1483, 0.0
      %v1561 = vmax.f32 %v1484, 0.0
      %v1562 = vmax.f32 %v1485, 0.0
      %v1563 = vmax.f32 %v1486, 0.0
      %v1564 = vmax.f32 %v1487, 0.0
      %v1565 = vmax.f32 %v1488, 0.0
      %v1566 = vmax.f32 %v1489, 0.0
      %v1567 = vmax.f32 %v1490, 0.0
      %v1568 = vmax.f32 %v1491, 0.0
      %v1569 = vmax.f32 %v1492, 0.0
      %v1570 = vmax.f32 %v1493, 0.0
      %v1571 = vmax.f32 %v1494, 0.0
      %v1572 = vmax.f32 %v1495, 0.0
      %v1573 = vmax.f32 %v1496, 0.0
      %v1574 = vmax.f32 %v1497, 0.0
      %v1575 = vmax.f32 %v1498, 0.0
      %v1576 = vmax.f32 %v1499, 0.0
      %v1577 = vmax.f32 %v1500, 0.0
      %v1578 = vmax.f32 %v1501, 0.0
      %v1579 = vmax.f32 %v1502, 0.0
      %v1580 = vmax.f32 %v1503, 0.0
      %v1581 = vmax.f32 %v1504, 0.0
      %v1582 = vmax.f32 %v1505, 0.0
      %v1583 = vmax.f32 %v1506, 0.0
      %v1584 = vmax.f32 %v1507, 0.0
      %v1585 = vadd.f32 %v1508, 1e-05
      %v1586 = vadd.f32 %v1509, 1e-05
      %v1587 = vadd.f32 %v1510, 1e-05
      %v1588 = vadd.f32 %v1511, 1e-05
      %v1589 = vadd.f32 %v1512, 1e-05
      %v1590 = vadd.f32 %v1513, 1e-05
      %v1591 = vadd.f32 %v1514, 1e-05
      %v1592 = vadd.f32 %v1515, 1e-05
      %v1593 = vadd.f32 %v1516, 1e-05
      %v1594 = vadd.f32 %v1517, 1e-05
      %v1595 = vadd.f32 %v1518, 1e-05
      %v1596 = vadd.f32 %v1519, 1e-05
      %v1597 = vadd.f32 %v1520, 1e-05
      %v1598 = vadd.f32 %v1521, 1e-05
      %v1599 = vadd.f32 %v1522, 1e-05
      %v1600 = vadd.f32 %v1523, 1e-05
      %v1601 = vadd.f32 %v1524, 1e-05
      %v1602 = vadd.f32 %v1525, 1e-05
      %v1603 = vadd.f32 %v1526, 1e-05
      %v1604 = vadd.f32 %v1527, 1e-05
      %v1605 = vadd.f32 %v1528, 1e-05
      %v1606 = vadd.f32 %v1529, 1e-05
      %v1607 = vadd.f32 %v1530, 1e-05
      %v1608 = vadd.f32 %v1531, 1e-05
      %v1609 = vadd.f32 %v1532, 1e-05
      %v1610 = vadd.f32 %v1533, 1e-05
      %v1611 = vadd.f32 %v1534, 1e-05
      %v1612 = vadd.f32 %v1535, 1e-05
      %v1613 = vadd.f32 %v1536, 1e-05
      %v1614 = vadd.f32 %v1537, 1e-05
      %v1615 = vadd.f32 %v1538, 1e-05
      %v1616 = vadd.f32 %v1539, 1e-05
      %v1617 = vadd.f32 %v1540, 1e-05
      %v1618 = vadd.f32 %v1541, 1e-05
      %v1619 = vadd.f32 %v1542, 1e-05
      %v1620 = vadd.f32 %v1543, 1e-05
      %v1621 = vadd.f32 %v1544, 1e-05
      %v1622 = vadd.f32 %v1545, 1e-05
      %v1623 = vadd.f32 %v1546, 1e-05
      %v1624 = vadd.f32 %v1547, 1e-05
      %v1625 = vadd.f32 %v1548, 1e-05
      %v1626 = vadd.f32 %v1549, 1e-05
      %v1627 = vadd.f32 %v1550, 1e-05
      %v1628 = vadd.f32 %v1551, 1e-05
      %v1629 = vadd.f32 %v1552, 1e-05
      %v1630 = vadd.f32 %v1553, 1e-05
      %v1631 = vadd.f32 %v1554, 1e-05
      %v1632 = vadd.f32 %v1555, 1e-05
      %v1633 = vadd.f32 %v1556, 1e-05
      %v1634 = vadd.f32 %v1557, 1e-05
      %v1635 = vadd.f32 %v1558, 1e-05
      %v1636 = vadd.f32 %v1559, 1e-05
      %v1637 = vadd.f32 %v1560, 1e-05
      %v1638 = vadd.f32 %v1561, 1e-05
      %v1639 = vadd.f32 %v1562, 1e-05
      %v1640 = vadd.f32 %v1563, 1e-05
      %v1641 = vadd.f32 %v1564, 1e-05
      %v1642 = vadd.f32 %v1565, 1e-05
      %v1643 = vadd.f32 %v1566, 1e-05
      %v1644 = vadd.f32 %v1567, 1e-05
      %v1645 = vadd.f32 %v1568, 1e-05
      %v1646 = vadd.f32 %v1569, 1e-05
      %v1647 = vadd.f32 %v1570, 1e-05
      %v1648 = vadd.f32 %v1571, 1e-05
      %v1649 = vadd.f32 %v1572, 1e-05
      %v1650 = vadd.f32 %v1573, 1e-05
      %v1651 = vadd.f32 %v1574, 1e-05
      %v1652 = vadd.f32 %v1575, 1e-05
      %v1653 = vadd.f32 %v1576, 1e-05
      %v1654 = vadd.f32 %v1577, 1e-05
      %v1655 = vadd.f32 %v1578, 1e-05
      %v1656 = vadd.f32 %v1579, 1e-05
      %v1657 = vadd.f32 %v1580, 1e-05
      %v1658 = vadd.f32 %v1581, 1e-05
      %v1659 = vadd.f32 %v1582, 1e-05
      %v1660 = vadd.f32 %v1583, 1e-05
      %v1661 = vadd.f32 %v1584, 1e-05
      %v1662 = vrsqrt.pop %v1585
      %v1663 = vmul.f32 %v1662, %v1585
      %v1664 = vmul.f32 %v1663, %v1662
      %v1665 = vmul.f32 0.5, %v1664
      %v1666 = vsub.f32 1.5, %v1665
      %v1667 = vmul.f32 %v1662, %v1666
      %vm1668 = vweird.f32 %v1585
      %vm1669 = vweird.f32 %v1662
      %vm1670 = vmor %vm1668, %vm1669
      %v1671 = vsel %vm1670, %v1662, %v1667
      %v1672 = vrsqrt.pop %v1586
      %v1673 = vmul.f32 %v1672, %v1586
      %v1674 = vmul.f32 %v1673, %v1672
      %v1675 = vmul.f32 0.5, %v1674
      %v1676 = vsub.f32 1.5, %v1675
      %v1677 = vmul.f32 %v1672, %v1676
      %vm1678 = vweird.f32 %v1586
      %vm1679 = vweird.f32 %v1672
      %vm1680 = vmor %vm1678, %vm1679
      %v1681 = vsel %vm1680, %v1672, %v1677
      %v1682 = vrsqrt.pop %v1587
      %v1683 = vmul.f32 %v1682, %v1587
      %v1684 = vmul.f32 %v1683, %v1682
      %v1685 = vmul.f32 0.5, %v1684
      %v1686 = vsub.f32 1.5, %v1685
      %v1687 = vmul.f32 %v1682, %v1686
      %vm1688 = vweird.f32 %v1587
      %vm1689 = vweird.f32 %v1682
      %vm1690 = vmor %vm1688, %vm1689
      %v1691 = vsel %vm1690, %v1682, %v1687
      %v1692 = vrsqrt.pop %v1588
      %v1693 = vmul.f32 %v1692, %v1588
      %v1694 = vmul.f32 %v1693, %v1692
      %v1695 = vmul.f32 0.5, %v1694
      %v1696 = vsub.f32 1.5, %v1695
      %v1697 = vmul.f32 %v1692, %v1696
      %vm1698 = vweird.f32 %v1588
      %vm1699 = vweird.f32 %v1692
      %vm1700 = vmor %vm1698, %vm1699
      %v1701 = vsel %vm1700, %v1692, %v1697
      %v1702 = vrsqrt.pop %v1589
      %v1703 = vmul.f32 %v1702, %v1589
      %v1704 = vmul.f32 %v1703, %v1702
      %v1705 = vmul.f32 0.5, %v1704
      %v1706 = vsub.f32 1.5, %v1705
      %v1707 = vmul.f32 %v1702, %v1706
      %vm1708 = vweird.f32 %v1589
      %vm1709 = vweird.f32 %v1702
      %vm1710 = vmor %vm1708, %vm1709
      %v1711 = vsel %vm1710, %v1702, %v1707
      %v1712 = vrsqrt.pop %v1590
      %v1713 = vmul.f32 %v1712, %v1590
      %v1714 = vmul.f32 %v1713, %v1712
      %v1715 = vmul.f32 0.5, %v1714
      %v1716 = vsub.f32 1.5, %v1715
      %v1717 = vmul.f32 %v1712, %v1716
      %vm1718 = vweird.f32 %v1590
      %vm1719 = vweird.f32 %v1712
      %vm1720 = vmor %vm1718, %vm1719
      %v1721 = vsel %vm1720, %v1712, %v1717
      %v1722 = vrsqrt.pop %v1591
      %v1723 = vmul.f32 %v1722, %v1591
      %v1724 = vmul.f32 %v1723, %v1722
      %v1725 = vmul.f32 0.5, %v1724
      %v1726 = vsub.f32 1.5, %v1725
      %v1727 = vmul.f32 %v1722, %v1726
      %vm1728 = vweird.f32 %v1591
      %vm1729 = vweird.f32 %v1722
      %vm1730 = vmor %vm1728, %vm1729
      %v1731 = vsel %vm1730, %v1722, %v1727
      %v1732 = vrsqrt.pop %v1592
      %v1733 = vmul.f32 %v1732, %v1592
      %v1734 = vmul.f32 %v1733, %v1732
      %v1735 = vmul.f32 0.5, %v1734
      %v1736 = vsub.f32 1.5, %v1735
      %v1737 = vmul.f32 %v1732, %v1736
      %vm1738 = vweird.f32 %v1592
      %vm1739 = vweird.f32 %v1732
      %vm1740 = vmor %vm1738, %vm1739
      %v1741 = vsel %vm1740, %v1732, %v1737
      %v1742 = vrsqrt.pop %v1593
      %v1743 = vmul.f32 %v1742, %v1593
      %v1744 = vmul.f32 %v1743, %v1742
      %v1745 = vmul.f32 0.5, %v1744
      %v1746 = vsub.f32 1.5, %v1745
      %v1747 = vmul.f32 %v1742, %v1746
      %vm1748 = vweird.f32 %v1593
      %vm1749 = vweird.f32 %v1742
      %vm1750 = vmor %vm1748, %vm1749
      %v1751 = vsel %vm1750, %v1742, %v1747
      %v1752 = vrsqrt.pop %v1594
      %v1753 = vmul.f32 %v1752, %v1594
      %v1754 = vmul.f32 %v1753, %v1752
      %v1755 = vmul.f32 0.5, %v1754
      %v1756 = vsub.f32 1.5, %v1755
      %v1757 = vmul.f32 %v1752, %v1756
      %vm1758 = vweird.f32 %v1594
      %vm1759 = vweird.f32 %v1752
      %vm1760 = vmor %vm1758, %vm1759
      %v1761 = vsel %vm1760, %v1752, %v1757
      %v1762 = vrsqrt.pop %v1595
      %v1763 = vmul.f32 %v1762, %v1595
      %v1764 = vmul.f32 %v1763, %v1762
      %v1765 = vmul.f32 0.5, %v1764
      %v1766 = vsub.f32 1.5, %v1765
      %v1767 = vmul.f32 %v1762, %v1766
      %vm1768 = vweird.f32 %v1595
      %vm1769 = vweird.f32 %v1762
      %vm1770 = vmor %vm1768, %vm1769
      %v1771 = vsel %vm1770, %v1762, %v1767
      %v1772 = vrsqrt.pop %v1596
      %v1773 = vmul.f32 %v1772, %v1596
      %v1774 = vmul.f32 %v1773, %v1772
      %v1775 = vmul.f32 0.5, %v1774
      %v1776 = vsub.f32 1.5, %v1775
      %v1777 = vmul.f32 %v1772, %v1776
      %vm1778 = vweird.f32 %v1596
      %vm1779 = vweird.f32 %v1772
      %vm1780 = vmor %vm1778, %vm1779
      %v1781 = vsel %vm1780, %v1772, %v1777
      %v1782 = vrsqrt.pop %v1597
      %v1783 = vmul.f32 %v1782, %v1597
      %v1784 = vmul.f32 %v1783, %v1782
      %v1785 = vmul.f32 0.5, %v1784
      %v1786 = vsub.f32 1.5, %v1785
      %v1787 = vmul.f32 %v1782, %v1786
      %vm1788 = vweird.f32 %v1597
      %vm1789 = vweird.f32 %v1782
      %vm1790 = vmor %vm1788, %vm1789
      %v1791 = vsel %vm1790, %v1782, %v1787
      %v1792 = vrsqrt.pop %v1598
      %v1793 = vmul.f32 %v1792, %v1598
      %v1794 = vmul.f32 %v1793, %v1792
      %v1795 = vmul.f32 0.5, %v1794
      %v1796 = vsub.f32 1.5, %v1795
      %v1797 = vmul.f32 %v1792, %v1796
      %vm1798 = vweird.f32 %v1598
      %vm1799 = vweird.f32 %v1792
      %vm1800 = vmor %vm1798, %vm1799
      %v1801 = vsel %vm1800, %v1792, %v1797
      %v1802 = vrsqrt.pop %v1599
      %v1803 = vmul.f32 %v1802, %v1599
      %v1804 = vmul.f32 %v1803, %v1802
      %v1805 = vmul.f32 0.5, %v1804
      %v1806 = vsub.f32 1.5, %v1805
      %v1807 = vmul.f32 %v1802, %v1806
      %vm1808 = vweird.f32 %v1599
      %vm1809 = vweird.f32 %v1802
      %vm1810 = vmor %vm1808, %vm1809
      %v1811 = vsel %vm1810, %v1802, %v1807
      %v1812 = vrsqrt.pop %v1600
      %v1813 = vmul.f32 %v1812, %v1600
      %v1814 = vmul.f32 %v1813, %v1812
      %v1815 = vmul.f32 0.5, %v1814
      %v1816 = vsub.f32 1.5, %v1815
      %v1817 = vmul.f32 %v1812, %v1816
      %vm1818 = vweird.f32 %v1600
      %vm1819 = vweird.f32 %v1812
      %vm1820 = vmor %vm1818, %vm1819
      %v1821 = vsel %vm1820, %v1812, %v1817
      %v1822 = vrsqrt.pop %v1601
      %v1823 = vmul.f32 %v1822, %v1601
      %v1824 = vmul.f32 %v1823, %v1822
      %v1825 = vmul.f32 0.5, %v1824
      %v1826 = vsub.f32 1.5, %v1825
      %v1827 = vmul.f32 %v1822, %v1826
      %vm1828 = vweird.f32 %v1601
      %vm1829 = vweird.f32 %v1822
      %vm1830 = vmor %vm1828, %vm1829
      %v1831 = vsel %vm1830, %v1822, %v1827
      %v1832 = vrsqrt.pop %v1602
      %v1833 = vmul.f32 %v1832, %v1602
      %v1834 = vmul.f32 %v1833, %v1832
      %v1835 = vmul.f32 0.5, %v1834
      %v1836 = vsub.f32 1.5, %v1835
      %v1837 = vmul.f32 %v1832, %v1836
      %vm1838 = vweird.f32 %v1602
      %vm1839 = vweird.f32 %v1832
      %vm1840 = vmor %vm1838, %vm1839
      %v1841 = vsel %vm1840, %v1832, %v1837
      %v1842 = vrsqrt.pop %v1603
      %v1843 = vmul.f32 %v1842, %v1603
      %v1844 = vmul.f32 %v1843, %v1842
      %v1845 = vmul.f32 0.5, %v1844
      %v1846 = vsub.f32 1.5, %v1845
      %v1847 = vmul.f32 %v1842, %v1846
      %vm1848 = vweird.f32 %v1603
      %vm1849 = vweird.f32 %v1842
      %vm1850 = vmor %vm1848, %vm1849
      %v1851 = vsel %vm1850, %v1842, %v1847
      %v1852 = vrsqrt.pop %v1604
      %v1853 = vmul.f32 %v1852, %v1604
      %v1854 = vmul.f32 %v1853, %v1852
      %v1855 = vmul.f32 0.5, %v1854
      %v1856 = vsub.f32 1.5, %v1855
      %v1857 = vmul.f32 %v1852, %v1856
      %vm1858 = vweird.f32 %v1604
      %vm1859 = vweird.f32 %v1852
      %vm1860 = vmor %vm1858, %vm1859
      %v1861 = vsel %vm1860, %v1852, %v1857
      %v1862 = vrsqrt.pop %v1605
      %v1863 = vmul.f32 %v1862, %v1605
      %v1864 = vmul.f32 %v1863, %v1862
      %v1865 = vmul.f32 0.5, %v1864
      %v1866 = vsub.f32 1.5, %v1865
      %v1867 = vmul.f32 %v1862, %v1866
      %vm1868 = vweird.f32 %v1605
      %vm1869 = vweird.f32 %v1862
      %vm1870 = vmor %vm1868, %vm1869
      %v1871 = vsel %vm1870, %v1862, %v1867
      %v1872 = vrsqrt.pop %v1606
      %v1873 = vmul.f32 %v1872, %v1606
      %v1874 = vmul.f32 %v1873, %v1872
      %v1875 = vmul.f32 0.5, %v1874
      %v1876 = vsub.f32 1.5, %v1875
      %v1877 = vmul.f32 %v1872, %v1876
      %vm1878 = vweird.f32 %v1606
      %vm1879 = vweird.f32 %v1872
      %vm1880 = vmor %vm1878, %vm1879
      %v1881 = vsel %vm1880, %v1872, %v1877
      %v1882 = vrsqrt.pop %v1607
      %v1883 = vmul.f32 %v1882, %v1607
      %v1884 = vmul.f32 %v1883, %v1882
      %v1885 = vmul.f32 0.5, %v1884
      %v1886 = vsub.f32 1.5, %v1885
      %v1887 = vmul.f32 %v1882, %v1886
      %vm1888 = vweird.f32 %v1607
      %vm1889 = vweird.f32 %v1882
      %vm1890 = vmor %vm1888, %vm1889
      %v1891 = vsel %vm1890, %v1882, %v1887
      %v1892 = vrsqrt.pop %v1608
      %v1893 = vmul.f32 %v1892, %v1608
      %v1894 = vmul.f32 %v1893, %v1892
      %v1895 = vmul.f32 0.5, %v1894
      %v1896 = vsub.f32 1.5, %v1895
      %v1897 = vmul.f32 %v1892, %v1896
      %vm1898 = vweird.f32 %v1608
      %vm1899 = vweird.f32 %v1892
      %vm1900 = vmor %vm1898, %vm1899
      %v1901 = vsel %vm1900, %v1892, %v1897
      %v1902 = vrsqrt.pop %v1609
      %v1903 = vmul.f32 %v1902, %v1609
      %v1904 = vmul.f32 %v1903, %v1902
      %v1905 = vmul.f32 0.5, %v1904
      %v1906 = vsub.f32 1.5, %v1905
      %v1907 = vmul.f32 %v1902, %v1906
      %vm1908 = vweird.f32 %v1609
      %vm1909 = vweird.f32 %v1902
      %vm1910 = vmor %vm1908, %vm1909
      %v1911 = vsel %vm1910, %v1902, %v1907
      %v1912 = vrsqrt.pop %v1610
      %v1913 = vmul.f32 %v1912, %v1610
      %v1914 = vmul.f32 %v1913, %v1912
      %v1915 = vmul.f32 0.5, %v1914
      %v1916 = vsub.f32 1.5, %v1915
      %v1917 = vmul.f32 %v1912, %v1916
      %vm1918 = vweird.f32 %v1610
      %vm1919 = vweird.f32 %v1912
      %vm1920 = vmor %vm1918, %vm1919
      %v1921 = vsel %vm1920, %v1912, %v1917
      %v1922 = vrsqrt.pop %v1611
      %v1923 = vmul.f32 %v1922, %v1611
      %v1924 = vmul.f32 %v1923, %v1922
      %v1925 = vmul.f32 0.5, %v1924
      %v1926 = vsub.f32 1.5, %v1925
      %v1927 = vmul.f32 %v1922, %v1926
      %vm1928 = vweird.f32 %v1611
      %vm1929 = vweird.f32 %v1922
      %vm1930 = vmor %vm1928, %vm1929
      %v1931 = vsel %vm1930, %v1922, %v1927
      %v1932 = vrsqrt.pop %v1612
      %v1933 = vmul.f32 %v1932, %v1612
      %v1934 = vmul.f32 %v1933, %v1932
      %v1935 = vmul.f32 0.5, %v1934
      %v1936 = vsub.f32 1.5, %v1935
      %v1937 = vmul.f32 %v1932, %v1936
      %vm1938 = vweird.f32 %v1612
      %vm1939 = vweird.f32 %v1932
      %vm1940 = vmor %vm1938, %vm1939
      %v1941 = vsel %vm1940, %v1932, %v1937
      %v1942 = vrsqrt.pop %v1613
      %v1943 = vmul.f32 %v1942, %v1613
      %v1944 = vmul.f32 %v1943, %v1942
      %v1945 = vmul.f32 0.5, %v1944
      %v1946 = vsub.f32 1.5, %v1945
      %v1947 = vmul.f32 %v1942, %v1946
      %vm1948 = vweird.f32 %v1613
      %vm1949 = vweird.f32 %v1942
      %vm1950 = vmor %vm1948, %vm1949
      %v1951 = vsel %vm1950, %v1942, %v1947
      %v1952 = vrsqrt.pop %v1614
      %v1953 = vmul.f32 %v1952, %v1614
      %v1954 = vmul.f32 %v1953, %v1952
      %v1955 = vmul.f32 0.5, %v1954
      %v1956 = vsub.f32 1.5, %v1955
      %v1957 = vmul.f32 %v1952, %v1956
      %vm1958 = vweird.f32 %v1614
      %vm1959 = vweird.f32 %v1952
      %vm1960 = vmor %vm1958, %vm1959
      %v1961 = vsel %vm1960, %v1952, %v1957
      %v1962 = vrsqrt.pop %v1615
      %v1963 = vmul.f32 %v1962, %v1615
      %v1964 = vmul.f32 %v1963, %v1962
      %v1965 = vmul.f32 0.5, %v1964
      %v1966 = vsub.f32 1.5, %v1965
      %v1967 = vmul.f32 %v1962, %v1966
      %vm1968 = vweird.f32 %v1615
      %vm1969 = vweird.f32 %v1962
      %vm1970 = vmor %vm1968, %vm1969
      %v1971 = vsel %vm1970, %v1962, %v1967
      %v1972 = vrsqrt.pop %v1616
      %v1973 = vmul.f32 %v1972, %v1616
      %v1974 = vmul.f32 %v1973, %v1972
      %v1975 = vmul.f32 0.5, %v1974
      %v1976 = vsub.f32 1.5, %v1975
      %v1977 = vmul.f32 %v1972, %v1976
      %vm1978 = vweird.f32 %v1616
      %vm1979 = vweird.f32 %v1972
      %vm1980 = vmor %vm1978, %vm1979
      %v1981 = vsel %vm1980, %v1972, %v1977
      %v1982 = vrsqrt.pop %v1617
      %v1983 = vmul.f32 %v1982, %v1617
      %v1984 = vmul.f32 %v1983, %v1982
      %v1985 = vmul.f32 0.5, %v1984
      %v1986 = vsub.f32 1.5, %v1985
      %v1987 = vmul.f32 %v1982, %v1986
      %vm1988 = vweird.f32 %v1617
      %vm1989 = vweird.f32 %v1982
      %vm1990 = vmor %vm1988, %vm1989
      %v1991 = vsel %vm1990, %v1982, %v1987
      %v1992 = vrsqrt.pop %v1618
      %v1993 = vmul.f32 %v1992, %v1618
      %v1994 = vmul.f32 %v1993, %v1992
      %v1995 = vmul.f32 0.5, %v1994
      %v1996 = vsub.f32 1.5, %v1995
      %v1997 = vmul.f32 %v1992, %v1996
      %vm1998 = vweird.f32 %v1618
      %vm1999 = vweird.f32 %v1992
      %vm2000 = vmor %vm1998, %vm1999
      %v2001 = vsel %vm2000, %v1992, %v1997
      %v2002 = vrsqrt.pop %v1619
      %v2003 = vmul.f32 %v2002, %v1619
      %v2004 = vmul.f32 %v2003, %v2002
      %v2005 = vmul.f32 0.5, %v2004
      %v2006 = vsub.f32 1.5, %v2005
      %v2007 = vmul.f32 %v2002, %v2006
      %vm2008 = vweird.f32 %v1619
      %vm2009 = vweird.f32 %v2002
      %vm2010 = vmor %vm2008, %vm2009
      %v2011 = vsel %vm2010, %v2002, %v2007
      %v2012 = vrsqrt.pop %v1620
      %v2013 = vmul.f32 %v2012, %v1620
      %v2014 = vmul.f32 %v2013, %v2012
      %v2015 = vmul.f32 0.5, %v2014
      %v2016 = vsub.f32 1.5, %v2015
      %v2017 = vmul.f32 %v2012, %v2016
      %vm2018 = vweird.f32 %v1620
      %vm2019 = vweird.f32 %v2012
      %vm2020 = vmor %vm2018, %vm2019
      %v2021 = vsel %vm2020, %v2012, %v2017
      %v2022 = vrsqrt.pop %v1621
      %v2023 = vmul.f32 %v2022, %v1621
      %v2024 = vmul.f32 %v2023, %v2022
      %v2025 = vmul.f32 0.5, %v2024
      %v2026 = vsub.f32 1.5, %v2025
      %v2027 = vmul.f32 %v2022, %v2026
      %vm2028 = vweird.f32 %v1621
      %vm2029 = vweird.f32 %v2022
      %vm2030 = vmor %vm2028, %vm2029
      %v2031 = vsel %vm2030, %v2022, %v2027
      %v2032 = vrsqrt.pop %v1622
      %v2033 = vmul.f32 %v2032, %v1622
      %v2034 = vmul.f32 %v2033, %v2032
      %v2035 = vmul.f32 0.5, %v2034
      %v2036 = vsub.f32 1.5, %v2035
      %v2037 = vmul.f32 %v2032, %v2036
      %vm2038 = vweird.f32 %v1622
      %vm2039 = vweird.f32 %v2032
      %vm2040 = vmor %vm2038, %vm2039
      %v2041 = vsel %vm2040, %v2032, %v2037
      %v2042 = vrsqrt.pop %v1623
      %v2043 = vmul.f32 %v2042, %v1623
      %v2044 = vmul.f32 %v2043, %v2042
      %v2045 = vmul.f32 0.5, %v2044
      %v2046 = vsub.f32 1.5, %v2045
      %v2047 = vmul.f32 %v2042, %v2046
      %vm2048 = vweird.f32 %v1623
      %vm2049 = vweird.f32 %v2042
      %vm2050 = vmor %vm2048, %vm2049
      %v2051 = vsel %vm2050, %v2042, %v2047
      %v2052 = vrsqrt.pop %v1624
      %v2053 = vmul.f32 %v2052, %v1624
      %v2054 = vmul.f32 %v2053, %v2052
      %v2055 = vmul.f32 0.5, %v2054
      %v2056 = vsub.f32 1.5, %v2055
      %v2057 = vmul.f32 %v2052, %v2056
      %vm2058 = vweird.f32 %v1624
      %vm2059 = vweird.f32 %v2052
      %vm2060 = vmor %vm2058, %vm2059
      %v2061 = vsel %vm2060, %v2052, %v2057
      %v2062 = vrsqrt.pop %v1625
      %v2063 = vmul.f32 %v2062, %v1625
      %v2064 = vmul.f32 %v2063, %v2062
      %v2065 = vmul.f32 0.5, %v2064
      %v2066 = vsub.f32 1.5, %v2065
      %v2067 = vmul.f32 %v2062, %v2066
      %vm2068 = vweird.f32 %v1625
      %vm2069 = vweird.f32 %v2062
      %vm2070 = vmor %vm2068, %vm2069
      %v2071 = vsel %vm2070, %v2062, %v2067
      %v2072 = vrsqrt.pop %v1626
      %v2073 = vmul.f32 %v2072, %v1626
      %v2074 = vmul.f32 %v2073, %v2072
      %v2075 = vmul.f32 0.5, %v2074
      %v2076 = vsub.f32 1.5, %v2075
      %v2077 = vmul.f32 %v2072, %v2076
      %vm2078 = vweird.f32 %v1626
      %vm2079 = vweird.f32 %v2072
      %vm2080 = vmor %vm2078, %vm2079
      %v2081 = vsel %vm2080, %v2072, %v2077
      %v2082 = vrsqrt.pop %v1627
      %v2083 = vmul.f32 %v2082, %v1627
      %v2084 = vmul.f32 %v2083, %v2082
      %v2085 = vmul.f32 0.5, %v2084
      %v2086 = vsub.f32 1.5, %v2085
      %v2087 = vmul.f32 %v2082, %v2086
      %vm2088 = vweird.f32 %v1627
      %vm2089 = vweird.f32 %v2082
      %vm2090 = vmor %vm2088, %vm2089
      %v2091 = vsel %vm2090, %v2082, %v2087
      %v2092 = vrsqrt.pop %v1628
      %v2093 = vmul.f32 %v2092, %v1628
      %v2094 = vmul.f32 %v2093, %v2092
      %v2095 = vmul.f32 0.5, %v2094
      %v2096 = vsub.f32 1.5, %v2095
      %v2097 = vmul.f32 %v2092, %v2096
      %vm2098 = vweird.f32 %v1628
      %vm2099 = vweird.f32 %v2092
      %vm2100 = vmor %vm2098, %vm2099
      %v2101 = vsel %vm2100, %v2092, %v2097
      %v2102 = vrsqrt.pop %v1629
      %v2103 = vmul.f32 %v2102, %v1629
      %v2104 = vmul.f32 %v2103, %v2102
      %v2105 = vmul.f32 0.5, %v2104
      %v2106 = vsub.f32 1.5, %v2105
      %v2107 = vmul.f32 %v2102, %v2106
      %vm2108 = vweird.f32 %v1629
      %vm2109 = vweird.f32 %v2102
      %vm2110 = vmor %vm2108, %vm2109
      %v2111 = vsel %vm2110, %v2102, %v2107
      %v2112 = vrsqrt.pop %v1630
      %v2113 = vmul.f32 %v2112, %v1630
      %v2114 = vmul.f32 %v2113, %v2112
      %v2115 = vmul.f32 0.5, %v2114
      %v2116 = vsub.f32 1.5, %v2115
      %v2117 = vmul.f32 %v2112, %v2116
      %vm2118 = vweird.f32 %v1630
      %vm2119 = vweird.f32 %v2112
      %vm2120 = vmor %vm2118, %vm2119
      %v2121 = vsel %vm2120, %v2112, %v2117
      %v2122 = vrsqrt.pop %v1631
      %v2123 = vmul.f32 %v2122, %v1631
      %v2124 = vmul.f32 %v2123, %v2122
      %v2125 = vmul.f32 0.5, %v2124
      %v2126 = vsub.f32 1.5, %v2125
      %v2127 = vmul.f32 %v2122, %v2126
      %vm2128 = vweird.f32 %v1631
      %vm2129 = vweird.f32 %v2122
      %vm2130 = vmor %vm2128, %vm2129
      %v2131 = vsel %vm2130, %v2122, %v2127
      %v2132 = vrsqrt.pop %v1632
      %v2133 = vmul.f32 %v2132, %v1632
      %v2134 = vmul.f32 %v2133, %v2132
      %v2135 = vmul.f32 0.5, %v2134
      %v2136 = vsub.f32 1.5, %v2135
      %v2137 = vmul.f32 %v2132, %v2136
      %vm2138 = vweird.f32 %v1632
      %vm2139 = vweird.f32 %v2132
      %vm2140 = vmor %vm2138, %vm2139
      %v2141 = vsel %vm2140, %v2132, %v2137
      %v2142 = vrsqrt.pop %v1633
      %v2143 = vmul.f32 %v2142, %v1633
      %v2144 = vmul.f32 %v2143, %v2142
      %v2145 = vmul.f32 0.5, %v2144
      %v2146 = vsub.f32 1.5, %v2145
      %v2147 = vmul.f32 %v2142, %v2146
      %vm2148 = vweird.f32 %v1633
      %vm2149 = vweird.f32 %v2142
      %vm2150 = vmor %vm2148, %vm2149
      %v2151 = vsel %vm2150, %v2142, %v2147
      %v2152 = vrsqrt.pop %v1634
      %v2153 = vmul.f32 %v2152, %v1634
      %v2154 = vmul.f32 %v2153, %v2152
      %v2155 = vmul.f32 0.5, %v2154
      %v2156 = vsub.f32 1.5, %v2155
      %v2157 = vmul.f32 %v2152, %v2156
      %vm2158 = vweird.f32 %v1634
      %vm2159 = vweird.f32 %v2152
      %vm2160 = vmor %vm2158, %vm2159
      %v2161 = vsel %vm2160, %v2152, %v2157
      %v2162 = vrsqrt.pop %v1635
      %v2163 = vmul.f32 %v2162, %v1635
      %v2164 = vmul.f32 %v2163, %v2162
      %v2165 = vmul.f32 0.5, %v2164
      %v2166 = vsub.f32 1.5, %v2165
      %v2167 = vmul.f32 %v2162, %v2166
      %vm2168 = vweird.f32 %v1635
      %vm2169 = vweird.f32 %v2162
      %vm2170 = vmor %vm2168, %vm2169
      %v2171 = vsel %vm2170, %v2162, %v2167
      %v2172 = vrsqrt.pop %v1636
      %v2173 = vmul.f32 %v2172, %v1636
      %v2174 = vmul.f32 %v2173, %v2172
      %v2175 = vmul.f32 0.5, %v2174
      %v2176 = vsub.f32 1.5, %v2175
      %v2177 = vmul.f32 %v2172, %v2176
      %vm2178 = vweird.f32 %v1636
      %vm2179 = vweird.f32 %v2172
      %vm2180 = vmor %vm2178, %vm2179
      %v2181 = vsel %vm2180, %v2172, %v2177
      %v2182 = vrsqrt.pop %v1637
      %v2183 = vmul.f32 %v2182, %v1637
      %v2184 = vmul.f32 %v2183, %v2182
      %v2185 = vmul.f32 0.5, %v2184
      %v2186 = vsub.f32 1.5, %v2185
      %v2187 = vmul.f32 %v2182, %v2186
      %vm2188 = vweird.f32 %v1637
      %vm2189 = vweird.f32 %v2182
      %vm2190 = vmor %vm2188, %vm2189
      %v2191 = vsel %vm2190, %v2182, %v2187
      %v2192 = vrsqrt.pop %v1638
      %v2193 = vmul.f32 %v2192, %v1638
      %v2194 = vmul.f32 %v2193, %v2192
      %v2195 = vmul.f32 0.5, %v2194
      %v2196 = vsub.f32 1.5, %v2195
      %v2197 = vmul.f32 %v2192, %v2196
      %vm2198 = vweird.f32 %v1638
      %vm2199 = vweird.f32 %v2192
      %vm2200 = vmor %vm2198, %vm2199
      %v2201 = vsel %vm2200, %v2192, %v2197
      %v2202 = vrsqrt.pop %v1639
      %v2203 = vmul.f32 %v2202, %v1639
      %v2204 = vmul.f32 %v2203, %v2202
      %v2205 = vmul.f32 0.5, %v2204
      %v2206 = vsub.f32 1.5, %v2205
      %v2207 = vmul.f32 %v2202, %v2206
      %vm2208 = vweird.f32 %v1639
      %vm2209 = vweird.f32 %v2202
      %vm2210 = vmor %vm2208, %vm2209
      %v2211 = vsel %vm2210, %v2202, %v2207
      %v2212 = vrsqrt.pop %v1640
      %v2213 = vmul.f32 %v2212, %v1640
      %v2214 = vmul.f32 %v2213, %v2212
      %v2215 = vmul.f32 0.5, %v2214
      %v2216 = vsub.f32 1.5, %v2215
      %v2217 = vmul.f32 %v2212, %v2216
      %vm2218 = vweird.f32 %v1640
      %vm2219 = vweird.f32 %v2212
      %vm2220 = vmor %vm2218, %vm2219
      %v2221 = vsel %vm2220, %v2212, %v2217
      %v2222 = vrsqrt.pop %v1641
      %v2223 = vmul.f32 %v2222, %v1641
      %v2224 = vmul.f32 %v2223, %v2222
      %v2225 = vmul.f32 0.5, %v2224
      %v2226 = vsub.f32 1.5, %v2225
      %v2227 = vmul.f32 %v2222, %v2226
      %vm2228 = vweird.f32 %v1641
      %vm2229 = vweird.f32 %v2222
      %vm2230 = vmor %vm2228, %vm2229
      %v2231 = vsel %vm2230, %v2222, %v2227
      %v2232 = vrsqrt.pop %v1642
      %v2233 = vmul.f32 %v2232, %v1642
      %v2234 = vmul.f32 %v2233, %v2232
      %v2235 = vmul.f32 0.5, %v2234
      %v2236 = vsub.f32 1.5, %v2235
      %v2237 = vmul.f32 %v2232, %v2236
      %vm2238 = vweird.f32 %v1642
      %vm2239 = vweird.f32 %v2232
      %vm2240 = vmor %vm2238, %vm2239
      %v2241 = vsel %vm2240, %v2232, %v2237
      %v2242 = vrsqrt.pop %v1643
      %v2243 = vmul.f32 %v2242, %v1643
      %v2244 = vmul.f32 %v2243, %v2242
      %v2245 = vmul.f32 0.5, %v2244
      %v2246 = vsub.f32 1.5, %v2245
      %v2247 = vmul.f32 %v2242, %v2246
      %vm2248 = vweird.f32 %v1643
      %vm2249 = vweird.f32 %v2242
      %vm2250 = vmor %vm2248, %vm2249
      %v2251 = vsel %vm2250, %v2242, %v2247
      %v2252 = vrsqrt.pop %v1644
      %v2253 = vmul.f32 %v2252, %v1644
      %v2254 = vmul.f32 %v2253, %v2252
      %v2255 = vmul.f32 0.5, %v2254
      %v2256 = vsub.f32 1.5, %v2255
      %v2257 = vmul.f32 %v2252, %v2256
      %vm2258 = vweird.f32 %v1644
      %vm2259 = vweird.f32 %v2252
      %vm2260 = vmor %vm2258, %vm2259
      %v2261 = vsel %vm2260, %v2252, %v2257
      %v2262 = vrsqrt.pop %v1645
      %v2263 = vmul.f32 %v2262, %v1645
      %v2264 = vmul.f32 %v2263, %v2262
      %v2265 = vmul.f32 0.5, %v2264
      %v2266 = vsub.f32 1.5, %v2265
      %v2267 = vmul.f32 %v2262, %v2266
      %vm2268 = vweird.f32 %v1645
      %vm2269 = vweird.f32 %v2262
      %vm2270 = vmor %vm2268, %vm2269
      %v2271 = vsel %vm2270, %v2262, %v2267
      %v2272 = vrsqrt.pop %v1646
      %v2273 = vmul.f32 %v2272, %v1646
      %v2274 = vmul.f32 %v2273, %v2272
      %v2275 = vmul.f32 0.5, %v2274
      %v2276 = vsub.f32 1.5, %v2275
      %v2277 = vmul.f32 %v2272, %v2276
      %vm2278 = vweird.f32 %v1646
      %vm2279 = vweird.f32 %v2272
      %vm2280 = vmor %vm2278, %vm2279
      %v2281 = vsel %vm2280, %v2272, %v2277
      %v2282 = vrsqrt.pop %v1647
      %v2283 = vmul.f32 %v2282, %v1647
      %v2284 = vmul.f32 %v2283, %v2282
      %v2285 = vmul.f32 0.5, %v2284
      %v2286 = vsub.f32 1.5, %v2285
      %v2287 = vmul.f32 %v2282, %v2286
      %vm2288 = vweird.f32 %v1647
      %vm2289 = vweird.f32 %v2282
      %vm2290 = vmor %vm2288, %vm2289
      %v2291 = vsel %vm2290, %v2282, %v2287
      %v2292 = vrsqrt.pop %v1648
      %v2293 = vmul.f32 %v2292, %v1648
      %v2294 = vmul.f32 %v2293, %v2292
      %v2295 = vmul.f32 0.5, %v2294
      %v2296 = vsub.f32 1.5, %v2295
      %v2297 = vmul.f32 %v2292, %v2296
      %vm2298 = vweird.f32 %v1648
      %vm2299 = vweird.f32 %v2292
      %vm2300 = vmor %vm2298, %vm2299
      %v2301 = vsel %vm2300, %v2292, %v2297
      %v2302 = vrsqrt.pop %v1649
      %v2303 = vmul.f32 %v2302, %v1649
      %v2304 = vmul.f32 %v2303, %v2302
      %v2305 = vmul.f32 0.5, %v2304
      %v2306 = vsub.f32 1.5, %v2305
      %v2307 = vmul.f32 %v2302, %v2306
      %vm2308 = vweird.f32 %v1649
      %vm2309 = vweird.f32 %v2302
      %vm2310 = vmor %vm2308, %vm2309
      %v2311 = vsel %vm2310, %v2302, %v2307
      %v2312 = vrsqrt.pop %v1650
      %v2313 = vmul.f32 %v2312, %v1650
      %v2314 = vmul.f32 %v2313, %v2312
      %v2315 = vmul.f32 0.5, %v2314
      %v2316 = vsub.f32 1.5, %v2315
      %v2317 = vmul.f32 %v2312, %v2316
      %vm2318 = vweird.f32 %v1650
      %vm2319 = vweird.f32 %v2312
      %vm2320 = vmor %vm2318, %vm2319
      %v2321 = vsel %vm2320, %v2312, %v2317
      %v2322 = vrsqrt.pop %v1651
      %v2323 = vmul.f32 %v2322, %v1651
      %v2324 = vmul.f32 %v2323, %v2322
      %v2325 = vmul.f32 0.5, %v2324
      %v2326 = vsub.f32 1.5, %v2325
      %v2327 = vmul.f32 %v2322, %v2326
      %vm2328 = vweird.f32 %v1651
      %vm2329 = vweird.f32 %v2322
      %vm2330 = vmor %vm2328, %vm2329
      %v2331 = vsel %vm2330, %v2322, %v2327
      %v2332 = vrsqrt.pop %v1652
      %v2333 = vmul.f32 %v2332, %v1652
      %v2334 = vmul.f32 %v2333, %v2332
      %v2335 = vmul.f32 0.5, %v2334
      %v2336 = vsub.f32 1.5, %v2335
      %v2337 = vmul.f32 %v2332, %v2336
      %vm2338 = vweird.f32 %v1652
      %vm2339 = vweird.f32 %v2332
      %vm2340 = vmor %vm2338, %vm2339
      %v2341 = vsel %vm2340, %v2332, %v2337
      %v2342 = vrsqrt.pop %v1653
      %v2343 = vmul.f32 %v2342, %v1653
      %v2344 = vmul.f32 %v2343, %v2342
      %v2345 = vmul.f32 0.5, %v2344
      %v2346 = vsub.f32 1.5, %v2345
      %v2347 = vmul.f32 %v2342, %v2346
      %vm2348 = vweird.f32 %v1653
      %vm2349 = vweird.f32 %v2342
      %vm2350 = vmor %vm2348, %vm2349
      %v2351 = vsel %vm2350, %v2342, %v2347
      %v2352 = vrsqrt.pop %v1654
      %v2353 = vmul.f32 %v2352, %v1654
      %v2354 = vmul.f32 %v2353, %v2352
      %v2355 = vmul.f32 0.5, %v2354
      %v2356 = vsub.f32 1.5, %v2355
      %v2357 = vmul.f32 %v2352, %v2356
      %vm2358 = vweird.f32 %v1654
      %vm2359 = vweird.f32 %v2352
      %vm2360 = vmor %vm2358, %vm2359
      %v2361 = vsel %vm2360, %v2352, %v2357
      %v2362 = vrsqrt.pop %v1655
      %v2363 = vmul.f32 %v2362, %v1655
      %v2364 = vmul.f32 %v2363, %v2362
      %v2365 = vmul.f32 0.5, %v2364
      %v2366 = vsub.f32 1.5, %v2365
      %v2367 = vmul.f32 %v2362, %v2366
      %vm2368 = vweird.f32 %v1655
      %vm2369 = vweird.f32 %v2362
      %vm2370 = vmor %vm2368, %vm2369
      %v2371 = vsel %vm2370, %v2362, %v2367
      %v2372 = vrsqrt.pop %v1656
      %v2373 = vmul.f32 %v2372, %v1656
      %v2374 = vmul.f32 %v2373, %v2372
      %v2375 = vmul.f32 0.5, %v2374
      %v2376 = vsub.f32 1.5, %v2375
      %v2377 = vmul.f32 %v2372, %v2376
      %vm2378 = vweird.f32 %v1656
      %vm2379 = vweird.f32 %v2372
      %vm2380 = vmor %vm2378, %vm2379
      %v2381 = vsel %vm2380, %v2372, %v2377
      %v2382 = vrsqrt.pop %v1657
      %v2383 = vmul.f32 %v2382, %v1657
      %v2384 = vmul.f32 %v2383, %v2382
      %v2385 = vmul.f32 0.5, %v2384
      %v2386 = vsub.f32 1.5, %v2385
      %v2387 = vmul.f32 %v2382, %v2386
      %vm2388 = vweird.f32 %v1657
      %vm2389 = vweird.f32 %v2382
      %vm2390 = vmor %vm2388, %vm2389
      %v2391 = vsel %vm2390, %v2382, %v2387
      %v2392 = vrsqrt.pop %v1658
      %v2393 = vmul.f32 %v2392, %v1658
      %v2394 = vmul.f32 %v2393, %v2392
      %v2395 = vmul.f32 0.5, %v2394
      %v2396 = vsub.f32 1.5, %v2395
      %v2397 = vmul.f32 %v2392, %v2396
      %vm2398 = vweird.f32 %v1658
      %vm2399 = vweird.f32 %v2392
      %vm2400 = vmor %vm2398, %vm2399
      %v2401 = vsel %vm2400, %v2392, %v2397
      %v2402 = vrsqrt.pop %v1659
      %v2403 = vmul.f32 %v2402, %v1659
      %v2404 = vmul.f32 %v2403, %v2402
      %v2405 = vmul.f32 0.5, %v2404
      %v2406 = vsub.f32 1.5, %v2405
      %v2407 = vmul.f32 %v2402, %v2406
      %vm2408 = vweird.f32 %v1659
      %vm2409 = vweird.f32 %v2402
      %vm2410 = vmor %vm2408, %vm2409
      %v2411 = vsel %vm2410, %v2402, %v2407
      %v2412 = vrsqrt.pop %v1660
      %v2413 = vmul.f32 %v2412, %v1660
      %v2414 = vmul.f32 %v2413, %v2412
      %v2415 = vmul.f32 0.5, %v2414
      %v2416 = vsub.f32 1.5, %v2415
      %v2417 = vmul.f32 %v2412, %v2416
      %vm2418 = vweird.f32 %v1660
      %vm2419 = vweird.f32 %v2412
      %vm2420 = vmor %vm2418, %vm2419
      %v2421 = vsel %vm2420, %v2412, %v2417
      %v2422 = vrsqrt.pop %v1661
      %v2423 = vmul.f32 %v2422, %v1661
      %v2424 = vmul.f32 %v2423, %v2422
      %v2425 = vmul.f32 0.5, %v2424
      %v2426 = vsub.f32 1.5, %v2425
      %v2427 = vmul.f32 %v2422, %v2426
      %vm2428 = vweird.f32 %v1661
      %vm2429 = vweird.f32 %v2422
      %vm2430 = vmor %vm2428, %vm2429
      %v2431 = vsel %vm2430, %v2422, %v2427
      %v2432 = vld [vmem:[%s260] sm:$0xff]
      %v2433 = vld [vmem:[%s260 + $0x8] sm:$0xff]
      %v2434 = vld [vmem:[%s260 + $0x10] sm:$0xff]
      %v2435 = vld [vmem:[%s260 + $0x18] sm:$0xff]
      %v2436 = vld [vmem:[%s260 + $0x20] sm:$0xff]
      %v2437 = vld [vmem:[%s260 + $0x28] sm:$0xff]
      %v2438 = vld [vmem:[%s260 + $0x30] sm:$0xff]
      %v2439 = vld [vmem:[%s260 + $0x38] sm:$0xff]
      %v2440 = vld [vmem:[%s260 + $0x40] sm:$0xff]
      %v2441 = vld [vmem:[%s260 + $0x48] sm:$0xff]
      %v2442 = vld [vmem:[%s260 + $0x50] sm:$0xff]
      %v2443 = vld [vmem:[%s260 + $0x58] sm:$0xff]
      %v2444 = vld [vmem:[%s260 + $0x60] sm:$0xff]
      %v2445 = vld [vmem:[%s260 + $0x68] sm:$0xff]
      %v2446 = vld [vmem:[%s260 + $0x70] sm:$0xff]
      %v2447 = vld [vmem:[%s260 + $0x78] sm:$0xff]
      %v2448 = vld [vmem:[%s260 + $0x80] sm:$0xff]
      %v2449 = vld [vmem:[%s260 + $0x88] sm:$0xff]
      %v2450 = vld [vmem:[%s260 + $0x90] sm:$0xff]
      %v2451 = vld [vmem:[%s260 + $0x98] sm:$0xff]
      %v2452 = vld [vmem:[%s260 + $0xa0] sm:$0xff]
      %v2453 = vld [vmem:[%s260 + $0xa8] sm:$0xff]
      %v2454 = vld [vmem:[%s260 + $0xb0] sm:$0xff]
      %v2455 = vld [vmem:[%s260 + $0xb8] sm:$0xff]
      %v2456 = vld [vmem:[%s260 + $0xc0] sm:$0xff]
      %v2457 = vld [vmem:[%s260 + $0xc8] sm:$0xff]
      %v2458 = vld [vmem:[%s260 + $0xd0] sm:$0xff]
      %v2459 = vld [vmem:[%s260 + $0xd8] sm:$0xff]
      %v2460 = vld [vmem:[%s260 + $0xe0] sm:$0xff]
      %v2461 = vld [vmem:[%s260 + $0xe8] sm:$0xff]
      %v2462 = vld [vmem:[%s260 + $0xf0] sm:$0xff]
      %v2463 = vld [vmem:[%s260 + $0xf8] sm:$0xff]
      %v2464 = vld [vmem:[%s260 + $0x100] sm:$0xff]
      %v2465 = vld [vmem:[%s260 + $0x108] sm:$0xff]
      %v2466 = vld [vmem:[%s260 + $0x110] sm:$0xff]
      %v2467 = vld [vmem:[%s260 + $0x118] sm:$0xff]
      %v2468 = vld [vmem:[%s260 + $0x120] sm:$0xff]
      %v2469 = vld [vmem:[%s260 + $0x128] sm:$0xff]
      %v2470 = vld [vmem:[%s260 + $0x130] sm:$0xff]
      %v2471 = vld [vmem:[%s260 + $0x138] sm:$0xff]
      %v2472 = vld [vmem:[%s260 + $0x140] sm:$0xff]
      %v2473 = vld [vmem:[%s260 + $0x148] sm:$0xff]
      %v2474 = vld [vmem:[%s260 + $0x150] sm:$0xff]
      %v2475 = vld [vmem:[%s260 + $0x158] sm:$0xff]
      %v2476 = vld [vmem:[%s260 + $0x160] sm:$0xff]
      %v2477 = vld [vmem:[%s260 + $0x168] sm:$0xff]
      %v2478 = vld [vmem:[%s260 + $0x170] sm:$0xff]
      %v2479 = vld [vmem:[%s260 + $0x178] sm:$0xff]
      %v2480 = vld [vmem:[%s260 + $0x180] sm:$0xff]
      %v2481 = vld [vmem:[%s260 + $0x188] sm:$0xff]
      %v2482 = vld [vmem:[%s260 + $0x190] sm:$0xff]
      %v2483 = vld [vmem:[%s260 + $0x198] sm:$0xff]
      %v2484 = vld [vmem:[%s260 + $0x1a0] sm:$0xff]
      %v2485 = vld [vmem:[%s260 + $0x1a8] sm:$0xff]
      %v2486 = vld [vmem:[%s260 + $0x1b0] sm:$0xff]
      %v2487 = vld [vmem:[%s260 + $0x1b8] sm:$0xff]
      %v2488 = vld [vmem:[%s260 + $0x1c0] sm:$0xff]
      %v2489 = vld [vmem:[%s260 + $0x1c8] sm:$0xff]
      %v2490 = vld [vmem:[%s260 + $0x1d0] sm:$0xff]
      %v2491 = vld [vmem:[%s260 + $0x1d8] sm:$0xff]
      %v2492 = vld [vmem:[%s260 + $0x1e0] sm:$0xff]
      %v2493 = vld [vmem:[%s260 + $0x1e8] sm:$0xff]
      %v2494 = vld [vmem:[%s260 + $0x1f0] sm:$0xff]
      %v2495 = vld [vmem:[%s260 + $0x1f8] sm:$0xff]
      %v2496 = vld [vmem:[%s260 + $0x200] sm:$0xff]
      %v2497 = vld [vmem:[%s260 + $0x208] sm:$0xff]
      %v2498 = vld [vmem:[%s260 + $0x210] sm:$0xff]
      %v2499 = vld [vmem:[%s260 + $0x218] sm:$0xff]
      %v2500 = vld [vmem:[%s260 + $0x220] sm:$0xff]
      %v2501 = vld [vmem:[%s260 + $0x228] sm:$0xff]
      %v2502 = vld [vmem:[%s260 + $0x230] sm:$0xff]
      %v2503 = vld [vmem:[%s260 + $0x238] sm:$0xff]
      %v2504 = vld [vmem:[%s260 + $0x240] sm:$0xff]
      %v2505 = vld [vmem:[%s260 + $0x248] sm:$0xff]
      %v2506 = vld [vmem:[%s260 + $0x250] sm:$0xff]
      %v2507 = vld [vmem:[%s260 + $0x258] sm:$0xff]
      %v2508 = vld [vmem:[%s260 + $0x260] sm:$0xff]
      %v2509 = vmul.f32 %v2432, %v1671
      %v2510 = vmul.f32 %v2433, %v1681
      %v2511 = vmul.f32 %v2434, %v1691
      %v2512 = vmul.f32 %v2435, %v1701
      %v2513 = vmul.f32 %v2436, %v1711
      %v2514 = vmul.f32 %v2437, %v1721
      %v2515 = vmul.f32 %v2438, %v1731
      %v2516 = vmul.f32 %v2439, %v1741
      %v2517 = vmul.f32 %v2440, %v1751
      %v2518 = vmul.f32 %v2441, %v1761
      %v2519 = vmul.f32 %v2442, %v1771
      %v2520 = vmul.f32 %v2443, %v1781
      %v2521 = vmul.f32 %v2444, %v1791
      %v2522 = vmul.f32 %v2445, %v1801
      %v2523 = vmul.f32 %v2446, %v1811
      %v2524 = vmul.f32 %v2447, %v1821
      %v2525 = vmul.f32 %v2448, %v1831
      %v2526 = vmul.f32 %v2449, %v1841
      %v2527 = vmul.f32 %v2450, %v1851
      %v2528 = vmul.f32 %v2451, %v1861
      %v2529 = vmul.f32 %v2452, %v1871
      %v2530 = vmul.f32 %v2453, %v1881
      %v2531 = vmul.f32 %v2454, %v1891
      %v2532 = vmul.f32 %v2455, %v1901
      %v2533 = vmul.f32 %v2456, %v1911
      %v2534 = vmul.f32 %v2457, %v1921
      %v2535 = vmul.f32 %v2458, %v1931
      %v2536 = vmul.f32 %v2459, %v1941
      %v2537 = vmul.f32 %v2460, %v1951
      %v2538 = vmul.f32 %v2461, %v1961
      %v2539 = vmul.f32 %v2462, %v1971
      %v2540 = vmul.f32 %v2463, %v1981
      %v2541 = vmul.f32 %v2464, %v1991
      %v2542 = vmul.f32 %v2465, %v2001
      %v2543 = vmul.f32 %v2466, %v2011
      %v2544 = vmul.f32 %v2467, %v2021
      %v2545 = vmul.f32 %v2468, %v2031
      %v2546 = vmul.f32 %v2469, %v2041
      %v2547 = vmul.f32 %v2470, %v2051
      %v2548 = vmul.f32 %v2471, %v2061
      %v2549 = vmul.f32 %v2472, %v2071
      %v2550 = vmul.f32 %v2473, %v2081
      %v2551 = vmul.f32 %v2474, %v2091
      %v2552 = vmul.f32 %v2475, %v2101
      %v2553 = vmul.f32 %v2476, %v2111
      %v2554 = vmul.f32 %v2477, %v2121
      %v2555 = vmul.f32 %v2478, %v2131
      %v2556 = vmul.f32 %v2479, %v2141
      %v2557 = vmul.f32 %v2480, %v2151
      %v2558 = vmul.f32 %v2481, %v2161
      %v2559 = vmul.f32 %v2482, %v2171
      %v2560 = vmul.f32 %v2483, %v2181
      %v2561 = vmul.f32 %v2484, %v2191
      %v2562 = vmul.f32 %v2485, %v2201
      %v2563 = vmul.f32 %v2486, %v2211
      %v2564 = vmul.f32 %v2487, %v2221
      %v2565 = vmul.f32 %v2488, %v2231
      %v2566 = vmul.f32 %v2489, %v2241
      %v2567 = vmul.f32 %v2490, %v2251
      %v2568 = vmul.f32 %v2491, %v2261
      %v2569 = vmul.f32 %v2492, %v2271
      %v2570 = vmul.f32 %v2493, %v2281
      %v2571 = vmul.f32 %v2494, %v2291
      %v2572 = vmul.f32 %v2495, %v2301
      %v2573 = vmul.f32 %v2496, %v2311
      %v2574 = vmul.f32 %v2497, %v2321
      %v2575 = vmul.f32 %v2498, %v2331
      %v2576 = vmul.f32 %v2499, %v2341
      %v2577 = vmul.f32 %v2500, %v2351
      %v2578 = vmul.f32 %v2501, %v2361
      %v2579 = vmul.f32 %v2502, %v2371
      %v2580 = vmul.f32 %v2503, %v2381
      %v2581 = vmul.f32 %v2504, %v2391
      %v2582 = vmul.f32 %v2505, %v2401
      %v2583 = vmul.f32 %v2506, %v2411
      %v2584 = vmul.f32 %v2507, %v2421
      %v2585 = vmul.f32 %v2508, %v2431
      %v2586 = vld [vmem:[%s266] sm:$0xff]
      %v2587 = vld [vmem:[%s266 + $0x8] sm:$0xff]
      %v2588 = vld [vmem:[%s266 + $0x10] sm:$0xff]
      %v2589 = vld [vmem:[%s266 + $0x18] sm:$0xff]
      %v2590 = vld [vmem:[%s266 + $0x20] sm:$0xff]
      %v2591 = vld [vmem:[%s266 + $0x28] sm:$0xff]
      %v2592 = vld [vmem:[%s266 + $0x30] sm:$0xff]
      %v2593 = vld [vmem:[%s266 + $0x38] sm:$0xff]
      %v2594 = vld [vmem:[%s266 + $0x40] sm:$0xff]
      %v2595 = vld [vmem:[%s266 + $0x48] sm:$0xff]
      %v2596 = vld [vmem:[%s266 + $0x50] sm:$0xff]
      %v2597 = vld [vmem:[%s266 + $0x58] sm:$0xff]
      %v2598 = vld [vmem:[%s266 + $0x60] sm:$0xff]
      %v2599 = vld [vmem:[%s266 + $0x68] sm:$0xff]
      %v2600 = vld [vmem:[%s266 + $0x70] sm:$0xff]
      %v2601 = vld [vmem:[%s266 + $0x78] sm:$0xff]
      %v2602 = vld [vmem:[%s266 + $0x80] sm:$0xff]
      %v2603 = vld [vmem:[%s266 + $0x88] sm:$0xff]
      %v2604 = vld [vmem:[%s266 + $0x90] sm:$0xff]
      %v2605 = vld [vmem:[%s266 + $0x98] sm:$0xff]
      %v2606 = vld [vmem:[%s266 + $0xa0] sm:$0xff]
      %v2607 = vld [vmem:[%s266 + $0xa8] sm:$0xff]
      %v2608 = vld [vmem:[%s266 + $0xb0] sm:$0xff]
      %v2609 = vld [vmem:[%s266 + $0xb8] sm:$0xff]
      %v2610 = vld [vmem:[%s266 + $0xc0] sm:$0xff]
      %v2611 = vld [vmem:[%s266 + $0xc8] sm:$0xff]
      %v2612 = vld [vmem:[%s266 + $0xd0] sm:$0xff]
      %v2613 = vld [vmem:[%s266 + $0xd8] sm:$0xff]
      %v2614 = vld [vmem:[%s266 + $0xe0] sm:$0xff]
      %v2615 = vld [vmem:[%s266 + $0xe8] sm:$0xff]
      %v2616 = vld [vmem:[%s266 + $0xf0] sm:$0xff]
      %v2617 = vld [vmem:[%s266 + $0xf8] sm:$0xff]
      %v2618 = vld [vmem:[%s266 + $0x100] sm:$0xff]
      %v2619 = vld [vmem:[%s266 + $0x108] sm:$0xff]
      %v2620 = vld [vmem:[%s266 + $0x110] sm:$0xff]
      %v2621 = vld [vmem:[%s266 + $0x118] sm:$0xff]
      %v2622 = vld [vmem:[%s266 + $0x120] sm:$0xff]
      %v2623 = vld [vmem:[%s266 + $0x128] sm:$0xff]
      %v2624 = vld [vmem:[%s266 + $0x130] sm:$0xff]
      %v2625 = vld [vmem:[%s266 + $0x138] sm:$0xff]
      %v2626 = vld [vmem:[%s266 + $0x140] sm:$0xff]
      %v2627 = vld [vmem:[%s266 + $0x148] sm:$0xff]
      %v2628 = vld [vmem:[%s266 + $0x150] sm:$0xff]
      %v2629 = vld [vmem:[%s266 + $0x158] sm:$0xff]
      %v2630 = vld [vmem:[%s266 + $0x160] sm:$0xff]
      %v2631 = vld [vmem:[%s266 + $0x168] sm:$0xff]
      %v2632 = vld [vmem:[%s266 + $0x170] sm:$0xff]
      %v2633 = vld [vmem:[%s266 + $0x178] sm:$0xff]
      %v2634 = vld [vmem:[%s266 + $0x180] sm:$0xff]
      %v2635 = vld [vmem:[%s266 + $0x188] sm:$0xff]
      %v2636 = vld [vmem:[%s266 + $0x190] sm:$0xff]
      %v2637 = vld [vmem:[%s266 + $0x198] sm:$0xff]
      %v2638 = vld [vmem:[%s266 + $0x1a0] sm:$0xff]
      %v2639 = vld [vmem:[%s266 + $0x1a8] sm:$0xff]
      %v2640 = vld [vmem:[%s266 + $0x1b0] sm:$0xff]
      %v2641 = vld [vmem:[%s266 + $0x1b8] sm:$0xff]
      %v2642 = vld [vmem:[%s266 + $0x1c0] sm:$0xff]
      %v2643 = vld [vmem:[%s266 + $0x1c8] sm:$0xff]
      %v2644 = vld [vmem:[%s266 + $0x1d0] sm:$0xff]
      %v2645 = vld [vmem:[%s266 + $0x1d8] sm:$0xff]
      %v2646 = vld [vmem:[%s266 + $0x1e0] sm:$0xff]
      %v2647 = vld [vmem:[%s266 + $0x1e8] sm:$0xff]
      %v2648 = vld [vmem:[%s266 + $0x1f0] sm:$0xff]
      %v2649 = vld [vmem:[%s266 + $0x1f8] sm:$0xff]
      %v2650 = vld [vmem:[%s266 + $0x200] sm:$0xff]
      %v2651 = vld [vmem:[%s266 + $0x208] sm:$0xff]
      %v2652 = vld [vmem:[%s266 + $0x210] sm:$0xff]
      %v2653 = vld [vmem:[%s266 + $0x218] sm:$0xff]
      %v2654 = vld [vmem:[%s266 + $0x220] sm:$0xff]
      %v2655 = vld [vmem:[%s266 + $0x228] sm:$0xff]
      %v2656 = vld [vmem:[%s266 + $0x230] sm:$0xff]
      %v2657 = vld [vmem:[%s266 + $0x238] sm:$0xff]
      %v2658 = vld [vmem:[%s266 + $0x240] sm:$0xff]
      %v2659 = vld [vmem:[%s266 + $0x248] sm:$0xff]
      %v2660 = vld [vmem:[%s266 + $0x250] sm:$0xff]
      %v2661 = vld [vmem:[%s266 + $0x258] sm:$0xff]
      %v2662 = vld [vmem:[%s266 + $0x260] sm:$0xff]
      %v2663 = vmul.f32 %v1200, %v2509
      %v2664 = vmul.f32 %v1201, %v2510
      %v2665 = vmul.f32 %v1202, %v2511
      %v2666 = vmul.f32 %v1203, %v2512
      %v2667 = vmul.f32 %v1204, %v2513
      %v2668 = vmul.f32 %v1205, %v2514
      %v2669 = vmul.f32 %v1206, %v2515
      %v2670 = vmul.f32 %v1207, %v2516
      %v2671 = vmul.f32 %v1208, %v2517
      %v2672 = vmul.f32 %v1209, %v2518
      %v2673 = vmul.f32 %v1210, %v2519
      %v2674 = vmul.f32 %v1211, %v2520
      %v2675 = vmul.f32 %v1212, %v2521
      %v2676 = vmul.f32 %v1213, %v2522
      %v2677 = vmul.f32 %v1214, %v2523
      %v2678 = vmul.f32 %v1215, %v2524
      %v2679 = vmul.f32 %v1216, %v2525
      %v2680 = vmul.f32 %v1217, %v2526
      %v2681 = vmul.f32 %v1218, %v2527
      %v2682 = vmul.f32 %v1219, %v2528
      %v2683 = vmul.f32 %v1220, %v2529
      %v2684 = vmul.f32 %v1221, %v2530
      %v2685 = vmul.f32 %v1222, %v2531
      %v2686 = vmul.f32 %v1223, %v2532
      %v2687 = vmul.f32 %v1224, %v2533
      %v2688 = vmul.f32 %v1225, %v2534
      %v2689 = vmul.f32 %v1226, %v2535
      %v2690 = vmul.f32 %v1227, %v2536
      %v2691 = vmul.f32 %v1228, %v2537
      %v2692 = vmul.f32 %v1229, %v2538
      %v2693 = vmul.f32 %v1230, %v2539
      %v2694 = vmul.f32 %v1231, %v2540
      %v2695 = vmul.f32 %v1232, %v2541
      %v2696 = vmul.f32 %v1233, %v2542
      %v2697 = vmul.f32 %v1234, %v2543
      %v2698 = vmul.f32 %v1235, %v2544
      %v2699 = vmul.f32 %v1236, %v2545
      %v2700 = vmul.f32 %v1237, %v2546
      %v2701 = vmul.f32 %v1238, %v2547
      %v2702 = vmul.f32 %v1239, %v2548
      %v2703 = vmul.f32 %v1240, %v2549
      %v2704 = vmul.f32 %v1241, %v2550
      %v2705 = vmul.f32 %v1242, %v2551
      %v2706 = vmul.f32 %v1243, %v2552
      %v2707 = vmul.f32 %v1244, %v2553
      %v2708 = vmul.f32 %v1245, %v2554
      %v2709 = vmul.f32 %v1246, %v2555
      %v2710 = vmul.f32 %v1247, %v2556
      %v2711 = vmul.f32 %v1248, %v2557
      %v2712 = vmul.f32 %v1249, %v2558
      %v2713 = vmul.f32 %v1250, %v2559
      %v2714 = vmul.f32 %v1251, %v2560
      %v2715 = vmul.f32 %v1252, %v2561
      %v2716 = vmul.f32 %v1253, %v2562
      %v2717 = vmul.f32 %v1254, %v2563
      %v2718 = vmul.f32 %v1255, %v2564
      %v2719 = vmul.f32 %v1256, %v2565
      %v2720 = vmul.f32 %v1257, %v2566
      %v2721 = vmul.f32 %v1258, %v2567
      %v2722 = vmul.f32 %v1259, %v2568
      %v2723 = vmul.f32 %v1260, %v2569
      %v2724 = vmul.f32 %v1261, %v2570
      %v2725 = vmul.f32 %v1262, %v2571
      %v2726 = vmul.f32 %v1263, %v2572
      %v2727 = vmul.f32 %v1264, %v2573
      %v2728 = vmul.f32 %v1265, %v2574
      %v2729 = vmul.f32 %v1266, %v2575
      %v2730 = vmul.f32 %v1267, %v2576
      %v2731 = vmul.f32 %v1268, %v2577
      %v2732 = vmul.f32 %v1269, %v2578
      %v2733 = vmul.f32 %v1270, %v2579
      %v2734 = vmul.f32 %v1271, %v2580
      %v2735 = vmul.f32 %v1272, %v2581
      %v2736 = vmul.f32 %v1273, %v2582
      %v2737 = vmul.f32 %v1274, %v2583
      %v2738 = vmul.f32 %v1275, %v2584
      %v2739 = vmul.f32 %v1276, %v2585
      %v2740 = vsub.f32 %v2586, %v2663
      %v2741 = vsub.f32 %v2587, %v2664
      %v2742 = vsub.f32 %v2588, %v2665
      %v2743 = vsub.f32 %v2589, %v2666
      %v2744 = vsub.f32 %v2590, %v2667
      %v2745 = vsub.f32 %v2591, %v2668
      %v2746 = vsub.f32 %v2592, %v2669
      %v2747 = vsub.f32 %v2593, %v2670
      %v2748 = vsub.f32 %v2594, %v2671
      %v2749 = vsub.f32 %v2595, %v2672
      %v2750 = vsub.f32 %v2596, %v2673
      %v2751 = vsub.f32 %v2597, %v2674
      %v2752 = vsub.f32 %v2598, %v2675
      %v2753 = vsub.f32 %v2599, %v2676
      %v2754 = vsub.f32 %v2600, %v2677
      %v2755 = vsub.f32 %v2601, %v2678
      %v2756 = vsub.f32 %v2602, %v2679
      %v2757 = vsub.f32 %v2603, %v2680
      %v2758 = vsub.f32 %v2604, %v2681
      %v2759 = vsub.f32 %v2605, %v2682
      %v2760 = vsub.f32 %v2606, %v2683
      %v2761 = vsub.f32 %v2607, %v2684
      %v2762 = vsub.f32 %v2608, %v2685
      %v2763 = vsub.f32 %v2609, %v2686
      %v2764 = vsub.f32 %v2610, %v2687
      %v2765 = vsub.f32 %v2611, %v2688
      %v2766 = vsub.f32 %v2612, %v2689
      %v2767 = vsub.f32 %v2613, %v2690
      %v2768 = vsub.f32 %v2614, %v2691
      %v2769 = vsub.f32 %v2615, %v2692
      %v2770 = vsub.f32 %v2616, %v2693
      %v2771 = vsub.f32 %v2617, %v2694
      %v2772 = vsub.f32 %v2618, %v2695
      %v2773 = vsub.f32 %v2619, %v2696
      %v2774 = vsub.f32 %v2620, %v2697
      %v2775 = vsub.f32 %v2621, %v2698
      %v2776 = vsub.f32 %v2622, %v2699
      %v2777 = vsub.f32 %v2623, %v2700
      %v2778 = vsub.f32 %v2624, %v2701
      %v2779 = vsub.f32 %v2625, %v2702
      %v2780 = vsub.f32 %v2626, %v2703
      %v2781 = vsub.f32 %v2627, %v2704
      %v2782 = vsub.f32 %v2628, %v2705
      %v2783 = vsub.f32 %v2629, %v2706
      %v2784 = vsub.f32 %v2630, %v2707
      %v2785 = vsub.f32 %v2631, %v2708
      %v2786 = vsub.f32 %v2632, %v2709
      %v2787 = vsub.f32 %v2633, %v2710
      %v2788 = vsub.f32 %v2634, %v2711
      %v2789 = vsub.f32 %v2635, %v2712
      %v2790 = vsub.f32 %v2636, %v2713
      %v2791 = vsub.f32 %v2637, %v2714
      %v2792 = vsub.f32 %v2638, %v2715
      %v2793 = vsub.f32 %v2639, %v2716
      %v2794 = vsub.f32 %v2640, %v2717
      %v2795 = vsub.f32 %v2641, %v2718
      %v2796 = vsub.f32 %v2642, %v2719
      %v2797 = vsub.f32 %v2643, %v2720
      %v2798 = vsub.f32 %v2644, %v2721
      %v2799 = vsub.f32 %v2645, %v2722
      %v2800 = vsub.f32 %v2646, %v2723
      %v2801 = vsub.f32 %v2647, %v2724
      %v2802 = vsub.f32 %v2648, %v2725
      %v2803 = vsub.f32 %v2649, %v2726
      %v2804 = vsub.f32 %v2650, %v2727
      %v2805 = vsub.f32 %v2651, %v2728
      %v2806 = vsub.f32 %v2652, %v2729
      %v2807 = vsub.f32 %v2653, %v2730
      %v2808 = vsub.f32 %v2654, %v2731
      %v2809 = vsub.f32 %v2655, %v2732
      %v2810 = vsub.f32 %v2656, %v2733
      %v2811 = vsub.f32 %v2657, %v2734
      %v2812 = vsub.f32 %v2658, %v2735
      %v2813 = vsub.f32 %v2659, %v2736
      %v2814 = vsub.f32 %v2660, %v2737
      %v2815 = vsub.f32 %v2661, %v2738
      %v2816 = vsub.f32 %v2662, %v2739
      %v2817 = vld [vmem:[%s254] sm:$0xff]
      %v2818 = vld [vmem:[%s254 + $0x8] sm:$0xff]
      %v2819 = vld [vmem:[%s254 + $0x10] sm:$0xff]
      %v2820 = vld [vmem:[%s254 + $0x18] sm:$0xff]
      %v2821 = vld [vmem:[%s254 + $0x20] sm:$0xff]
      %v2822 = vld [vmem:[%s254 + $0x28] sm:$0xff]
      %v2823 = vld [vmem:[%s254 + $0x30] sm:$0xff]
      %v2824 = vld [vmem:[%s254 + $0x38] sm:$0xff]
      %v2825 = vld [vmem:[%s254 + $0x40] sm:$0xff]
      %v2826 = vld [vmem:[%s254 + $0x48] sm:$0xff]
      %v2827 = vld [vmem:[%s254 + $0x50] sm:$0xff]
      %v2828 = vld [vmem:[%s254 + $0x58] sm:$0xff]
      %v2829 = vld [vmem:[%s254 + $0x60] sm:$0xff]
      %v2830 = vld [vmem:[%s254 + $0x68] sm:$0xff]
      %v2831 = vld [vmem:[%s254 + $0x70] sm:$0xff]
      %v2832 = vld [vmem:[%s254 + $0x78] sm:$0xff]
      %v2833 = vld [vmem:[%s254 + $0x80] sm:$0xff]
      %v2834 = vld [vmem:[%s254 + $0x88] sm:$0xff]
      %v2835 = vld [vmem:[%s254 + $0x90] sm:$0xff]
      %v2836 = vld [vmem:[%s254 + $0x98] sm:$0xff]
      %v2837 = vld [vmem:[%s254 + $0xa0] sm:$0xff]
      %v2838 = vld [vmem:[%s254 + $0xa8] sm:$0xff]
      %v2839 = vld [vmem:[%s254 + $0xb0] sm:$0xff]
      %v2840 = vld [vmem:[%s254 + $0xb8] sm:$0xff]
      %v2841 = vld [vmem:[%s254 + $0xc0] sm:$0xff]
      %v2842 = vld [vmem:[%s254 + $0xc8] sm:$0xff]
      %v2843 = vld [vmem:[%s254 + $0xd0] sm:$0xff]
      %v2844 = vld [vmem:[%s254 + $0xd8] sm:$0xff]
      %v2845 = vld [vmem:[%s254 + $0xe0] sm:$0xff]
      %v2846 = vld [vmem:[%s254 + $0xe8] sm:$0xff]
      %v2847 = vld [vmem:[%s254 + $0xf0] sm:$0xff]
      %v2848 = vld [vmem:[%s254 + $0xf8] sm:$0xff]
      %v2849 = vld [vmem:[%s254 + $0x100] sm:$0xff]
      %v2850 = vld [vmem:[%s254 + $0x108] sm:$0xff]
      %v2851 = vld [vmem:[%s254 + $0x110] sm:$0xff]
      %v2852 = vld [vmem:[%s254 + $0x118] sm:$0xff]
      %v2853 = vld [vmem:[%s254 + $0x120] sm:$0xff]
      %v2854 = vld [vmem:[%s254 + $0x128] sm:$0xff]
      %v2855 = vld [vmem:[%s254 + $0x130] sm:$0xff]
      %v2856 = vld [vmem:[%s254 + $0x138] sm:$0xff]
      %v2857 = vld [vmem:[%s254 + $0x140] sm:$0xff]
      %v2858 = vld [vmem:[%s254 + $0x148] sm:$0xff]
      %v2859 = vld [vmem:[%s254 + $0x150] sm:$0xff]
      %v2860 = vld [vmem:[%s254 + $0x158] sm:$0xff]
      %v2861 = vld [vmem:[%s254 + $0x160] sm:$0xff]
      %v2862 = vld [vmem:[%s254 + $0x168] sm:$0xff]
      %v2863 = vld [vmem:[%s254 + $0x170] sm:$0xff]
      %v2864 = vld [vmem:[%s254 + $0x178] sm:$0xff]
      %v2865 = vld [vmem:[%s254 + $0x180] sm:$0xff]
      %v2866 = vld [vmem:[%s254 + $0x188] sm:$0xff]
      %v2867 = vld [vmem:[%s254 + $0x190] sm:$0xff]
      %v2868 = vld [vmem:[%s254 + $0x198] sm:$0xff]
      %v2869 = vld [vmem:[%s254 + $0x1a0] sm:$0xff]
      %v2870 = vld [vmem:[%s254 + $0x1a8] sm:$0xff]
      %v2871 = vld [vmem:[%s254 + $0x1b0] sm:$0xff]
      %v2872 = vld [vmem:[%s254 + $0x1b8] sm:$0xff]
      %v2873 = vld [vmem:[%s254 + $0x1c0] sm:$0xff]
      %v2874 = vld [vmem:[%s254 + $0x1c8] sm:$0xff]
      %v2875 = vld [vmem:[%s254 + $0x1d0] sm:$0xff]
      %v2876 = vld [vmem:[%s254 + $0x1d8] sm:$0xff]
      %v2877 = vld [vmem:[%s254 + $0x1e0] sm:$0xff]
      %v2878 = vld [vmem:[%s254 + $0x1e8] sm:$0xff]
      %v2879 = vld [vmem:[%s254 + $0x1f0] sm:$0xff]
      %v2880 = vld [vmem:[%s254 + $0x1f8] sm:$0xff]
      %v2881 = vld [vmem:[%s254 + $0x200] sm:$0xff]
      %v2882 = vld [vmem:[%s254 + $0x208] sm:$0xff]
      %v2883 = vld [vmem:[%s254 + $0x210] sm:$0xff]
      %v2884 = vld [vmem:[%s254 + $0x218] sm:$0xff]
      %v2885 = vld [vmem:[%s254 + $0x220] sm:$0xff]
      %v2886 = vld [vmem:[%s254 + $0x228] sm:$0xff]
      %v2887 = vld [vmem:[%s254 + $0x230] sm:$0xff]
      %v2888 = vld [vmem:[%s254 + $0x238] sm:$0xff]
      %v2889 = vld [vmem:[%s254 + $0x240] sm:$0xff]
      %v2890 = vld [vmem:[%s254 + $0x248] sm:$0xff]
      %v2891 = vld [vmem:[%s254 + $0x250] sm:$0xff]
      %v2892 = vld [vmem:[%s254 + $0x258] sm:$0xff]
      %v2893 = vld [vmem:[%s254 + $0x260] sm:$0xff]
      %v2894 = vld [vmem:[%s254 + $0x268] sm:$0xff]
      %v2895 = vld [vmem:[%s254 + $0x270] sm:$0xff]
      %v2896 = vld [vmem:[%s254 + $0x278] sm:$0xff]
      %v2897 = vld [vmem:[%s254 + $0x280] sm:$0xff]
      %v2898 = vld [vmem:[%s254 + $0x288] sm:$0xff]
      %v2899 = vld [vmem:[%s254 + $0x290] sm:$0xff]
      %v2900 = vld [vmem:[%s254 + $0x298] sm:$0xff]
      %v2901 = vld [vmem:[%s254 + $0x2a0] sm:$0xff]
      %v2902 = vld [vmem:[%s254 + $0x2a8] sm:$0xff]
      %v2903 = vld [vmem:[%s254 + $0x2b0] sm:$0xff]
      %v2904 = vld [vmem:[%s254 + $0x2b8] sm:$0xff]
      %v2905 = vld [vmem:[%s254 + $0x2c0] sm:$0xff]
      %v2906 = vld [vmem:[%s254 + $0x2c8] sm:$0xff]
      %v2907 = vld [vmem:[%s254 + $0x2d0] sm:$0xff]
      %v2908 = vld [vmem:[%s254 + $0x2d8] sm:$0xff]
      %v2909 = vld [vmem:[%s254 + $0x2e0] sm:$0xff]
      %v2910 = vld [vmem:[%s254 + $0x2e8] sm:$0xff]
      %v2911 = vld [vmem:[%s254 + $0x2f0] sm:$0xff]
      %v2912 = vld [vmem:[%s254 + $0x2f8] sm:$0xff]
      %v2913 = vld [vmem:[%s254 + $0x300] sm:$0xff]
      %v2914 = vld [vmem:[%s254 + $0x308] sm:$0xff]
      %v2915 = vld [vmem:[%s254 + $0x310] sm:$0xff]
      %v2916 = vld [vmem:[%s254 + $0x318] sm:$0xff]
      %v2917 = vld [vmem:[%s254 + $0x320] sm:$0xff]
      %v2918 = vld [vmem:[%s254 + $0x328] sm:$0xff]
      %v2919 = vld [vmem:[%s254 + $0x330] sm:$0xff]
      %v2920 = vld [vmem:[%s254 + $0x338] sm:$0xff]
      %v2921 = vld [vmem:[%s254 + $0x340] sm:$0xff]
      %v2922 = vld [vmem:[%s254 + $0x348] sm:$0xff]
      %v2923 = vld [vmem:[%s254 + $0x350] sm:$0xff]
      %v2924 = vld [vmem:[%s254 + $0x358] sm:$0xff]
      %v2925 = vld [vmem:[%s254 + $0x360] sm:$0xff]
      %v2926 = vld [vmem:[%s254 + $0x368] sm:$0xff]
      %v2927 = vld [vmem:[%s254 + $0x370] sm:$0xff]
      %v2928 = vld [vmem:[%s254 + $0x378] sm:$0xff]
      %v2929 = vld [vmem:[%s254 + $0x380] sm:$0xff]
      %v2930 = vld [vmem:[%s254 + $0x388] sm:$0xff]
      %v2931 = vld [vmem:[%s254 + $0x390] sm:$0xff]
      %v2932 = vld [vmem:[%s254 + $0x398] sm:$0xff]
      %v2933 = vld [vmem:[%s254 + $0x3a0] sm:$0xff]
      %v2934 = vld [vmem:[%s254 + $0x3a8] sm:$0xff]
      %v2935 = vld [vmem:[%s254 + $0x3b0] sm:$0xff]
      %v2936 = vld [vmem:[%s254 + $0x3b8] sm:$0xff]
      %v2937 = vld [vmem:[%s254 + $0x3c0] sm:$0xff]
      %v2938 = vld [vmem:[%s254 + $0x3c8] sm:$0xff]
      %v2939 = vld [vmem:[%s254 + $0x3d0] sm:$0xff]
      %v2940 = vld [vmem:[%s254 + $0x3d8] sm:$0xff]
      %v2941 = vld [vmem:[%s254 + $0x3e0] sm:$0xff]
      %v2942 = vld [vmem:[%s254 + $0x3e8] sm:$0xff]
      %v2943 = vld [vmem:[%s254 + $0x3f0] sm:$0xff]
      %v2944 = vld [vmem:[%s254 + $0x3f8] sm:$0xff]
      %v2945 = vld [vmem:[%s254 + $0x400] sm:$0xff]
      %v2946 = vld [vmem:[%s254 + $0x408] sm:$0xff]
      %v2947 = vld [vmem:[%s254 + $0x410] sm:$0xff]
      %v2948 = vld [vmem:[%s254 + $0x418] sm:$0xff]
      %v2949 = vld [vmem:[%s254 + $0x420] sm:$0xff]
      %v2950 = vld [vmem:[%s254 + $0x428] sm:$0xff]
      %v2951 = vld [vmem:[%s254 + $0x430] sm:$0xff]
      %v2952 = vld [vmem:[%s254 + $0x438] sm:$0xff]
      %v2953 = vld [vmem:[%s254 + $0x440] sm:$0xff]
      %v2954 = vld [vmem:[%s254 + $0x448] sm:$0xff]
      %v2955 = vld [vmem:[%s254 + $0x450] sm:$0xff]
      %v2956 = vld [vmem:[%s254 + $0x458] sm:$0xff]
      %v2957 = vld [vmem:[%s254 + $0x460] sm:$0xff]
      %v2958 = vld [vmem:[%s254 + $0x468] sm:$0xff]
      %v2959 = vld [vmem:[%s254 + $0x470] sm:$0xff]
      %v2960 = vld [vmem:[%s254 + $0x478] sm:$0xff]
      %v2961 = vld [vmem:[%s254 + $0x480] sm:$0xff]
      %v2962 = vld [vmem:[%s254 + $0x488] sm:$0xff]
      %v2963 = vld [vmem:[%s254 + $0x490] sm:$0xff]
      %v2964 = vld [vmem:[%s254 + $0x498] sm:$0xff]
      %v2965 = vld [vmem:[%s254 + $0x4a0] sm:$0xff]
      %v2966 = vld [vmem:[%s254 + $0x4a8] sm:$0xff]
      %v2967 = vld [vmem:[%s254 + $0x4b0] sm:$0xff]
      %v2968 = vld [vmem:[%s254 + $0x4b8] sm:$0xff]
      %v2969 = vld [vmem:[%s254 + $0x4c0] sm:$0xff]
      %v2970 = vld [vmem:[%s254 + $0x4c8] sm:$0xff]
      %2972 = vset.pattern.permute.xlu0 0
      %2973 = vperm.xlu0 %2972, %v2509
      %v2974 = vpop.permute.xlu0 %2973
      %2977 = vset.pattern.permute.xlu0 0
      %2978 = vperm.xlu0 %2977, %v2510
      %v2979 = vpop.permute.xlu0 %2978
      %2982 = vset.pattern.permute.xlu0 0
      %2983 = vperm.xlu0 %2982, %v2511
      %v2984 = vpop.permute.xlu0 %2983
      %2987 = vset.pattern.permute.xlu0 0
      %2988 = vperm.xlu0 %2987, %v2512
      %v2989 = vpop.permute.xlu0 %2988
      %2992 = vset.pattern.permute.xlu0 0
      %2993 = vperm.xlu0 %2992, %v2513
      %v2994 = vpop.permute.xlu0 %2993
      %2997 = vset.pattern.permute.xlu0 0
      %2998 = vperm.xlu0 %2997, %v2514
      %v2999 = vpop.permute.xlu0 %2998
      %3002 = vset.pattern.permute.xlu0 0
      %3003 = vperm.xlu0 %3002, %v2515
      %v3004 = vpop.permute.xlu0 %3003
      %3007 = vset.pattern.permute.xlu0 0
      %3008 = vperm.xlu0 %3007, %v2516
      %v3009 = vpop.permute.xlu0 %3008
      %3012 = vset.pattern.permute.xlu0 0
      %3013 = vperm.xlu0 %3012, %v2517
      %v3014 = vpop.permute.xlu0 %3013
      %3017 = vset.pattern.permute.xlu0 0
      %3018 = vperm.xlu0 %3017, %v2518
      %v3019 = vpop.permute.xlu0 %3018
      %3022 = vset.pattern.permute.xlu0 0
      %3023 = vperm.xlu0 %3022, %v2519
      %v3024 = vpop.permute.xlu0 %3023
      %3027 = vset.pattern.permute.xlu0 0
      %3028 = vperm.xlu0 %3027, %v2520
      %v3029 = vpop.permute.xlu0 %3028
      %3032 = vset.pattern.permute.xlu0 0
      %3033 = vperm.xlu0 %3032, %v2521
      %v3034 = vpop.permute.xlu0 %3033
      %3037 = vset.pattern.permute.xlu0 0
      %3038 = vperm.xlu0 %3037, %v2522
      %v3039 = vpop.permute.xlu0 %3038
      %3042 = vset.pattern.permute.xlu0 0
      %3043 = vperm.xlu0 %3042, %v2523
      %v3044 = vpop.permute.xlu0 %3043
      %3047 = vset.pattern.permute.xlu0 0
      %3048 = vperm.xlu0 %3047, %v2524
      %v3049 = vpop.permute.xlu0 %3048
      %3052 = vset.pattern.permute.xlu0 0
      %3053 = vperm.xlu0 %3052, %v2525
      %v3054 = vpop.permute.xlu0 %3053
      %3057 = vset.pattern.permute.xlu0 0
      %3058 = vperm.xlu0 %3057, %v2526
      %v3059 = vpop.permute.xlu0 %3058
      %3062 = vset.pattern.permute.xlu0 0
      %3063 = vperm.xlu0 %3062, %v2527
      %v3064 = vpop.permute.xlu0 %3063
      %3067 = vset.pattern.permute.xlu0 0
      %3068 = vperm.xlu0 %3067, %v2528
      %v3069 = vpop.permute.xlu0 %3068
      %3072 = vset.pattern.permute.xlu0 0
      %3073 = vperm.xlu0 %3072, %v2529
      %v3074 = vpop.permute.xlu0 %3073
      %3077 = vset.pattern.permute.xlu0 0
      %3078 = vperm.xlu0 %3077, %v2530
      %v3079 = vpop.permute.xlu0 %3078
      %3082 = vset.pattern.permute.xlu0 0
      %3083 = vperm.xlu0 %3082, %v2531
      %v3084 = vpop.permute.xlu0 %3083
      %3087 = vset.pattern.permute.xlu0 0
      %3088 = vperm.xlu0 %3087, %v2532
      %v3089 = vpop.permute.xlu0 %3088
      %3092 = vset.pattern.permute.xlu0 0
      %3093 = vperm.xlu0 %3092, %v2533
      %v3094 = vpop.permute.xlu0 %3093
      %3097 = vset.pattern.permute.xlu0 0
      %3098 = vperm.xlu0 %3097, %v2534
      %v3099 = vpop.permute.xlu0 %3098
      %3102 = vset.pattern.permute.xlu0 0
      %3103 = vperm.xlu0 %3102, %v2535
      %v3104 = vpop.permute.xlu0 %3103
      %3107 = vset.pattern.permute.xlu0 0
      %3108 = vperm.xlu0 %3107, %v2536
      %v3109 = vpop.permute.xlu0 %3108
      %3112 = vset.pattern.permute.xlu0 0
      %3113 = vperm.xlu0 %3112, %v2537
      %v3114 = vpop.permute.xlu0 %3113
      %3117 = vset.pattern.permute.xlu0 0
      %3118 = vperm.xlu0 %3117, %v2538
      %v3119 = vpop.permute.xlu0 %3118
      %3122 = vset.pattern.permute.xlu0 0
      %3123 = vperm.xlu0 %3122, %v2539
      %v3124 = vpop.permute.xlu0 %3123
      %3127 = vset.pattern.permute.xlu0 0
      %3128 = vperm.xlu0 %3127, %v2540
      %v3129 = vpop.permute.xlu0 %3128
      %3132 = vset.pattern.permute.xlu0 0
      %3133 = vperm.xlu0 %3132, %v2541
      %v3134 = vpop.permute.xlu0 %3133
      %3137 = vset.pattern.permute.xlu0 0
      %3138 = vperm.xlu0 %3137, %v2542
      %v3139 = vpop.permute.xlu0 %3138
      %3142 = vset.pattern.permute.xlu0 0
      %3143 = vperm.xlu0 %3142, %v2543
      %v3144 = vpop.permute.xlu0 %3143
      %3147 = vset.pattern.permute.xlu0 0
      %3148 = vperm.xlu0 %3147, %v2544
      %v3149 = vpop.permute.xlu0 %3148
      %3152 = vset.pattern.permute.xlu0 0
      %3153 = vperm.xlu0 %3152, %v2545
      %v3154 = vpop.permute.xlu0 %3153
      %3157 = vset.pattern.permute.xlu0 0
      %3158 = vperm.xlu0 %3157, %v2546
      %v3159 = vpop.permute.xlu0 %3158
      %3162 = vset.pattern.permute.xlu0 0
      %3163 = vperm.xlu0 %3162, %v2547
      %v3164 = vpop.permute.xlu0 %3163
      %3167 = vset.pattern.permute.xlu0 0
      %3168 = vperm.xlu0 %3167, %v2548
      %v3169 = vpop.permute.xlu0 %3168
      %3172 = vset.pattern.permute.xlu0 0
      %3173 = vperm.xlu0 %3172, %v2549
      %v3174 = vpop.permute.xlu0 %3173
      %3177 = vset.pattern.permute.xlu0 0
      %3178 = vperm.xlu0 %3177, %v2550
      %v3179 = vpop.permute.xlu0 %3178
      %3182 = vset.pattern.permute.xlu0 0
      %3183 = vperm.xlu0 %3182, %v2551
      %v3184 = vpop.permute.xlu0 %3183
      %3187 = vset.pattern.permute.xlu0 0
      %3188 = vperm.xlu0 %3187, %v2552
      %v3189 = vpop.permute.xlu0 %3188
      %3192 = vset.pattern.permute.xlu0 0
      %3193 = vperm.xlu0 %3192, %v2553
      %v3194 = vpop.permute.xlu0 %3193
      %3197 = vset.pattern.permute.xlu0 0
      %3198 = vperm.xlu0 %3197, %v2554
      %v3199 = vpop.permute.xlu0 %3198
      %3202 = vset.pattern.permute.xlu0 0
      %3203 = vperm.xlu0 %3202, %v2555
      %v3204 = vpop.permute.xlu0 %3203
      %3207 = vset.pattern.permute.xlu0 0
      %3208 = vperm.xlu0 %3207, %v2556
      %v3209 = vpop.permute.xlu0 %3208
      %3212 = vset.pattern.permute.xlu0 0
      %3213 = vperm.xlu0 %3212, %v2557
      %v3214 = vpop.permute.xlu0 %3213
      %3217 = vset.pattern.permute.xlu0 0
      %3218 = vperm.xlu0 %3217, %v2558
      %v3219 = vpop.permute.xlu0 %3218
      %3222 = vset.pattern.permute.xlu0 0
      %3223 = vperm.xlu0 %3222, %v2559
      %v3224 = vpop.permute.xlu0 %3223
      %3227 = vset.pattern.permute.xlu0 0
      %3228 = vperm.xlu0 %3227, %v2560
      %v3229 = vpop.permute.xlu0 %3228
      %3232 = vset.pattern.permute.xlu0 0
      %3233 = vperm.xlu0 %3232, %v2561
      %v3234 = vpop.permute.xlu0 %3233
      %3237 = vset.pattern.permute.xlu0 0
      %3238 = vperm.xlu0 %3237, %v2562
      %v3239 = vpop.permute.xlu0 %3238
      %3242 = vset.pattern.permute.xlu0 0
      %3243 = vperm.xlu0 %3242, %v2563
      %v3244 = vpop.permute.xlu0 %3243
      %3247 = vset.pattern.permute.xlu0 0
      %3248 = vperm.xlu0 %3247, %v2564
      %v3249 = vpop.permute.xlu0 %3248
      %3252 = vset.pattern.permute.xlu0 0
      %3253 = vperm.xlu0 %3252, %v2565
      %v3254 = vpop.permute.xlu0 %3253
      %3257 = vset.pattern.permute.xlu0 0
      %3258 = vperm.xlu0 %3257, %v2566
      %v3259 = vpop.permute.xlu0 %3258
      %3262 = vset.pattern.permute.xlu0 0
      %3263 = vperm.xlu0 %3262, %v2567
      %v3264 = vpop.permute.xlu0 %3263
      %3267 = vset.pattern.permute.xlu0 0
      %3268 = vperm.xlu0 %3267, %v2568
      %v3269 = vpop.permute.xlu0 %3268
      %3272 = vset.pattern.permute.xlu0 0
      %3273 = vperm.xlu0 %3272, %v2569
      %v3274 = vpop.permute.xlu0 %3273
      %3277 = vset.pattern.permute.xlu0 0
      %3278 = vperm.xlu0 %3277, %v2570
      %v3279 = vpop.permute.xlu0 %3278
      %3282 = vset.pattern.permute.xlu0 0
      %3283 = vperm.xlu0 %3282, %v2571
      %v3284 = vpop.permute.xlu0 %3283
      %3287 = vset.pattern.permute.xlu0 0
      %3288 = vperm.xlu0 %3287, %v2572
      %v3289 = vpop.permute.xlu0 %3288
      %3292 = vset.pattern.permute.xlu0 0
      %3293 = vperm.xlu0 %3292, %v2573
      %v3294 = vpop.permute.xlu0 %3293
      %3297 = vset.pattern.permute.xlu0 0
      %3298 = vperm.xlu0 %3297, %v2574
      %v3299 = vpop.permute.xlu0 %3298
      %3302 = vset.pattern.permute.xlu0 0
      %3303 = vperm.xlu0 %3302, %v2575
      %v3304 = vpop.permute.xlu0 %3303
      %3307 = vset.pattern.permute.xlu0 0
      %3308 = vperm.xlu0 %3307, %v2576
      %v3309 = vpop.permute.xlu0 %3308
      %3312 = vset.pattern.permute.xlu0 0
      %3313 = vperm.xlu0 %3312, %v2577
      %v3314 = vpop.permute.xlu0 %3313
      %3317 = vset.pattern.permute.xlu0 0
      %3318 = vperm.xlu0 %3317, %v2578
      %v3319 = vpop.permute.xlu0 %3318
      %3322 = vset.pattern.permute.xlu0 0
      %3323 = vperm.xlu0 %3322, %v2579
      %v3324 = vpop.permute.xlu0 %3323
      %3327 = vset.pattern.permute.xlu0 0
      %3328 = vperm.xlu0 %3327, %v2580
      %v3329 = vpop.permute.xlu0 %3328
      %3332 = vset.pattern.permute.xlu0 0
      %3333 = vperm.xlu0 %3332, %v2581
      %v3334 = vpop.permute.xlu0 %3333
      %3337 = vset.pattern.permute.xlu0 0
      %3338 = vperm.xlu0 %3337, %v2582
      %v3339 = vpop.permute.xlu0 %3338
      %3342 = vset.pattern.permute.xlu0 0
      %3343 = vperm.xlu0 %3342, %v2583
      %v3344 = vpop.permute.xlu0 %3343
      %3347 = vset.pattern.permute.xlu0 0
      %3348 = vperm.xlu0 %3347, %v2584
      %v3349 = vpop.permute.xlu0 %3348
      %3352 = vset.pattern.permute.xlu0 0
      %3353 = vperm.xlu0 %3352, %v2585
      %v3354 = vpop.permute.xlu0 %3353
      %v3356 = vmul.f32 %v275, %v2974
      %v3357 = vmul.f32 %v276, %v2974
      %v3358 = vmul.f32 %v277, %v2979
      %v3359 = vmul.f32 %v278, %v2979
      %v3360 = vmul.f32 %v279, %v2984
      %v3361 = vmul.f32 %v280, %v2984
      %v3362 = vmul.f32 %v281, %v2989
      %v3363 = vmul.f32 %v282, %v2989
      %v3364 = vmul.f32 %v283, %v2994
      %v3365 = vmul.f32 %v284, %v2994
      %v3366 = vmul.f32 %v285, %v2999
      %v3367 = vmul.f32 %v286, %v2999
      %v3368 = vmul.f32 %v287, %v3004
      %v3369 = vmul.f32 %v288, %v3004
      %v3370 = vmul.f32 %v289, %v3009
      %v3371 = vmul.f32 %v290, %v3009
      %v3372 = vmul.f32 %v291, %v3014
      %v3373 = vmul.f32 %v292, %v3014
      %v3374 = vmul.f32 %v293, %v3019
      %v3375 = vmul.f32 %v294, %v3019
      %v3376 = vmul.f32 %v295, %v3024
      %v3377 = vmul.f32 %v296, %v3024
      %v3378 = vmul.f32 %v297, %v3029
      %v3379 = vmul.f32 %v298, %v3029
      %v3380 = vmul.f32 %v299, %v3034
      %v3381 = vmul.f32 %v300, %v3034
      %v3382 = vmul.f32 %v301, %v3039
      %v3383 = vmul.f32 %v302, %v3039
      %v3384 = vmul.f32 %v303, %v3044
      %v3385 = vmul.f32 %v304, %v3044
      %v3386 = vmul.f32 %v305, %v3049
      %v3387 = vmul.f32 %v306, %v3049
      %v3388 = vmul.f32 %v307, %v3054
      %v3389 = vmul.f32 %v308, %v3054
      %v3390 = vmul.f32 %v309, %v3059
      %v3391 = vmul.f32 %v310, %v3059
      %v3392 = vmul.f32 %v311, %v3064
      %v3393 = vmul.f32 %v312, %v3064
      %v3394 = vmul.f32 %v313, %v3069
      %v3395 = vmul.f32 %v314, %v3069
      %v3396 = vmul.f32 %v315, %v3074
      %v3397 = vmul.f32 %v316, %v3074
      %v3398 = vmul.f32 %v317, %v3079
      %v3399 = vmul.f32 %v318, %v3079
      %v3400 = vmul.f32 %v319, %v3084
      %v3401 = vmul.f32 %v320, %v3084
      %v3402 = vmul.f32 %v321, %v3089
      %v3403 = vmul.f32 %v322, %v3089
      %v3404 = vmul.f32 %v323, %v3094
      %v3405 = vmul.f32 %v324, %v3094
      %v3406 = vmul.f32 %v325, %v3099
      %v3407 = vmul.f32 %v326, %v3099
      %v3408 = vmul.f32 %v327, %v3104
      %v3409 = vmul.f32 %v328, %v3104
      %v3410 = vmul.f32 %v329, %v3109
      %v3411 = vmul.f32 %v330, %v3109
      %v3412 = vmul.f32 %v331, %v3114
      %v3413 = vmul.f32 %v332, %v3114
      %v3414 = vmul.f32 %v333, %v3119
      %v3415 = vmul.f32 %v334, %v3119
      %v3416 = vmul.f32 %v335, %v3124
      %v3417 = vmul.f32 %v336, %v3124
      %v3418 = vmul.f32 %v337, %v3129
      %v3419 = vmul.f32 %v338, %v3129
      %v3420 = vmul.f32 %v339, %v3134
      %v3421 = vmul.f32 %v340, %v3134
      %v3422 = vmul.f32 %v341, %v3139
      %v3423 = vmul.f32 %v342, %v3139
      %v3424 = vmul.f32 %v343, %v3144
      %v3425 = vmul.f32 %v344, %v3144
      %v3426 = vmul.f32 %v345, %v3149
      %v3427 = vmul.f32 %v346, %v3149
      %v3428 = vmul.f32 %v347, %v3154
      %v3429 = vmul.f32 %v348, %v3154
      %v3430 = vmul.f32 %v349, %v3159
      %v3431 = vmul.f32 %v350, %v3159
      %v3432 = vmul.f32 %v351, %v3164
      %v3433 = vmul.f32 %v352, %v3164
      %v3434 = vmul.f32 %v353, %v3169
      %v3435 = vmul.f32 %v354, %v3169
      %v3436 = vmul.f32 %v355, %v3174
      %v3437 = vmul.f32 %v356, %v3174
      %v3438 = vmul.f32 %v357, %v3179
      %v3439 = vmul.f32 %v358, %v3179
      %v3440 = vmul.f32 %v359, %v3184
      %v3441 = vmul.f32 %v360, %v3184
      %v3442 = vmul.f32 %v361, %v3189
      %v3443 = vmul.f32 %v362, %v3189
      %v3444 = vmul.f32 %v363, %v3194
      %v3445 = vmul.f32 %v364, %v3194
      %v3446 = vmul.f32 %v365, %v3199
      %v3447 = vmul.f32 %v366, %v3199
      %v3448 = vmul.f32 %v367, %v3204
      %v3449 = vmul.f32 %v368, %v3204
      %v3450 = vmul.f32 %v369, %v3209
      %v3451 = vmul.f32 %v370, %v3209
      %v3452 = vmul.f32 %v371, %v3214
      %v3453 = vmul.f32 %v372, %v3214
      %v3454 = vmul.f32 %v373, %v3219
      %v3455 = vmul.f32 %v374, %v3219
      %v3456 = vmul.f32 %v375, %v3224
      %v3457 = vmul.f32 %v376, %v3224
      %v3458 = vmul.f32 %v377, %v3229
      %v3459 = vmul.f32 %v378, %v3229
      %v3460 = vmul.f32 %v379, %v3234
      %v3461 = vmul.f32 %v380, %v3234
      %v3462 = vmul.f32 %v381, %v3239
      %v3463 = vmul.f32 %v382, %v3239
      %v3464 = vmul.f32 %v383, %v3244
      %v3465 = vmul.f32 %v384, %v3244
      %v3466 = vmul.f32 %v385, %v3249
      %v3467 = vmul.f32 %v386, %v3249
      %v3468 = vmul.f32 %v387, %v3254
      %v3469 = vmul.f32 %v388, %v3254
      %v3470 = vmul.f32 %v389, %v3259
      %v3471 = vmul.f32 %v390, %v3259
      %v3472 = vmul.f32 %v391, %v3264
      %v3473 = vmul.f32 %v392, %v3264
      %v3474 = vmul.f32 %v393, %v3269
      %v3475 = vmul.f32 %v394, %v3269
      %v3476 = vmul.f32 %v395, %v3274
      %v3477 = vmul.f32 %v396, %v3274
      %v3478 = vmul.f32 %v397, %v3279
      %v3479 = vmul.f32 %v398, %v3279
      %v3480 = vmul.f32 %v399, %v3284
      %v3481 = vmul.f32 %v400, %v3284
      %v3482 = vmul.f32 %v401, %v3289
      %v3483 = vmul.f32 %v402, %v3289
      %v3484 = vmul.f32 %v403, %v3294
      %v3485 = vmul.f32 %v404, %v3294
      %v3486 = vmul.f32 %v405, %v3299
      %v3487 = vmul.f32 %v406, %v3299
      %v3488 = vmul.f32 %v407, %v3304
      %v3489 = vmul.f32 %v408, %v3304
      %v3490 = vmul.f32 %v409, %v3309
      %v3491 = vmul.f32 %v410, %v3309
      %v3492 = vmul.f32 %v411, %v3314
      %v3493 = vmul.f32 %v412, %v3314
      %v3494 = vmul.f32 %v413, %v3319
      %v3495 = vmul.f32 %v414, %v3319
      %v3496 = vmul.f32 %v415, %v3324
      %v3497 = vmul.f32 %v416, %v3324
      %v3498 = vmul.f32 %v417, %v3329
      %v3499 = vmul.f32 %v418, %v3329
      %v3500 = vmul.f32 %v419, %v3334
      %v3501 = vmul.f32 %v420, %v3334
      %v3502 = vmul.f32 %v421, %v3339
      %v3503 = vmul.f32 %v422, %v3339
      %v3504 = vmul.f32 %v423, %v3344
      %v3505 = vmul.f32 %v424, %v3344
      %v3506 = vmul.f32 %v425, %v3349
      %v3507 = vmul.f32 %v426, %v3349
      %v3508 = vmul.f32 %v427, %v3354
      %v3509 = vmul.f32 %v428, %v3354
      %v3510 = vadd.f32 %v2817, %v3356
      %v3511 = vadd.f32 %v2818, %v3357
      %v3512 = vadd.f32 %v2819, %v3358
      %v3513 = vadd.f32 %v2820, %v3359
      %v3514 = vadd.f32 %v2821, %v3360
      %v3515 = vadd.f32 %v2822, %v3361
      %v3516 = vadd.f32 %v2823, %v3362
      %v3517 = vadd.f32 %v2824, %v3363
      %v3518 = vadd.f32 %v2825, %v3364
      %v3519 = vadd.f32 %v2826, %v3365
      %v3520 = vadd.f32 %v2827, %v3366
      %v3521 = vadd.f32 %v2828, %v3367
      %v3522 = vadd.f32 %v2829, %v3368
      %v3523 = vadd.f32 %v2830, %v3369
      %v3524 = vadd.f32 %v2831, %v3370
      %v3525 = vadd.f32 %v2832, %v3371
      %v3526 = vadd.f32 %v2833, %v3372
      %v3527 = vadd.f32 %v2834, %v3373
      %v3528 = vadd.f32 %v2835, %v3374
      %v3529 = vadd.f32 %v2836, %v3375
      %v3530 = vadd.f32 %v2837, %v3376
      %v3531 = vadd.f32 %v2838, %v3377
      %v3532 = vadd.f32 %v2839, %v3378
      %v3533 = vadd.f32 %v2840, %v3379
      %v3534 = vadd.f32 %v2841, %v3380
      %v3535 = vadd.f32 %v2842, %v3381
      %v3536 = vadd.f32 %v2843, %v3382
      %v3537 = vadd.f32 %v2844, %v3383
      %v3538 = vadd.f32 %v2845, %v3384
      %v3539 = vadd.f32 %v2846, %v3385
      %v3540 = vadd.f32 %v2847, %v3386
      %v3541 = vadd.f32 %v2848, %v3387
      %v3542 = vadd.f32 %v2849, %v3388
      %v3543 = vadd.f32 %v2850, %v3389
      %v3544 = vadd.f32 %v2851, %v3390
      %v3545 = vadd.f32 %v2852, %v3391
      %v3546 = vadd.f32 %v2853, %v3392
      %v3547 = vadd.f32 %v2854, %v3393
      %v3548 = vadd.f32 %v2855, %v3394
      %v3549 = vadd.f32 %v2856, %v3395
      %v3550 = vadd.f32 %v2857, %v3396
      %v3551 = vadd.f32 %v2858, %v3397
      %v3552 = vadd.f32 %v2859, %v3398
      %v3553 = vadd.f32 %v2860, %v3399
      %v3554 = vadd.f32 %v2861, %v3400
      %v3555 = vadd.f32 %v2862, %v3401
      %v3556 = vadd.f32 %v2863, %v3402
      %v3557 = vadd.f32 %v2864, %v3403
      %v3558 = vadd.f32 %v2865, %v3404
      %v3559 = vadd.f32 %v2866, %v3405
      %v3560 = vadd.f32 %v2867, %v3406
      %v3561 = vadd.f32 %v2868, %v3407
      %v3562 = vadd.f32 %v2869, %v3408
      %v3563 = vadd.f32 %v2870, %v3409
      %v3564 = vadd.f32 %v2871, %v3410
      %v3565 = vadd.f32 %v2872, %v3411
      %v3566 = vadd.f32 %v2873, %v3412
      %v3567 = vadd.f32 %v2874, %v3413
      %v3568 = vadd.f32 %v2875, %v3414
      %v3569 = vadd.f32 %v2876, %v3415
      %v3570 = vadd.f32 %v2877, %v3416
      %v3571 = vadd.f32 %v2878, %v3417
      %v3572 = vadd.f32 %v2879, %v3418
      %v3573 = vadd.f32 %v2880, %v3419
      %v3574 = vadd.f32 %v2881, %v3420
      %v3575 = vadd.f32 %v2882, %v3421
      %v3576 = vadd.f32 %v2883, %v3422
      %v3577 = vadd.f32 %v2884, %v3423
      %v3578 = vadd.f32 %v2885, %v3424
      %v3579 = vadd.f32 %v2886, %v3425
      %v3580 = vadd.f32 %v2887, %v3426
      %v3581 = vadd.f32 %v2888, %v3427
      %v3582 = vadd.f32 %v2889, %v3428
      %v3583 = vadd.f32 %v2890, %v3429
      %v3584 = vadd.f32 %v2891, %v3430
      %v3585 = vadd.f32 %v2892, %v3431
      %v3586 = vadd.f32 %v2893, %v3432
      %v3587 = vadd.f32 %v2894, %v3433
      %v3588 = vadd.f32 %v2895, %v3434
      %v3589 = vadd.f32 %v2896, %v3435
      %v3590 = vadd.f32 %v2897, %v3436
      %v3591 = vadd.f32 %v2898, %v3437
      %v3592 = vadd.f32 %v2899, %v3438
      %v3593 = vadd.f32 %v2900, %v3439
      %v3594 = vadd.f32 %v2901, %v3440
      %v3595 = vadd.f32 %v2902, %v3441
      %v3596 = vadd.f32 %v2903, %v3442
      %v3597 = vadd.f32 %v2904, %v3443
      %v3598 = vadd.f32 %v2905, %v3444
      %v3599 = vadd.f32 %v2906, %v3445
      %v3600 = vadd.f32 %v2907, %v3446
      %v3601 = vadd.f32 %v2908, %v3447
      %v3602 = vadd.f32 %v2909, %v3448
      %v3603 = vadd.f32 %v2910, %v3449
      %v3604 = vadd.f32 %v2911, %v3450
      %v3605 = vadd.f32 %v2912, %v3451
      %v3606 = vadd.f32 %v2913, %v3452
      %v3607 = vadd.f32 %v2914, %v3453
      %v3608 = vadd.f32 %v2915, %v3454
      %v3609 = vadd.f32 %v2916, %v3455
      %v3610 = vadd.f32 %v2917, %v3456
      %v3611 = vadd.f32 %v2918, %v3457
      %v3612 = vadd.f32 %v2919, %v3458
      %v3613 = vadd.f32 %v2920, %v3459
      %v3614 = vadd.f32 %v2921, %v3460
      %v3615 = vadd.f32 %v2922, %v3461
      %v3616 = vadd.f32 %v2923, %v3462
      %v3617 = vadd.f32 %v2924, %v3463
      %v3618 = vadd.f32 %v2925, %v3464
      %v3619 = vadd.f32 %v2926, %v3465
      %v3620 = vadd.f32 %v2927, %v3466
      %v3621 = vadd.f32 %v2928, %v3467
      %v3622 = vadd.f32 %v2929, %v3468
      %v3623 = vadd.f32 %v2930, %v3469
      %v3624 = vadd.f32 %v2931, %v3470
      %v3625 = vadd.f32 %v2932, %v3471
      %v3626 = vadd.f32 %v2933, %v3472
      %v3627 = vadd.f32 %v2934, %v3473
      %v3628 = vadd.f32 %v2935, %v3474
      %v3629 = vadd.f32 %v2936, %v3475
      %v3630 = vadd.f32 %v2937, %v3476
      %v3631 = vadd.f32 %v2938, %v3477
      %v3632 = vadd.f32 %v2939, %v3478
      %v3633 = vadd.f32 %v2940, %v3479
      %v3634 = vadd.f32 %v2941, %v3480
      %v3635 = vadd.f32 %v2942, %v3481
      %v3636 = vadd.f32 %v2943, %v3482
      %v3637 = vadd.f32 %v2944, %v3483
      %v3638 = vadd.f32 %v2945, %v3484
      %v3639 = vadd.f32 %v2946, %v3485
      %v3640 = vadd.f32 %v2947, %v3486
      %v3641 = vadd.f32 %v2948, %v3487
      %v3642 = vadd.f32 %v2949, %v3488
      %v3643 = vadd.f32 %v2950, %v3489
      %v3644 = vadd.f32 %v2951, %v3490
      %v3645 = vadd.f32 %v2952, %v3491
      %v3646 = vadd.f32 %v2953, %v3492
      %v3647 = vadd.f32 %v2954, %v3493
      %v3648 = vadd.f32 %v2955, %v3494
      %v3649 = vadd.f32 %v2956, %v3495
      %v3650 = vadd.f32 %v2957, %v3496
      %v3651 = vadd.f32 %v2958, %v3497
      %v3652 = vadd.f32 %v2959, %v3498
      %v3653 = vadd.f32 %v2960, %v3499
      %v3654 = vadd.f32 %v2961, %v3500
      %v3655 = vadd.f32 %v2962, %v3501
      %v3656 = vadd.f32 %v2963, %v3502
      %v3657 = vadd.f32 %v2964, %v3503
      %v3658 = vadd.f32 %v2965, %v3504
      %v3659 = vadd.f32 %v2966, %v3505
      %v3660 = vadd.f32 %v2967, %v3506
      %v3661 = vadd.f32 %v2968, %v3507
      %v3662 = vadd.f32 %v2969, %v3508
      %v3663 = vadd.f32 %v2970, %v3509
      %3665 = vset.pattern.permute.xlu0 0
      %3666 = vperm.xlu0 %3665, %v2740
      %v3667 = vpop.permute.xlu0 %3666
      %3670 = vset.pattern.permute.xlu0 0
      %3671 = vperm.xlu0 %3670, %v2741
      %v3672 = vpop.permute.xlu0 %3671
      %3675 = vset.pattern.permute.xlu0 0
      %3676 = vperm.xlu0 %3675, %v2742
      %v3677 = vpop.permute.xlu0 %3676
      %3680 = vset.pattern.permute.xlu0 0
      %3681 = vperm.xlu0 %3680, %v2743
      %v3682 = vpop.permute.xlu0 %3681
      %3685 = vset.pattern.permute.xlu0 0
      %3686 = vperm.xlu0 %3685, %v2744
      %v3687 = vpop.permute.xlu0 %3686
      %3690 = vset.pattern.permute.xlu0 0
      %3691 = vperm.xlu0 %3690, %v2745
      %v3692 = vpop.permute.xlu0 %3691
      %3695 = vset.pattern.permute.xlu0 0
      %3696 = vperm.xlu0 %3695, %v2746
      %v3697 = vpop.permute.xlu0 %3696
      %3700 = vset.pattern.permute.xlu0 0
      %3701 = vperm.xlu0 %3700, %v2747
      %v3702 = vpop.permute.xlu0 %3701
      %3705 = vset.pattern.permute.xlu0 0
      %3706 = vperm.xlu0 %3705, %v2748
      %v3707 = vpop.permute.xlu0 %3706
      %3710 = vset.pattern.permute.xlu0 0
      %3711 = vperm.xlu0 %3710, %v2749
      %v3712 = vpop.permute.xlu0 %3711
      %3715 = vset.pattern.permute.xlu0 0
      %3716 = vperm.xlu0 %3715, %v2750
      %v3717 = vpop.permute.xlu0 %3716
      %3720 = vset.pattern.permute.xlu0 0
      %3721 = vperm.xlu0 %3720, %v2751
      %v3722 = vpop.permute.xlu0 %3721
      %3725 = vset.pattern.permute.xlu0 0
      %3726 = vperm.xlu0 %3725, %v2752
      %v3727 = vpop.permute.xlu0 %3726
      %3730 = vset.pattern.permute.xlu0 0
      %3731 = vperm.xlu0 %3730, %v2753
      %v3732 = vpop.permute.xlu0 %3731
      %3735 = vset.pattern.permute.xlu0 0
      %3736 = vperm.xlu0 %3735, %v2754
      %v3737 = vpop.permute.xlu0 %3736
      %3740 = vset.pattern.permute.xlu0 0
      %3741 = vperm.xlu0 %3740, %v2755
      %v3742 = vpop.permute.xlu0 %3741
      %3745 = vset.pattern.permute.xlu0 0
      %3746 = vperm.xlu0 %3745, %v2756
      %v3747 = vpop.permute.xlu0 %3746
      %3750 = vset.pattern.permute.xlu0 0
      %3751 = vperm.xlu0 %3750, %v2757
      %v3752 = vpop.permute.xlu0 %3751
      %3755 = vset.pattern.permute.xlu0 0
      %3756 = vperm.xlu0 %3755, %v2758
      %v3757 = vpop.permute.xlu0 %3756
      %3760 = vset.pattern.permute.xlu0 0
      %3761 = vperm.xlu0 %3760, %v2759
      %v3762 = vpop.permute.xlu0 %3761
      %3765 = vset.pattern.permute.xlu0 0
      %3766 = vperm.xlu0 %3765, %v2760
      %v3767 = vpop.permute.xlu0 %3766
      %3770 = vset.pattern.permute.xlu0 0
      %3771 = vperm.xlu0 %3770, %v2761
      %v3772 = vpop.permute.xlu0 %3771
      %3775 = vset.pattern.permute.xlu0 0
      %3776 = vperm.xlu0 %3775, %v2762
      %v3777 = vpop.permute.xlu0 %3776
      %3780 = vset.pattern.permute.xlu0 0
      %3781 = vperm.xlu0 %3780, %v2763
      %v3782 = vpop.permute.xlu0 %3781
      %3785 = vset.pattern.permute.xlu0 0
      %3786 = vperm.xlu0 %3785, %v2764
      %v3787 = vpop.permute.xlu0 %3786
      %3790 = vset.pattern.permute.xlu0 0
      %3791 = vperm.xlu0 %3790, %v2765
      %v3792 = vpop.permute.xlu0 %3791
      %3795 = vset.pattern.permute.xlu0 0
      %3796 = vperm.xlu0 %3795, %v2766
      %v3797 = vpop.permute.xlu0 %3796
      %3800 = vset.pattern.permute.xlu0 0
      %3801 = vperm.xlu0 %3800, %v2767
      %v3802 = vpop.permute.xlu0 %3801
      %3805 = vset.pattern.permute.xlu0 0
      %3806 = vperm.xlu0 %3805, %v2768
      %v3807 = vpop.permute.xlu0 %3806
      %3810 = vset.pattern.permute.xlu0 0
      %3811 = vperm.xlu0 %3810, %v2769
      %v3812 = vpop.permute.xlu0 %3811
      %3815 = vset.pattern.permute.xlu0 0
      %3816 = vperm.xlu0 %3815, %v2770
      %v3817 = vpop.permute.xlu0 %3816
      %3820 = vset.pattern.permute.xlu0 0
      %3821 = vperm.xlu0 %3820, %v2771
      %v3822 = vpop.permute.xlu0 %3821
      %3825 = vset.pattern.permute.xlu0 0
      %3826 = vperm.xlu0 %3825, %v2772
      %v3827 = vpop.permute.xlu0 %3826
      %3830 = vset.pattern.permute.xlu0 0
      %3831 = vperm.xlu0 %3830, %v2773
      %v3832 = vpop.permute.xlu0 %3831
      %3835 = vset.pattern.permute.xlu0 0
      %3836 = vperm.xlu0 %3835, %v2774
      %v3837 = vpop.permute.xlu0 %3836
      %3840 = vset.pattern.permute.xlu0 0
      %3841 = vperm.xlu0 %3840, %v2775
      %v3842 = vpop.permute.xlu0 %3841
      %3845 = vset.pattern.permute.xlu0 0
      %3846 = vperm.xlu0 %3845, %v2776
      %v3847 = vpop.permute.xlu0 %3846
      %3850 = vset.pattern.permute.xlu0 0
      %3851 = vperm.xlu0 %3850, %v2777
      %v3852 = vpop.permute.xlu0 %3851
      %3855 = vset.pattern.permute.xlu0 0
      %3856 = vperm.xlu0 %3855, %v2778
      %v3857 = vpop.permute.xlu0 %3856
      %3860 = vset.pattern.permute.xlu0 0
      %3861 = vperm.xlu0 %3860, %v2779
      %v3862 = vpop.permute.xlu0 %3861
      %3865 = vset.pattern.permute.xlu0 0
      %3866 = vperm.xlu0 %3865, %v2780
      %v3867 = vpop.permute.xlu0 %3866
      %3870 = vset.pattern.permute.xlu0 0
      %3871 = vperm.xlu0 %3870, %v2781
      %v3872 = vpop.permute.xlu0 %3871
      %3875 = vset.pattern.permute.xlu0 0
      %3876 = vperm.xlu0 %3875, %v2782
      %v3877 = vpop.permute.xlu0 %3876
      %3880 = vset.pattern.permute.xlu0 0
      %3881 = vperm.xlu0 %3880, %v2783
      %v3882 = vpop.permute.xlu0 %3881
      %3885 = vset.pattern.permute.xlu0 0
      %3886 = vperm.xlu0 %3885, %v2784
      %v3887 = vpop.permute.xlu0 %3886
      %3890 = vset.pattern.permute.xlu0 0
      %3891 = vperm.xlu0 %3890, %v2785
      %v3892 = vpop.permute.xlu0 %3891
      %3895 = vset.pattern.permute.xlu0 0
      %3896 = vperm.xlu0 %3895, %v2786
      %v3897 = vpop.permute.xlu0 %3896
      %3900 = vset.pattern.permute.xlu0 0
      %3901 = vperm.xlu0 %3900, %v2787
      %v3902 = vpop.permute.xlu0 %3901
      %3905 = vset.pattern.permute.xlu0 0
      %3906 = vperm.xlu0 %3905, %v2788
      %v3907 = vpop.permute.xlu0 %3906
      %3910 = vset.pattern.permute.xlu0 0
      %3911 = vperm.xlu0 %3910, %v2789
      %v3912 = vpop.permute.xlu0 %3911
      %3915 = vset.pattern.permute.xlu0 0
      %3916 = vperm.xlu0 %3915, %v2790
      %v3917 = vpop.permute.xlu0 %3916
      %3920 = vset.pattern.permute.xlu0 0
      %3921 = vperm.xlu0 %3920, %v2791
      %v3922 = vpop.permute.xlu0 %3921
      %3925 = vset.pattern.permute.xlu0 0
      %3926 = vperm.xlu0 %3925, %v2792
      %v3927 = vpop.permute.xlu0 %3926
      %3930 = vset.pattern.permute.xlu0 0
      %3931 = vperm.xlu0 %3930, %v2793
      %v3932 = vpop.permute.xlu0 %3931
      %3935 = vset.pattern.permute.xlu0 0
      %3936 = vperm.xlu0 %3935, %v2794
      %v3937 = vpop.permute.xlu0 %3936
      %3940 = vset.pattern.permute.xlu0 0
      %3941 = vperm.xlu0 %3940, %v2795
      %v3942 = vpop.permute.xlu0 %3941
      %3945 = vset.pattern.permute.xlu0 0
      %3946 = vperm.xlu0 %3945, %v2796
      %v3947 = vpop.permute.xlu0 %3946
      %3950 = vset.pattern.permute.xlu0 0
      %3951 = vperm.xlu0 %3950, %v2797
      %v3952 = vpop.permute.xlu0 %3951
      %3955 = vset.pattern.permute.xlu0 0
      %3956 = vperm.xlu0 %3955, %v2798
      %v3957 = vpop.permute.xlu0 %3956
      %3960 = vset.pattern.permute.xlu0 0
      %3961 = vperm.xlu0 %3960, %v2799
      %v3962 = vpop.permute.xlu0 %3961
      %3965 = vset.pattern.permute.xlu0 0
      %3966 = vperm.xlu0 %3965, %v2800
      %v3967 = vpop.permute.xlu0 %3966
      %3970 = vset.pattern.permute.xlu0 0
      %3971 = vperm.xlu0 %3970, %v2801
      %v3972 = vpop.permute.xlu0 %3971
      %3975 = vset.pattern.permute.xlu0 0
      %3976 = vperm.xlu0 %3975, %v2802
      %v3977 = vpop.permute.xlu0 %3976
      %3980 = vset.pattern.permute.xlu0 0
      %3981 = vperm.xlu0 %3980, %v2803
      %v3982 = vpop.permute.xlu0 %3981
      %3985 = vset.pattern.permute.xlu0 0
      %3986 = vperm.xlu0 %3985, %v2804
      %v3987 = vpop.permute.xlu0 %3986
      %3990 = vset.pattern.permute.xlu0 0
      %3991 = vperm.xlu0 %3990, %v2805
      %v3992 = vpop.permute.xlu0 %3991
      %3995 = vset.pattern.permute.xlu0 0
      %3996 = vperm.xlu0 %3995, %v2806
      %v3997 = vpop.permute.xlu0 %3996
      %4000 = vset.pattern.permute.xlu0 0
      %4001 = vperm.xlu0 %4000, %v2807
      %v4002 = vpop.permute.xlu0 %4001
      %4005 = vset.pattern.permute.xlu0 0
      %4006 = vperm.xlu0 %4005, %v2808
      %v4007 = vpop.permute.xlu0 %4006
      %4010 = vset.pattern.permute.xlu0 0
      %4011 = vperm.xlu0 %4010, %v2809
      %v4012 = vpop.permute.xlu0 %4011
      %4015 = vset.pattern.permute.xlu0 0
      %4016 = vperm.xlu0 %4015, %v2810
      %v4017 = vpop.permute.xlu0 %4016
      %4020 = vset.pattern.permute.xlu0 0
      %4021 = vperm.xlu0 %4020, %v2811
      %v4022 = vpop.permute.xlu0 %4021
      %4025 = vset.pattern.permute.xlu0 0
      %4026 = vperm.xlu0 %4025, %v2812
      %v4027 = vpop.permute.xlu0 %4026
      %4030 = vset.pattern.permute.xlu0 0
      %4031 = vperm.xlu0 %4030, %v2813
      %v4032 = vpop.permute.xlu0 %4031
      %4035 = vset.pattern.permute.xlu0 0
      %4036 = vperm.xlu0 %4035, %v2814
      %v4037 = vpop.permute.xlu0 %4036
      %4040 = vset.pattern.permute.xlu0 0
      %4041 = vperm.xlu0 %4040, %v2815
      %v4042 = vpop.permute.xlu0 %4041
      %4045 = vset.pattern.permute.xlu0 0
      %4046 = vperm.xlu0 %4045, %v2816
      %v4047 = vpop.permute.xlu0 %4046
      %v4049 = vadd.f32 %v3510, %v3667
      %v4050 = vadd.f32 %v3511, %v3667
      %v4051 = vadd.f32 %v3512, %v3672
      %v4052 = vadd.f32 %v3513, %v3672
      %v4053 = vadd.f32 %v3514, %v3677
      %v4054 = vadd.f32 %v3515, %v3677
      %v4055 = vadd.f32 %v3516, %v3682
      %v4056 = vadd.f32 %v3517, %v3682
      %v4057 = vadd.f32 %v3518, %v3687
      %v4058 = vadd.f32 %v3519, %v3687
      %v4059 = vadd.f32 %v3520, %v3692
      %v4060 = vadd.f32 %v3521, %v3692
      %v4061 = vadd.f32 %v3522, %v3697
      %v4062 = vadd.f32 %v3523, %v3697
      %v4063 = vadd.f32 %v3524, %v3702
      %v4064 = vadd.f32 %v3525, %v3702
      %v4065 = vadd.f32 %v3526, %v3707
      %v4066 = vadd.f32 %v3527, %v3707
      %v4067 = vadd.f32 %v3528, %v3712
      %v4068 = vadd.f32 %v3529, %v3712
      %v4069 = vadd.f32 %v3530, %v3717
      %v4070 = vadd.f32 %v3531, %v3717
      %v4071 = vadd.f32 %v3532, %v3722
      %v4072 = vadd.f32 %v3533, %v3722
      %v4073 = vadd.f32 %v3534, %v3727
      %v4074 = vadd.f32 %v3535, %v3727
      %v4075 = vadd.f32 %v3536, %v3732
      %v4076 = vadd.f32 %v3537, %v3732
      %v4077 = vadd.f32 %v3538, %v3737
      %v4078 = vadd.f32 %v3539, %v3737
      %v4079 = vadd.f32 %v3540, %v3742
      %v4080 = vadd.f32 %v3541, %v3742
      %v4081 = vadd.f32 %v3542, %v3747
      %v4082 = vadd.f32 %v3543, %v3747
      %v4083 = vadd.f32 %v3544, %v3752
      %v4084 = vadd.f32 %v3545, %v3752
      %v4085 = vadd.f32 %v3546, %v3757
      %v4086 = vadd.f32 %v3547, %v3757
      %v4087 = vadd.f32 %v3548, %v3762
      %v4088 = vadd.f32 %v3549, %v3762
      %v4089 = vadd.f32 %v3550, %v3767
      %v4090 = vadd.f32 %v3551, %v3767
      %v4091 = vadd.f32 %v3552, %v3772
      %v4092 = vadd.f32 %v3553, %v3772
      %v4093 = vadd.f32 %v3554, %v3777
      %v4094 = vadd.f32 %v3555, %v3777
      %v4095 = vadd.f32 %v3556, %v3782
      %v4096 = vadd.f32 %v3557, %v3782
      %v4097 = vadd.f32 %v3558, %v3787
      %v4098 = vadd.f32 %v3559, %v3787
      %v4099 = vadd.f32 %v3560, %v3792
      %v4100 = vadd.f32 %v3561, %v3792
      %v4101 = vadd.f32 %v3562, %v3797
      %v4102 = vadd.f32 %v3563, %v3797
      %v4103 = vadd.f32 %v3564, %v3802
      %v4104 = vadd.f32 %v3565, %v3802
      %v4105 = vadd.f32 %v3566, %v3807
      %v4106 = vadd.f32 %v3567, %v3807
      %v4107 = vadd.f32 %v3568, %v3812
      %v4108 = vadd.f32 %v3569, %v3812
      %v4109 = vadd.f32 %v3570, %v3817
      %v4110 = vadd.f32 %v3571, %v3817
      %v4111 = vadd.f32 %v3572, %v3822
      %v4112 = vadd.f32 %v3573, %v3822
      %v4113 = vadd.f32 %v3574, %v3827
      %v4114 = vadd.f32 %v3575, %v3827
      %v4115 = vadd.f32 %v3576, %v3832
      %v4116 = vadd.f32 %v3577, %v3832
      %v4117 = vadd.f32 %v3578, %v3837
      %v4118 = vadd.f32 %v3579, %v3837
      %v4119 = vadd.f32 %v3580, %v3842
      %v4120 = vadd.f32 %v3581, %v3842
      %v4121 = vadd.f32 %v3582, %v3847
      %v4122 = vadd.f32 %v3583, %v3847
      %v4123 = vadd.f32 %v3584, %v3852
      %v4124 = vadd.f32 %v3585, %v3852
      %v4125 = vadd.f32 %v3586, %v3857
      %v4126 = vadd.f32 %v3587, %v3857
      %v4127 = vadd.f32 %v3588, %v3862
      %v4128 = vadd.f32 %v3589, %v3862
      %v4129 = vadd.f32 %v3590, %v3867
      %v4130 = vadd.f32 %v3591, %v3867
      %v4131 = vadd.f32 %v3592, %v3872
      %v4132 = vadd.f32 %v3593, %v3872
      %v4133 = vadd.f32 %v3594, %v3877
      %v4134 = vadd.f32 %v3595, %v3877
      %v4135 = vadd.f32 %v3596, %v3882
      %v4136 = vadd.f32 %v3597, %v3882
      %v4137 = vadd.f32 %v3598, %v3887
      %v4138 = vadd.f32 %v3599, %v3887
      %v4139 = vadd.f32 %v3600, %v3892
      %v4140 = vadd.f32 %v3601, %v3892
      %v4141 = vadd.f32 %v3602, %v3897
      %v4142 = vadd.f32 %v3603, %v3897
      %v4143 = vadd.f32 %v3604, %v3902
      %v4144 = vadd.f32 %v3605, %v3902
      %v4145 = vadd.f32 %v3606, %v3907
      %v4146 = vadd.f32 %v3607, %v3907
      %v4147 = vadd.f32 %v3608, %v3912
      %v4148 = vadd.f32 %v3609, %v3912
      %v4149 = vadd.f32 %v3610, %v3917
      %v4150 = vadd.f32 %v3611, %v3917
      %v4151 = vadd.f32 %v3612, %v3922
      %v4152 = vadd.f32 %v3613, %v3922
      %v4153 = vadd.f32 %v3614, %v3927
      %v4154 = vadd.f32 %v3615, %v3927
      %v4155 = vadd.f32 %v3616, %v3932
      %v4156 = vadd.f32 %v3617, %v3932
      %v4157 = vadd.f32 %v3618, %v3937
      %v4158 = vadd.f32 %v3619, %v3937
      %v4159 = vadd.f32 %v3620, %v3942
      %v4160 = vadd.f32 %v3621, %v3942
      %v4161 = vadd.f32 %v3622, %v3947
      %v4162 = vadd.f32 %v3623, %v3947
      %v4163 = vadd.f32 %v3624, %v3952
      %v4164 = vadd.f32 %v3625, %v3952
      %v4165 = vadd.f32 %v3626, %v3957
      %v4166 = vadd.f32 %v3627, %v3957
      %v4167 = vadd.f32 %v3628, %v3962
      %v4168 = vadd.f32 %v3629, %v3962
      %v4169 = vadd.f32 %v3630, %v3967
      %v4170 = vadd.f32 %v3631, %v3967
      %v4171 = vadd.f32 %v3632, %v3972
      %v4172 = vadd.f32 %v3633, %v3972
      %v4173 = vadd.f32 %v3634, %v3977
      %v4174 = vadd.f32 %v3635, %v3977
      %v4175 = vadd.f32 %v3636, %v3982
      %v4176 = vadd.f32 %v3637, %v3982
      %v4177 = vadd.f32 %v3638, %v3987
      %v4178 = vadd.f32 %v3639, %v3987
      %v4179 = vadd.f32 %v3640, %v3992
      %v4180 = vadd.f32 %v3641, %v3992
      %v4181 = vadd.f32 %v3642, %v3997
      %v4182 = vadd.f32 %v3643, %v3997
      %v4183 = vadd.f32 %v3644, %v4002
      %v4184 = vadd.f32 %v3645, %v4002
      %v4185 = vadd.f32 %v3646, %v4007
      %v4186 = vadd.f32 %v3647, %v4007
      %v4187 = vadd.f32 %v3648, %v4012
      %v4188 = vadd.f32 %v3649, %v4012
      %v4189 = vadd.f32 %v3650, %v4017
      %v4190 = vadd.f32 %v3651, %v4017
      %v4191 = vadd.f32 %v3652, %v4022
      %v4192 = vadd.f32 %v3653, %v4022
      %v4193 = vadd.f32 %v3654, %v4027
      %v4194 = vadd.f32 %v3655, %v4027
      %v4195 = vadd.f32 %v3656, %v4032
      %v4196 = vadd.f32 %v3657, %v4032
      %v4197 = vadd.f32 %v3658, %v4037
      %v4198 = vadd.f32 %v3659, %v4037
      %v4199 = vadd.f32 %v3660, %v4042
      %v4200 = vadd.f32 %v3661, %v4042
      %v4201 = vadd.f32 %v3662, %v4047
      %v4202 = vadd.f32 %v3663, %v4047
      %v4203 = vmax.f32 %v4049, 0.0
      %v4204 = vmax.f32 %v4050, 0.0
      %v4205 = vmax.f32 %v4051, 0.0
      %v4206 = vmax.f32 %v4052, 0.0
      %v4207 = vmax.f32 %v4053, 0.0
      %v4208 = vmax.f32 %v4054, 0.0
      %v4209 = vmax.f32 %v4055, 0.0
      %v4210 = vmax.f32 %v4056, 0.0
      %v4211 = vmax.f32 %v4057, 0.0
      %v4212 = vmax.f32 %v4058, 0.0
      %v4213 = vmax.f32 %v4059, 0.0
      %v4214 = vmax.f32 %v4060, 0.0
      %v4215 = vmax.f32 %v4061, 0.0
      %v4216 = vmax.f32 %v4062, 0.0
      %v4217 = vmax.f32 %v4063, 0.0
      %v4218 = vmax.f32 %v4064, 0.0
      %v4219 = vmax.f32 %v4065, 0.0
      %v4220 = vmax.f32 %v4066, 0.0
      %v4221 = vmax.f32 %v4067, 0.0
      %v4222 = vmax.f32 %v4068, 0.0
      %v4223 = vmax.f32 %v4069, 0.0
      %v4224 = vmax.f32 %v4070, 0.0
      %v4225 = vmax.f32 %v4071, 0.0
      %v4226 = vmax.f32 %v4072, 0.0
      %v4227 = vmax.f32 %v4073, 0.0
      %v4228 = vmax.f32 %v4074, 0.0
      %v4229 = vmax.f32 %v4075, 0.0
      %v4230 = vmax.f32 %v4076, 0.0
      %v4231 = vmax.f32 %v4077, 0.0
      %v4232 = vmax.f32 %v4078, 0.0
      %v4233 = vmax.f32 %v4079, 0.0
      %v4234 = vmax.f32 %v4080, 0.0
      %v4235 = vmax.f32 %v4081, 0.0
      %v4236 = vmax.f32 %v4082, 0.0
      %v4237 = vmax.f32 %v4083, 0.0
      %v4238 = vmax.f32 %v4084, 0.0
      %v4239 = vmax.f32 %v4085, 0.0
      %v4240 = vmax.f32 %v4086, 0.0
      %v4241 = vmax.f32 %v4087, 0.0
      %v4242 = vmax.f32 %v4088, 0.0
      %v4243 = vmax.f32 %v4089, 0.0
      %v4244 = vmax.f32 %v4090, 0.0
      %v4245 = vmax.f32 %v4091, 0.0
      %v4246 = vmax.f32 %v4092, 0.0
      %v4247 = vmax.f32 %v4093, 0.0
      %v4248 = vmax.f32 %v4094, 0.0
      %v4249 = vmax.f32 %v4095, 0.0
      %v4250 = vmax.f32 %v4096, 0.0
      %v4251 = vmax.f32 %v4097, 0.0
      %v4252 = vmax.f32 %v4098, 0.0
      %v4253 = vmax.f32 %v4099, 0.0
      %v4254 = vmax.f32 %v4100, 0.0
      %v4255 = vmax.f32 %v4101, 0.0
      %v4256 = vmax.f32 %v4102, 0.0
      %v4257 = vmax.f32 %v4103, 0.0
      %v4258 = vmax.f32 %v4104, 0.0
      %v4259 = vmax.f32 %v4105, 0.0
      %v4260 = vmax.f32 %v4106, 0.0
      %v4261 = vmax.f32 %v4107, 0.0
      %v4262 = vmax.f32 %v4108, 0.0
      %v4263 = vmax.f32 %v4109, 0.0
      %v4264 = vmax.f32 %v4110, 0.0
      %v4265 = vmax.f32 %v4111, 0.0
      %v4266 = vmax.f32 %v4112, 0.0
      %v4267 = vmax.f32 %v4113, 0.0
      %v4268 = vmax.f32 %v4114, 0.0
      %v4269 = vmax.f32 %v4115, 0.0
      %v4270 = vmax.f32 %v4116, 0.0
      %v4271 = vmax.f32 %v4117, 0.0
      %v4272 = vmax.f32 %v4118, 0.0
      %v4273 = vmax.f32 %v4119, 0.0
      %v4274 = vmax.f32 %v4120, 0.0
      %v4275 = vmax.f32 %v4121, 0.0
      %v4276 = vmax.f32 %v4122, 0.0
      %v4277 = vmax.f32 %v4123, 0.0
      %v4278 = vmax.f32 %v4124, 0.0
      %v4279 = vmax.f32 %v4125, 0.0
      %v4280 = vmax.f32 %v4126, 0.0
      %v4281 = vmax.f32 %v4127, 0.0
      %v4282 = vmax.f32 %v4128, 0.0
      %v4283 = vmax.f32 %v4129, 0.0
      %v4284 = vmax.f32 %v4130, 0.0
      %v4285 = vmax.f32 %v4131, 0.0
      %v4286 = vmax.f32 %v4132, 0.0
      %v4287 = vmax.f32 %v4133, 0.0
      %v4288 = vmax.f32 %v4134, 0.0
      %v4289 = vmax.f32 %v4135, 0.0
      %v4290 = vmax.f32 %v4136, 0.0
      %v4291 = vmax.f32 %v4137, 0.0
      %v4292 = vmax.f32 %v4138, 0.0
      %v4293 = vmax.f32 %v4139, 0.0
      %v4294 = vmax.f32 %v4140, 0.0
      %v4295 = vmax.f32 %v4141, 0.0
      %v4296 = vmax.f32 %v4142, 0.0
      %v4297 = vmax.f32 %v4143, 0.0
      %v4298 = vmax.f32 %v4144, 0.0
      %v4299 = vmax.f32 %v4145, 0.0
      %v4300 = vmax.f32 %v4146, 0.0
      %v4301 = vmax.f32 %v4147, 0.0
      %v4302 = vmax.f32 %v4148, 0.0
      %v4303 = vmax.f32 %v4149, 0.0
      %v4304 = vmax.f32 %v4150, 0.0
      %v4305 = vmax.f32 %v4151, 0.0
      %v4306 = vmax.f32 %v4152, 0.0
      %v4307 = vmax.f32 %v4153, 0.0
      %v4308 = vmax.f32 %v4154, 0.0
      %v4309 = vmax.f32 %v4155, 0.0
      %v4310 = vmax.f32 %v4156, 0.0
      %v4311 = vmax.f32 %v4157, 0.0
      %v4312 = vmax.f32 %v4158, 0.0
      %v4313 = vmax.f32 %v4159, 0.0
      %v4314 = vmax.f32 %v4160, 0.0
      %v4315 = vmax.f32 %v4161, 0.0
      %v4316 = vmax.f32 %v4162, 0.0
      %v4317 = vmax.f32 %v4163, 0.0
      %v4318 = vmax.f32 %v4164, 0.0
      %v4319 = vmax.f32 %v4165, 0.0
      %v4320 = vmax.f32 %v4166, 0.0
      %v4321 = vmax.f32 %v4167, 0.0
      %v4322 = vmax.f32 %v4168, 0.0
      %v4323 = vmax.f32 %v4169, 0.0
      %v4324 = vmax.f32 %v4170, 0.0
      %v4325 = vmax.f32 %v4171, 0.0
      %v4326 = vmax.f32 %v4172, 0.0
      %v4327 = vmax.f32 %v4173, 0.0
      %v4328 = vmax.f32 %v4174, 0.0
      %v4329 = vmax.f32 %v4175, 0.0
      %v4330 = vmax.f32 %v4176, 0.0
      %v4331 = vmax.f32 %v4177, 0.0
      %v4332 = vmax.f32 %v4178, 0.0
      %v4333 = vmax.f32 %v4179, 0.0
      %v4334 = vmax.f32 %v4180, 0.0
      %v4335 = vmax.f32 %v4181, 0.0
      %v4336 = vmax.f32 %v4182, 0.0
      %v4337 = vmax.f32 %v4183, 0.0
      %v4338 = vmax.f32 %v4184, 0.0
      %v4339 = vmax.f32 %v4185, 0.0
      %v4340 = vmax.f32 %v4186, 0.0
      %v4341 = vmax.f32 %v4187, 0.0
      %v4342 = vmax.f32 %v4188, 0.0
      %v4343 = vmax.f32 %v4189, 0.0
      %v4344 = vmax.f32 %v4190, 0.0
      %v4345 = vmax.f32 %v4191, 0.0
      %v4346 = vmax.f32 %v4192, 0.0
      %v4347 = vmax.f32 %v4193, 0.0
      %v4348 = vmax.f32 %v4194, 0.0
      %v4349 = vmax.f32 %v4195, 0.0
      %v4350 = vmax.f32 %v4196, 0.0
      %v4351 = vmax.f32 %v4197, 0.0
      %v4352 = vmax.f32 %v4198, 0.0
      %v4353 = vmax.f32 %v4199, 0.0
      %v4354 = vmax.f32 %v4200, 0.0
      %v4355 = vmax.f32 %v4201, 0.0
      %v4356 = vmax.f32 %v4202, 0.0
      %4357 = vst [vmem:[%s273] sm:$0xff] %v4203
      %4358 = vst.msk [vmem:[%s273 + $0x8] sm:$0xff] %vm429, %v4204
      %4359 = vst [vmem:[%s273 + $0x10] sm:$0xff] %v4205
      %4360 = vst.msk [vmem:[%s273 + $0x18] sm:$0xff] %vm429, %v4206
      %4361 = vst [vmem:[%s273 + $0x20] sm:$0xff] %v4207
      %4362 = vst.msk [vmem:[%s273 + $0x28] sm:$0xff] %vm429, %v4208
      %4363 = vst [vmem:[%s273 + $0x30] sm:$0xff] %v4209
      %4364 = vst.msk [vmem:[%s273 + $0x38] sm:$0xff] %vm429, %v4210
      %4365 = vst [vmem:[%s273 + $0x40] sm:$0xff] %v4211
      %4366 = vst.msk [vmem:[%s273 + $0x48] sm:$0xff] %vm429, %v4212
      %4367 = vst [vmem:[%s273 + $0x50] sm:$0xff] %v4213
      %4368 = vst.msk [vmem:[%s273 + $0x58] sm:$0xff] %vm429, %v4214
      %4369 = vst [vmem:[%s273 + $0x60] sm:$0xff] %v4215
      %4370 = vst.msk [vmem:[%s273 + $0x68] sm:$0xff] %vm429, %v4216
      %4371 = vst [vmem:[%s273 + $0x70] sm:$0xff] %v4217
      %4372 = vst.msk [vmem:[%s273 + $0x78] sm:$0xff] %vm429, %v4218
      %4373 = vst [vmem:[%s273 + $0x80] sm:$0xff] %v4219
      %4374 = vst.msk [vmem:[%s273 + $0x88] sm:$0xff] %vm429, %v4220
      %4375 = vst [vmem:[%s273 + $0x90] sm:$0xff] %v4221
      %4376 = vst.msk [vmem:[%s273 + $0x98] sm:$0xff] %vm429, %v4222
      %4377 = vst [vmem:[%s273 + $0xa0] sm:$0xff] %v4223
      %4378 = vst.msk [vmem:[%s273 + $0xa8] sm:$0xff] %vm429, %v4224
      %4379 = vst [vmem:[%s273 + $0xb0] sm:$0xff] %v4225
      %4380 = vst.msk [vmem:[%s273 + $0xb8] sm:$0xff] %vm429, %v4226
      %4381 = vst [vmem:[%s273 + $0xc0] sm:$0xff] %v4227
      %4382 = vst.msk [vmem:[%s273 + $0xc8] sm:$0xff] %vm429, %v4228
      %4383 = vst [vmem:[%s273 + $0xd0] sm:$0xff] %v4229
      %4384 = vst.msk [vmem:[%s273 + $0xd8] sm:$0xff] %vm429, %v4230
      %4385 = vst [vmem:[%s273 + $0xe0] sm:$0xff] %v4231
      %4386 = vst.msk [vmem:[%s273 + $0xe8] sm:$0xff] %vm429, %v4232
      %4387 = vst [vmem:[%s273 + $0xf0] sm:$0xff] %v4233
      %4388 = vst.msk [vmem:[%s273 + $0xf8] sm:$0xff] %vm429, %v4234
      %4389 = vst [vmem:[%s273 + $0x100] sm:$0xff] %v4235
      %4390 = vst.msk [vmem:[%s273 + $0x108] sm:$0xff] %vm429, %v4236
      %4391 = vst [vmem:[%s273 + $0x110] sm:$0xff] %v4237
      %4392 = vst.msk [vmem:[%s273 + $0x118] sm:$0xff] %vm429, %v4238
      %4393 = vst [vmem:[%s273 + $0x120] sm:$0xff] %v4239
      %4394 = vst.msk [vmem:[%s273 + $0x128] sm:$0xff] %vm429, %v4240
      %4395 = vst [vmem:[%s273 + $0x130] sm:$0xff] %v4241
      %4396 = vst.msk [vmem:[%s273 + $0x138] sm:$0xff] %vm429, %v4242
      %4397 = vst [vmem:[%s273 + $0x140] sm:$0xff] %v4243
      %4398 = vst.msk [vmem:[%s273 + $0x148] sm:$0xff] %vm429, %v4244
      %4399 = vst [vmem:[%s273 + $0x150] sm:$0xff] %v4245
      %4400 = vst.msk [vmem:[%s273 + $0x158] sm:$0xff] %vm429, %v4246
      %4401 = vst [vmem:[%s273 + $0x160] sm:$0xff] %v4247
      %4402 = vst.msk [vmem:[%s273 + $0x168] sm:$0xff] %vm429, %v4248
      %4403 = vst [vmem:[%s273 + $0x170] sm:$0xff] %v4249
      %4404 = vst.msk [vmem:[%s273 + $0x178] sm:$0xff] %vm429, %v4250
      %4405 = vst [vmem:[%s273 + $0x180] sm:$0xff] %v4251
      %4406 = vst.msk [vmem:[%s273 + $0x188] sm:$0xff] %vm429, %v4252
      %4407 = vst [vmem:[%s273 + $0x190] sm:$0xff] %v4253
      %4408 = vst.msk [vmem:[%s273 + $0x198] sm:$0xff] %vm429, %v4254
      %4409 = vst [vmem:[%s273 + $0x1a0] sm:$0xff] %v4255
      %4410 = vst.msk [vmem:[%s273 + $0x1a8] sm:$0xff] %vm429, %v4256
      %4411 = vst [vmem:[%s273 + $0x1b0] sm:$0xff] %v4257
      %4412 = vst.msk [vmem:[%s273 + $0x1b8] sm:$0xff] %vm429, %v4258
      %4413 = vst [vmem:[%s273 + $0x1c0] sm:$0xff] %v4259
      %4414 = vst.msk [vmem:[%s273 + $0x1c8] sm:$0xff] %vm429, %v4260
      %4415 = vst [vmem:[%s273 + $0x1d0] sm:$0xff] %v4261
      %4416 = vst.msk [vmem:[%s273 + $0x1d8] sm:$0xff] %vm429, %v4262
      %4417 = vst [vmem:[%s273 + $0x1e0] sm:$0xff] %v4263
      %4418 = vst.msk [vmem:[%s273 + $0x1e8] sm:$0xff] %vm429, %v4264
      %4419 = vst [vmem:[%s273 + $0x1f0] sm:$0xff] %v4265
      %4420 = vst.msk [vmem:[%s273 + $0x1f8] sm:$0xff] %vm429, %v4266
      %4421 = vst [vmem:[%s273 + $0x200] sm:$0xff] %v4267
      %4422 = vst.msk [vmem:[%s273 + $0x208] sm:$0xff] %vm429, %v4268
      %4423 = vst [vmem:[%s273 + $0x210] sm:$0xff] %v4269
      %4424 = vst.msk [vmem:[%s273 + $0x218] sm:$0xff] %vm429, %v4270
      %4425 = vst [vmem:[%s273 + $0x220] sm:$0xff] %v4271
      %4426 = vst.msk [vmem:[%s273 + $0x228] sm:$0xff] %vm429, %v4272
      %4427 = vst [vmem:[%s273 + $0x230] sm:$0xff] %v4273
      %4428 = vst.msk [vmem:[%s273 + $0x238] sm:$0xff] %vm429, %v4274
      %4429 = vst [vmem:[%s273 + $0x240] sm:$0xff] %v4275
      %4430 = vst.msk [vmem:[%s273 + $0x248] sm:$0xff] %vm429, %v4276
      %4431 = vst [vmem:[%s273 + $0x250] sm:$0xff] %v4277
      %4432 = vst.msk [vmem:[%s273 + $0x258] sm:$0xff] %vm429, %v4278
      %4433 = vst [vmem:[%s273 + $0x260] sm:$0xff] %v4279
      %4434 = vst.msk [vmem:[%s273 + $0x268] sm:$0xff] %vm429, %v4280
      %4435 = vst [vmem:[%s273 + $0x270] sm:$0xff] %v4281
      %4436 = vst.msk [vmem:[%s273 + $0x278] sm:$0xff] %vm429, %v4282
      %4437 = vst [vmem:[%s273 + $0x280] sm:$0xff] %v4283
      %4438 = vst.msk [vmem:[%s273 + $0x288] sm:$0xff] %vm429, %v4284
      %4439 = vst [vmem:[%s273 + $0x290] sm:$0xff] %v4285
      %4440 = vst.msk [vmem:[%s273 + $0x298] sm:$0xff] %vm429, %v4286
      %4441 = vst [vmem:[%s273 + $0x2a0] sm:$0xff] %v4287
      %4442 = vst.msk [vmem:[%s273 + $0x2a8] sm:$0xff] %vm429, %v4288
      %4443 = vst [vmem:[%s273 + $0x2b0] sm:$0xff] %v4289
      %4444 = vst.msk [vmem:[%s273 + $0x2b8] sm:$0xff] %vm429, %v4290
      %4445 = vst [vmem:[%s273 + $0x2c0] sm:$0xff] %v4291
      %4446 = vst.msk [vmem:[%s273 + $0x2c8] sm:$0xff] %vm429, %v4292
      %4447 = vst [vmem:[%s273 + $0x2d0] sm:$0xff] %v4293
      %4448 = vst.msk [vmem:[%s273 + $0x2d8] sm:$0xff] %vm429, %v4294
      %4449 = vst [vmem:[%s273 + $0x2e0] sm:$0xff] %v4295
      %4450 = vst.msk [vmem:[%s273 + $0x2e8] sm:$0xff] %vm429, %v4296
      %4451 = vst [vmem:[%s273 + $0x2f0] sm:$0xff] %v4297
      %4452 = vst.msk [vmem:[%s273 + $0x2f8] sm:$0xff] %vm429, %v4298
      %4453 = vst [vmem:[%s273 + $0x300] sm:$0xff] %v4299
      %4454 = vst.msk [vmem:[%s273 + $0x308] sm:$0xff] %vm429, %v4300
      %4455 = vst [vmem:[%s273 + $0x310] sm:$0xff] %v4301
      %4456 = vst.msk [vmem:[%s273 + $0x318] sm:$0xff] %vm429, %v4302
      %4457 = vst [vmem:[%s273 + $0x320] sm:$0xff] %v4303
      %4458 = vst.msk [vmem:[%s273 + $0x328] sm:$0xff] %vm429, %v4304
      %4459 = vst [vmem:[%s273 + $0x330] sm:$0xff] %v4305
      %4460 = vst.msk [vmem:[%s273 + $0x338] sm:$0xff] %vm429, %v4306
      %4461 = vst [vmem:[%s273 + $0x340] sm:$0xff] %v4307
      %4462 = vst.msk [vmem:[%s273 + $0x348] sm:$0xff] %vm429, %v4308
      %4463 = vst [vmem:[%s273 + $0x350] sm:$0xff] %v4309
      %4464 = vst.msk [vmem:[%s273 + $0x358] sm:$0xff] %vm429, %v4310
      %4465 = vst [vmem:[%s273 + $0x360] sm:$0xff] %v4311
      %4466 = vst.msk [vmem:[%s273 + $0x368] sm:$0xff] %vm429, %v4312
      %4467 = vst [vmem:[%s273 + $0x370] sm:$0xff] %v4313
      %4468 = vst.msk [vmem:[%s273 + $0x378] sm:$0xff] %vm429, %v4314
      %4469 = vst [vmem:[%s273 + $0x380] sm:$0xff] %v4315
      %4470 = vst.msk [vmem:[%s273 + $0x388] sm:$0xff] %vm429, %v4316
      %4471 = vst [vmem:[%s273 + $0x390] sm:$0xff] %v4317
      %4472 = vst.msk [vmem:[%s273 + $0x398] sm:$0xff] %vm429, %v4318
      %4473 = vst [vmem:[%s273 + $0x3a0] sm:$0xff] %v4319
      %4474 = vst.msk [vmem:[%s273 + $0x3a8] sm:$0xff] %vm429, %v4320
      %4475 = vst [vmem:[%s273 + $0x3b0] sm:$0xff] %v4321
      %4476 = vst.msk [vmem:[%s273 + $0x3b8] sm:$0xff] %vm429, %v4322
      %4477 = vst [vmem:[%s273 + $0x3c0] sm:$0xff] %v4323
      %4478 = vst.msk [vmem:[%s273 + $0x3c8] sm:$0xff] %vm429, %v4324
      %4479 = vst [vmem:[%s273 + $0x3d0] sm:$0xff] %v4325
      %4480 = vst.msk [vmem:[%s273 + $0x3d8] sm:$0xff] %vm429, %v4326
      %4481 = vst [vmem:[%s273 + $0x3e0] sm:$0xff] %v4327
      %4482 = vst.msk [vmem:[%s273 + $0x3e8] sm:$0xff] %vm429, %v4328
      %4483 = vst [vmem:[%s273 + $0x3f0] sm:$0xff] %v4329
      %4484 = vst.msk [vmem:[%s273 + $0x3f8] sm:$0xff] %vm429, %v4330
      %4485 = vst [vmem:[%s273 + $0x400] sm:$0xff] %v4331
      %4486 = vst.msk [vmem:[%s273 + $0x408] sm:$0xff] %vm429, %v4332
      %4487 = vst [vmem:[%s273 + $0x410] sm:$0xff] %v4333
      %4488 = vst.msk [vmem:[%s273 + $0x418] sm:$0xff] %vm429, %v4334
      %4489 = vst [vmem:[%s273 + $0x420] sm:$0xff] %v4335
      %4490 = vst.msk [vmem:[%s273 + $0x428] sm:$0xff] %vm429, %v4336
      %4491 = vst [vmem:[%s273 + $0x430] sm:$0xff] %v4337
      %4492 = vst.msk [vmem:[%s273 + $0x438] sm:$0xff] %vm429, %v4338
      %4493 = vst [vmem:[%s273 + $0x440] sm:$0xff] %v4339
      %4494 = vst.msk [vmem:[%s273 + $0x448] sm:$0xff] %vm429, %v4340
      %4495 = vst [vmem:[%s273 + $0x450] sm:$0xff] %v4341
      %4496 = vst.msk [vmem:[%s273 + $0x458] sm:$0xff] %vm429, %v4342
      %4497 = vst [vmem:[%s273 + $0x460] sm:$0xff] %v4343
      %4498 = vst.msk [vmem:[%s273 + $0x468] sm:$0xff] %vm429, %v4344
      %4499 = vst [vmem:[%s273 + $0x470] sm:$0xff] %v4345
      %4500 = vst.msk [vmem:[%s273 + $0x478] sm:$0xff] %vm429, %v4346
      %4501 = vst [vmem:[%s273 + $0x480] sm:$0xff] %v4347
      %4502 = vst.msk [vmem:[%s273 + $0x488] sm:$0xff] %vm429, %v4348
      %4503 = vst [vmem:[%s273 + $0x490] sm:$0xff] %v4349
      %4504 = vst.msk [vmem:[%s273 + $0x498] sm:$0xff] %vm429, %v4350
      %4505 = vst [vmem:[%s273 + $0x4a0] sm:$0xff] %v4351
      %4506 = vst.msk [vmem:[%s273 + $0x4a8] sm:$0xff] %vm429, %v4352
      %4507 = vst [vmem:[%s273 + $0x4b0] sm:$0xff] %v4353
      %4508 = vst.msk [vmem:[%s273 + $0x4b8] sm:$0xff] %vm429, %v4354
      %4509 = vst [vmem:[%s273 + $0x4c0] sm:$0xff] %v4355
      %4510 = vst.msk [vmem:[%s273 + $0x4c8] sm:$0xff] %vm429, %v4356
      %s4511 = smul.u32 77, %s15
      %p4512 = scmp.lt.s32.totalorder %s4511, 153
      %s4513 = scalar_select %p4512, %s4511, 153
      %s4514 = smul.addr %s4513, 2
      %s4515 = smul.addr %s4514, 8
      %s4516 = scalar_lea.vmem %s4, %s4515
      // Predicated region
      $region37: #{_bn_add_relu_impl.1} parent=35 // pred_check
        %p4517 = pneg %p137
      $region38: #{_bn_add_relu_impl.1} parent=35 // pred_check_branch
        %4519 = sbr.rel (%p4517) target = $region40
      $region39: #{_bn_add_relu_impl.1} parent=35 // pred_region
        %s4520 = smul.u32 77, %s15
      $region40: #{_bn_add_relu_impl.1} parent=35 // pred_fallthru
        _
    $region36: #{_bn_add_relu_impl.1} parent=5 // pred_fallthru
      _
    %p4521 = scmp.le.s32.totalorder 2, %s10
    // Predicated region
    $region41: #{_bn_add_relu_impl.1} parent=5 // pred_check
      %p4522 = pneg %p4521
    $region42: #{_bn_add_relu_impl.1} parent=5 // pred_check_branch
      %4524 = sbr.rel (%p4522) target = $region44
    $region43: #{_bn_add_relu_impl.1} parent=5 // pred_region
      %s4525 = ssub.s32 %s10, 2
      // Predicated region
      $region45: #{_bn_add_relu_impl.1} parent=43 // pred_check
        %p4526 = pneg %p143
      $region46: #{_bn_add_relu_impl.1} parent=43 // pred_check_branch
        %4528 = sbr.rel (%p4526) target = $region48
      $region47: #{_bn_add_relu_impl.1} parent=43 // pred_region
        %s4529 = smul.u32 77, %s16
        %p4530 = scmp.lt.s32.totalorder %s4529, 153
        %s4531 = scalar_select %p4530, %s4529, 153
        %s4532 = smul.addr %s4531, 2
        %s4533 = smul.addr %s4532, 8
        %s4534 = scalar_lea.vmem %s4, %s4533
      $region48: #{_bn_add_relu_impl.1} parent=43 // pred_fallthru
        _
    $region44: #{_bn_add_relu_impl.1} parent=5 // pred_fallthru
      _
  $region6: #{_bn_add_relu_impl.1} parent=0 // loop_footer
    %s14 = sadd.s32 1, %s10
  $region7: #{_bn_add_relu_impl.1} parent=0 // loop_footer_branch
    %9 = sbr.rel target = $region3
  $region8: #{_bn_add_relu_impl.1} parent=0 // loop_exit
    _

</llo_original>
